<compile_context>
chip_gen: v5e
topology: v5e:2x2
jax: 0.10.0
libtpu: 0.0.40
codegen_flags: <defaults>
</compile_context>

<pallas_src>
import functools

import jax
import jax.numpy as jnp
from jax.experimental import pallas as pl
from jax.experimental.pallas import tpu as pltpu


# ------------------------------ Fused LSTM + FC kernel ------------------------------ #
def _fused_lstm_fc_kernel(*refs, num_layers, hidden_dim):
    """Whole LSTMModel forward in one kernel invocation (no grid).

    refs layout (inputs, then output):
      [0]               x_ref    (B, T, D)     batch_first input
      [1 + 3*l + 0]     wih_ref  (D_in, 4H)    layer-l input weights, pre-transposed
      [1 + 3*l + 1]     whh_ref  (4, H, H)     layer-l hidden weights, gate-major [g, in, out]
      [1 + 3*l + 2]     b_ref    (1, 4H)       layer-l combined bias (b_ih + b_hh)
      [1 + 3*L + 0]     wfc_ref  (H, O)
      [1 + 3*L + 1]     bfc_ref  (1, O)
      [1 + 3*L + 2]     out_ref  (B, O)
    """
    H = hidden_dim
    x_ref = refs[0]
    wfc_ref = refs[1 + 3 * num_layers]
    bfc_ref = refs[2 + 3 * num_layers]
    out_ref = refs[3 + 3 * num_layers]

    B, T, _ = x_ref.shape
    seq = x_ref[...].astype(jnp.float32)  # (B, T, D_in)

    h_last = None
    for layer in range(num_layers):
        wih_ref = refs[1 + 3 * layer + 0]
        whh_ref = refs[1 + 3 * layer + 1]
        b_ref = refs[1 + 3 * layer + 2]
        d_in = seq.shape[-1]
        is_last = layer == num_layers - 1

        # ---- hoisted input projection: one big lane-dense matmul per layer ----
        gx = (
            jnp.dot(seq.reshape(B * T, d_in), wih_ref[...],
                    preferred_element_type=jnp.float32)
            + b_ref[...]
        ).reshape(B, T, 4 * H)
        # Per-gate slices done ONCE, off the serial path. Gate order [i, f, g, o].
        gx_i = gx[:, :, 0 * H:1 * H]
        gx_f = gx[:, :, 1 * H:2 * H]
        gx_g = gx[:, :, 2 * H:3 * H]
        gx_o = gx[:, :, 3 * H:4 * H]

        # Gate-major hidden weights: indexing the leading axis avoids lane slicing
        # inside the recurrence.
        w_i = whh_ref[0]
        w_f = whh_ref[1]
        w_g = whh_ref[2]
        w_o = whh_ref[3]

        h = jnp.zeros((B, H), jnp.float32)
        c = jnp.zeros((B, H), jnp.float32)
        outs = []
        # Serial recurrence: T is small & static -> fully unrolled (LLO-visible).
        for t in range(T):
            i_g = jax.nn.sigmoid(
                gx_i[:, t, :] + jnp.dot(h, w_i, preferred_element_type=jnp.float32))
            f_g = jax.nn.sigmoid(
                gx_f[:, t, :] + jnp.dot(h, w_f, preferred_element_type=jnp.float32))
            g_g = jnp.tanh(
                gx_g[:, t, :] + jnp.dot(h, w_g, preferred_element_type=jnp.float32))
            o_g = jax.nn.sigmoid(
                gx_o[:, t, :] + jnp.dot(h, w_o, preferred_element_type=jnp.float32))
            c = f_g * c + i_g * g_g
            h = o_g * jnp.tanh(c)
            if not is_last:
                outs.append(h)

        if is_last:
            h_last = h                      # only the last timestep of the last layer is used
        else:
            seq = jnp.stack(outs, axis=1)   # (B, T, H): next layer's input (stays in VMEM/vregs)

    # Final Linear on out[:, -1, :]  ->  single (B, O) store.
    out_ref[...] = (
        jnp.dot(h_last, wfc_ref[...], preferred_element_type=jnp.float32) + bfc_ref[...]
    ).astype(out_ref.dtype)


# ------------------------------ Model wrapper ------------------------------ #
def init_params(key, input_dim, hidden_dim, layer_dim, output_dim):
    """Deterministic init mirroring PyTorch shapes (uniform +-1/sqrt(H))."""
    params = {"lstm": [], "fc": None}
    bound = 1.0 / jnp.sqrt(jnp.float32(hidden_dim))
    for layer in range(layer_dim):
        in_d = input_dim if layer == 0 else hidden_dim
        key, k1, k2, k3, k4 = jax.random.split(key, 5)
        w_ih = jax.random.uniform(k1, (4 * hidden_dim, in_d), jnp.float32, -bound, bound)
        w_hh = jax.random.uniform(k2, (4 * hidden_dim, hidden_dim), jnp.float32, -bound, bound)
        b_ih = jax.random.uniform(k3, (4 * hidden_dim,), jnp.float32, -bound, bound)
        b_hh = jax.random.uniform(k4, (4 * hidden_dim,), jnp.float32, -bound, bound)
        params["lstm"].append((w_ih, w_hh, b_ih, b_hh))
    key, k1, k2 = jax.random.split(key, 3)
    fb = 1.0 / jnp.sqrt(jnp.float32(hidden_dim))
    w_fc = jax.random.uniform(k1, (output_dim, hidden_dim), jnp.float32, -fb, fb)
    b_fc = jax.random.uniform(k2, (output_dim,), jnp.float32, -fb, fb)
    params["fc"] = (w_fc, b_fc)
    return params


def lstm_model_forward(params, x_btd, hidden_dim):
    """x_btd: (B, T, D) batch_first, as in the PyTorch module. Returns (B, output_dim)."""
    B = x_btd.shape[0]
    H = hidden_dim
    num_layers = len(params["lstm"])

    # Weight prep (one-time, XLA side):
    #   W_ih -> (D_in, 4H); W_hh -> gate-major (4, H, H) [g, in, out]; bias -> (1, 4H).
    # TODO(synk): on v6e/v7x at production hidden sizes, cast weights to bf16 here
    # (keep f32 accumulate + f32 gate math) and loosen the test tolerance.
    args = [x_btd.astype(jnp.float32)]
    for (w_ih, w_hh, b_ih, b_hh) in params["lstm"]:
        args.append(w_ih.T.astype(jnp.float32))                                   # (D_in, 4H)
        args.append(jnp.transpose(w_hh.reshape(4, H, H), (0, 2, 1)).astype(jnp.float32))  # (4,H,H)
        args.append((b_ih + b_hh)[None, :].astype(jnp.float32))                   # (1, 4H)
    w_fc, b_fc = params["fc"]
    args.append(w_fc.T.astype(jnp.float32))     # (H, O)
    args.append(b_fc[None, :].astype(jnp.float32))  # (1, O)
    out_dim = w_fc.shape[0]

    kernel = functools.partial(
        _fused_lstm_fc_kernel, num_layers=num_layers, hidden_dim=H)

    # No grid: every operand fits VMEM at these shapes, so each array is a single
    # whole-array VMEM block and the full forward runs in one kernel invocation.
    return pl.pallas_call(
        kernel,
        out_shape=jax.ShapeDtypeStruct((B, out_dim), jnp.float32),
        in_specs=[pl.BlockSpec(memory_space=pltpu.MemorySpace.VMEM) for _ in args],
        out_specs=pl.BlockSpec(memory_space=pltpu.MemorySpace.VMEM),
    )(*args)


# ------------------------------ Pure-JAX reference ------------------------------ #
def _reference_forward(params, x_btd, hidden_dim):
    x = jnp.transpose(x_btd, (1, 0, 2)).astype(jnp.float32)  # (T, B, D)
    B = x.shape[1]
    for (w_ih, w_hh, b_ih, b_hh) in params["lstm"]:
        def step(carry, x_t):
            h, c = carry
            gates = x_t @ w_ih.T + h @ w_hh.T + b_ih + b_hh
            i, f, g, o = jnp.split(gates, 4, axis=-1)
            c = jax.nn.sigmoid(f) * c + jax.nn.sigmoid(i) * jnp.tanh(g)
            h = jax.nn.sigmoid(o) * jnp.tanh(c)
            return (h, c), h
        init = (jnp.zeros((B, hidden_dim)), jnp.zeros((B, hidden_dim)))
        _, x = jax.lax.scan(step, init, x)
    w_fc, b_fc = params["fc"]
    return x[-1] @ w_fc.T + b_fc


# ------------------------------ Main ------------------------------ #
if __name__ == "__main__":
    input_dim, hidden_dim, layer_dim, output_dim = 16, 32, 2, 8
    batch, seq_len = 2, 8

    key = jax.random.PRNGKey(0)
    pkey, xkey = jax.random.split(key)
    params = init_params(pkey, input_dim, hidden_dim, layer_dim, output_dim)
    x = jax.random.normal(xkey, (batch, seq_len, input_dim), dtype=jnp.float32)

    out = jax.block_until_ready(lstm_model_forward(params, x, hidden_dim))

    ref = _reference_forward(params, x, hidden_dim)
    assert out.shape == (batch, output_dim)
    assert jnp.allclose(out, ref, atol=1e-5, rtol=1e-5), "mismatch vs reference"

    print("KERNEL_OK")
</pallas_src>

<mosaic_0001>
module attributes {stable_mosaic.version = 11 : i64} {
  func.func @_fused_lstm_fc_kernel(%arg0: memref<2x8x16xf32, #tpu.memory_space<vmem>>, %arg1: memref<16x128xf32, #tpu.memory_space<vmem>>, %arg2: memref<4x32x32xf32, #tpu.memory_space<vmem>>, %arg3: memref<1x128xf32, #tpu.memory_space<vmem>>, %arg4: memref<32x128xf32, #tpu.memory_space<vmem>>, %arg5: memref<4x32x32xf32, #tpu.memory_space<vmem>>, %arg6: memref<1x128xf32, #tpu.memory_space<vmem>>, %arg7: memref<32x8xf32, #tpu.memory_space<vmem>>, %arg8: memref<1x8xf32, #tpu.memory_space<vmem>>, %arg9: memref<2x8xf32, #tpu.memory_space<vmem>>) attributes {dimension_semantics = [], scalar_prefetch = 0 : i64, scratch_operands = 0 : i64, tpu.core_type = #tpu.core_type<tc>} {
    %c0 = arith.constant 0 : index
    %c0_0 = arith.constant 0 : index
    %c0_1 = arith.constant 0 : index
    %0 = vector.load %arg0[%c0, %c0_0, %c0_1] : memref<2x8x16xf32, #tpu.memory_space<vmem>>, vector<2x8x16xf32>
    %1 = vector.shape_cast %0 : vector<2x8x16xf32> to vector<16x16xf32>
    %c0_2 = arith.constant 0 : index
    %c0_3 = arith.constant 0 : index
    %2 = vector.load %arg1[%c0_2, %c0_3] : memref<16x128xf32, #tpu.memory_space<vmem>>, vector<16x128xf32>
    %cst = arith.constant dense<0.000000e+00> : vector<16x128xf32>
    %3 = tpu.matmul %1, %2, %cst {dimension_numbers = #tpu.dot_dimension_numbers<[1], [0], [0], [1], [0, 0, 1, 1], [], []>} : vector<16x16xf32>, vector<16x128xf32>, vector<16x128xf32> -> vector<16x128xf32>
    %c0_4 = arith.constant 0 : index
    %c0_5 = arith.constant 0 : index
    %4 = vector.load %arg3[%c0_4, %c0_5] : memref<1x128xf32, #tpu.memory_space<vmem>>, vector<1x128xf32>
    %5 = vector.broadcast %4 : vector<1x128xf32> to vector<16x128xf32>
    %6 = arith.addf %3, %5 : vector<16x128xf32>
    %7 = vector.shape_cast %6 : vector<16x128xf32> to vector<2x8x128xf32>
    %8 = vector.extract_strided_slice %7 {offsets = [0, 0, 0], sizes = [2, 8, 32], strides = [1, 1, 1]} : vector<2x8x128xf32> to vector<2x8x32xf32>
    %9 = vector.extract_strided_slice %7 {offsets = [0, 0, 32], sizes = [2, 8, 32], strides = [1, 1, 1]} : vector<2x8x128xf32> to vector<2x8x32xf32>
    %10 = vector.extract_strided_slice %7 {offsets = [0, 0, 64], sizes = [2, 8, 32], strides = [1, 1, 1]} : vector<2x8x128xf32> to vector<2x8x32xf32>
    %11 = vector.extract_strided_slice %7 {offsets = [0, 0, 96], sizes = [2, 8, 32], strides = [1, 1, 1]} : vector<2x8x128xf32> to vector<2x8x32xf32>
    %c0_6 = arith.constant 0 : index
    %c0_7 = arith.constant 0 : index
    %c0_8 = arith.constant 0 : index
    %12 = vector.load %arg2[%c0_6, %c0_7, %c0_8] : memref<4x32x32xf32, #tpu.memory_space<vmem>>, vector<1x32x32xf32>
    %13 = vector.shape_cast %12 : vector<1x32x32xf32> to vector<32x32xf32>
    %c1 = arith.constant 1 : index
    %c0_9 = arith.constant 0 : index
    %c0_10 = arith.constant 0 : index
    %14 = vector.load %arg2[%c1, %c0_9, %c0_10] : memref<4x32x32xf32, #tpu.memory_space<vmem>>, vector<1x32x32xf32>
    %15 = vector.shape_cast %14 : vector<1x32x32xf32> to vector<32x32xf32>
    %c2 = arith.constant 2 : index
    %c0_11 = arith.constant 0 : index
    %c0_12 = arith.constant 0 : index
    %16 = vector.load %arg2[%c2, %c0_11, %c0_12] : memref<4x32x32xf32, #tpu.memory_space<vmem>>, vector<1x32x32xf32>
    %17 = vector.shape_cast %16 : vector<1x32x32xf32> to vector<32x32xf32>
    %c3 = arith.constant 3 : index
    %c0_13 = arith.constant 0 : index
    %c0_14 = arith.constant 0 : index
    %18 = vector.load %arg2[%c3, %c0_13, %c0_14] : memref<4x32x32xf32, #tpu.memory_space<vmem>>, vector<1x32x32xf32>
    %19 = vector.shape_cast %18 : vector<1x32x32xf32> to vector<32x32xf32>
    %cst_15 = arith.constant 0.000000e+00 : f32
    %20 = vector.broadcast %cst_15 : f32 to vector<2x32xf32>
    %cst_16 = arith.constant 0.000000e+00 : f32
    %21 = vector.broadcast %cst_16 : f32 to vector<2x32xf32>
    %22 = vector.extract_strided_slice %8 {offsets = [0, 0, 0], sizes = [2, 1, 32], strides = [1, 1, 1]} : vector<2x8x32xf32> to vector<2x1x32xf32>
    %23 = vector.shape_cast %22 : vector<2x1x32xf32> to vector<2x32xf32>
    %cst_17 = arith.constant dense<0.000000e+00> : vector<2x32xf32>
    %24 = tpu.matmul %20, %13, %cst_17 {dimension_numbers = #tpu.dot_dimension_numbers<[1], [0], [0], [1], [0, 0, 1, 1], [], []>} : vector<2x32xf32>, vector<32x32xf32>, vector<2x32xf32> -> vector<2x32xf32>
    %25 = arith.addf %23, %24 : vector<2x32xf32>
    %26 = arith.negf %25 : vector<2x32xf32>
    %27 = math.exp %26 : vector<2x32xf32>
    %cst_18 = arith.constant 1.000000e+00 : f32
    %28 = vector.broadcast %cst_18 : f32 to vector<2x32xf32>
    %29 = arith.addf %28, %27 : vector<2x32xf32>
    %30 = arith.divf %28, %29 : vector<2x32xf32>
    %31 = vector.extract_strided_slice %9 {offsets = [0, 0, 0], sizes = [2, 1, 32], strides = [1, 1, 1]} : vector<2x8x32xf32> to vector<2x1x32xf32>
    %32 = vector.shape_cast %31 : vector<2x1x32xf32> to vector<2x32xf32>
    %cst_19 = arith.constant dense<0.000000e+00> : vector<2x32xf32>
    %33 = tpu.matmul %20, %15, %cst_19 {dimension_numbers = #tpu.dot_dimension_numbers<[1], [0], [0], [1], [0, 0, 1, 1], [], []>} : vector<2x32xf32>, vector<32x32xf32>, vector<2x32xf32> -> vector<2x32xf32>
    %34 = arith.addf %32, %33 : vector<2x32xf32>
    %35 = arith.negf %34 : vector<2x32xf32>
    %36 = math.exp %35 : vector<2x32xf32>
    %cst_20 = arith.constant 1.000000e+00 : f32
    %37 = vector.broadcast %cst_20 : f32 to vector<2x32xf32>
    %38 = arith.addf %37, %36 : vector<2x32xf32>
    %39 = arith.divf %37, %38 : vector<2x32xf32>
    %40 = vector.extract_strided_slice %10 {offsets = [0, 0, 0], sizes = [2, 1, 32], strides = [1, 1, 1]} : vector<2x8x32xf32> to vector<2x1x32xf32>
    %41 = vector.shape_cast %40 : vector<2x1x32xf32> to vector<2x32xf32>
    %cst_21 = arith.constant dense<0.000000e+00> : vector<2x32xf32>
    %42 = tpu.matmul %20, %17, %cst_21 {dimension_numbers = #tpu.dot_dimension_numbers<[1], [0], [0], [1], [0, 0, 1, 1], [], []>} : vector<2x32xf32>, vector<32x32xf32>, vector<2x32xf32> -> vector<2x32xf32>
    %43 = arith.addf %41, %42 : vector<2x32xf32>
    %44 = math.tanh %43 : vector<2x32xf32>
    %45 = vector.extract_strided_slice %11 {offsets = [0, 0, 0], sizes = [2, 1, 32], strides = [1, 1, 1]} : vector<2x8x32xf32> to vector<2x1x32xf32>
    %46 = vector.shape_cast %45 : vector<2x1x32xf32> to vector<2x32xf32>
    %cst_22 = arith.constant dense<0.000000e+00> : vector<2x32xf32>
    %47 = tpu.matmul %20, %19, %cst_22 {dimension_numbers = #tpu.dot_dimension_numbers<[1], [0], [0], [1], [0, 0, 1, 1], [], []>} : vector<2x32xf32>, vector<32x32xf32>, vector<2x32xf32> -> vector<2x32xf32>
    %48 = arith.addf %46, %47 : vector<2x32xf32>
    %49 = arith.negf %48 : vector<2x32xf32>
    %50 = math.exp %49 : vector<2x32xf32>
    %cst_23 = arith.constant 1.000000e+00 : f32
    %51 = vector.broadcast %cst_23 : f32 to vector<2x32xf32>
    %52 = arith.addf %51, %50 : vector<2x32xf32>
    %53 = arith.divf %51, %52 : vector<2x32xf32>
    %54 = arith.mulf %39, %21 : vector<2x32xf32>
    %55 = arith.mulf %30, %44 : vector<2x32xf32>
    %56 = arith.addf %54, %55 : vector<2x32xf32>
    %57 = math.tanh %56 : vector<2x32xf32>
    %58 = arith.mulf %53, %57 : vector<2x32xf32>
    %59 = vector.extract_strided_slice %8 {offsets = [0, 1, 0], sizes = [2, 1, 32], strides = [1, 1, 1]} : vector<2x8x32xf32> to vector<2x1x32xf32>
    %60 = vector.shape_cast %59 : vector<2x1x32xf32> to vector<2x32xf32>
    %cst_24 = arith.constant dense<0.000000e+00> : vector<2x32xf32>
    %61 = tpu.matmul %58, %13, %cst_24 {dimension_numbers = #tpu.dot_dimension_numbers<[1], [0], [0], [1], [0, 0, 1, 1], [], []>} : vector<2x32xf32>, vector<32x32xf32>, vector<2x32xf32> -> vector<2x32xf32>
    %62 = arith.addf %60, %61 : vector<2x32xf32>
    %63 = arith.negf %62 : vector<2x32xf32>
    %64 = math.exp %63 : vector<2x32xf32>
    %cst_25 = arith.constant 1.000000e+00 : f32
    %65 = vector.broadcast %cst_25 : f32 to vector<2x32xf32>
    %66 = arith.addf %65, %64 : vector<2x32xf32>
    %67 = arith.divf %65, %66 : vector<2x32xf32>
    %68 = vector.extract_strided_slice %9 {offsets = [0, 1, 0], sizes = [2, 1, 32], strides = [1, 1, 1]} : vector<2x8x32xf32> to vector<2x1x32xf32>
    %69 = vector.shape_cast %68 : vector<2x1x32xf32> to vector<2x32xf32>
    %cst_26 = arith.constant dense<0.000000e+00> : vector<2x32xf32>
    %70 = tpu.matmul %58, %15, %cst_26 {dimension_numbers = #tpu.dot_dimension_numbers<[1], [0], [0], [1], [0, 0, 1, 1], [], []>} : vector<2x32xf32>, vector<32x32xf32>, vector<2x32xf32> -> vector<2x32xf32>
    %71 = arith.addf %69, %70 : vector<2x32xf32>
    %72 = arith.negf %71 : vector<2x32xf32>
    %73 = math.exp %72 : vector<2x32xf32>
    %cst_27 = arith.constant 1.000000e+00 : f32
    %74 = vector.broadcast %cst_27 : f32 to vector<2x32xf32>
    %75 = arith.addf %74, %73 : vector<2x32xf32>
    %76 = arith.divf %74, %75 : vector<2x32xf32>
    %77 = vector.extract_strided_slice %10 {offsets = [0, 1, 0], sizes = [2, 1, 32], strides = [1, 1, 1]} : vector<2x8x32xf32> to vector<2x1x32xf32>
    %78 = vector.shape_cast %77 : vector<2x1x32xf32> to vector<2x32xf32>
    %cst_28 = arith.constant dense<0.000000e+00> : vector<2x32xf32>
    %79 = tpu.matmul %58, %17, %cst_28 {dimension_numbers = #tpu.dot_dimension_numbers<[1], [0], [0], [1], [0, 0, 1, 1], [], []>} : vector<2x32xf32>, vector<32x32xf32>, vector<2x32xf32> -> vector<2x32xf32>
    %80 = arith.addf %78, %79 : vector<2x32xf32>
    %81 = math.tanh %80 : vector<2x32xf32>
    %82 = vector.extract_strided_slice %11 {offsets = [0, 1, 0], sizes = [2, 1, 32], strides = [1, 1, 1]} : vector<2x8x32xf32> to vector<2x1x32xf32>
    %83 = vector.shape_cast %82 : vector<2x1x32xf32> to vector<2x32xf32>
    %cst_29 = arith.constant dense<0.000000e+00> : vector<2x32xf32>
    %84 = tpu.matmul %58, %19, %cst_29 {dimension_numbers = #tpu.dot_dimension_numbers<[1], [0], [0], [1], [0, 0, 1, 1], [], []>} : vector<2x32xf32>, vector<32x32xf32>, vector<2x32xf32> -> vector<2x32xf32>
    %85 = arith.addf %83, %84 : vector<2x32xf32>
    %86 = arith.negf %85 : vector<2x32xf32>
    %87 = math.exp %86 : vector<2x32xf32>
    %cst_30 = arith.constant 1.000000e+00 : f32
    %88 = vector.broadcast %cst_30 : f32 to vector<2x32xf32>
    %89 = arith.addf %88, %87 : vector<2x32xf32>
    %90 = arith.divf %88, %89 : vector<2x32xf32>
    %91 = arith.mulf %76, %56 : vector<2x32xf32>
    %92 = arith.mulf %67, %81 : vector<2x32xf32>
    %93 = arith.addf %91, %92 : vector<2x32xf32>
    %94 = math.tanh %93 : vector<2x32xf32>
    %95 = arith.mulf %90, %94 : vector<2x32xf32>
    %96 = vector.extract_strided_slice %8 {offsets = [0, 2, 0], sizes = [2, 1, 32], strides = [1, 1, 1]} : vector<2x8x32xf32> to vector<2x1x32xf32>
    %97 = vector.shape_cast %96 : vector<2x1x32xf32> to vector<2x32xf32>
    %cst_31 = arith.constant dense<0.000000e+00> : vector<2x32xf32>
    %98 = tpu.matmul %95, %13, %cst_31 {dimension_numbers = #tpu.dot_dimension_numbers<[1], [0], [0], [1], [0, 0, 1, 1], [], []>} : vector<2x32xf32>, vector<32x32xf32>, vector<2x32xf32> -> vector<2x32xf32>
    %99 = arith.addf %97, %98 : vector<2x32xf32>
    %100 = arith.negf %99 : vector<2x32xf32>
    %101 = math.exp %100 : vector<2x32xf32>
    %cst_32 = arith.constant 1.000000e+00 : f32
    %102 = vector.broadcast %cst_32 : f32 to vector<2x32xf32>
    %103 = arith.addf %102, %101 : vector<2x32xf32>
    %104 = arith.divf %102, %103 : vector<2x32xf32>
    %105 = vector.extract_strided_slice %9 {offsets = [0, 2, 0], sizes = [2, 1, 32], strides = [1, 1, 1]} : vector<2x8x32xf32> to vector<2x1x32xf32>
    %106 = vector.shape_cast %105 : vector<2x1x32xf32> to vector<2x32xf32>
    %cst_33 = arith.constant dense<0.000000e+00> : vector<2x32xf32>
    %107 = tpu.matmul %95, %15, %cst_33 {dimension_numbers = #tpu.dot_dimension_numbers<[1], [0], [0], [1], [0, 0, 1, 1], [], []>} : vector<2x32xf32>, vector<32x32xf32>, vector<2x32xf32> -> vector<2x32xf32>
    %108 = arith.addf %106, %107 : vector<2x32xf32>
    %109 = arith.negf %108 : vector<2x32xf32>
    %110 = math.exp %109 : vector<2x32xf32>
    %cst_34 = arith.constant 1.000000e+00 : f32
    %111 = vector.broadcast %cst_34 : f32 to vector<2x32xf32>
    %112 = arith.addf %111, %110 : vector<2x32xf32>
    %113 = arith.divf %111, %112 : vector<2x32xf32>
    %114 = vector.extract_strided_slice %10 {offsets = [0, 2, 0], sizes = [2, 1, 32], strides = [1, 1, 1]} : vector<2x8x32xf32> to vector<2x1x32xf32>
    %115 = vector.shape_cast %114 : vector<2x1x32xf32> to vector<2x32xf32>
    %cst_35 = arith.constant dense<0.000000e+00> : vector<2x32xf32>
    %116 = tpu.matmul %95, %17, %cst_35 {dimension_numbers = #tpu.dot_dimension_numbers<[1], [0], [0], [1], [0, 0, 1, 1], [], []>} : vector<2x32xf32>, vector<32x32xf32>, vector<2x32xf32> -> vector<2x32xf32>
    %117 = arith.addf %115, %116 : vector<2x32xf32>
    %118 = math.tanh %117 : vector<2x32xf32>
    %119 = vector.extract_strided_slice %11 {offsets = [0, 2, 0], sizes = [2, 1, 32], strides = [1, 1, 1]} : vector<2x8x32xf32> to vector<2x1x32xf32>
    %120 = vector.shape_cast %119 : vector<2x1x32xf32> to vector<2x32xf32>
    %cst_36 = arith.constant dense<0.000000e+00> : vector<2x32xf32>
    %121 = tpu.matmul %95, %19, %cst_36 {dimension_numbers = #tpu.dot_dimension_numbers<[1], [0], [0], [1], [0, 0, 1, 1], [], []>} : vector<2x32xf32>, vector<32x32xf32>, vector<2x32xf32> -> vector<2x32xf32>
    %122 = arith.addf %120, %121 : vector<2x32xf32>
    %123 = arith.negf %122 : vector<2x32xf32>
    %124 = math.exp %123 : vector<2x32xf32>
    %cst_37 = arith.constant 1.000000e+00 : f32
    %125 = vector.broadcast %cst_37 : f32 to vector<2x32xf32>
    %126 = arith.addf %125, %124 : vector<2x32xf32>
    %127 = arith.divf %125, %126 : vector<2x32xf32>
    %128 = arith.mulf %113, %93 : vector<2x32xf32>
    %129 = arith.mulf %104, %118 : vector<2x32xf32>
    %130 = arith.addf %128, %129 : vector<2x32xf32>
    %131 = math.tanh %130 : vector<2x32xf32>
    %132 = arith.mulf %127, %131 : vector<2x32xf32>
    %133 = vector.extract_strided_slice %8 {offsets = [0, 3, 0], sizes = [2, 1, 32], strides = [1, 1, 1]} : vector<2x8x32xf32> to vector<2x1x32xf32>
    %134 = vector.shape_cast %133 : vector<2x1x32xf32> to vector<2x32xf32>
    %cst_38 = arith.constant dense<0.000000e+00> : vector<2x32xf32>
    %135 = tpu.matmul %132, %13, %cst_38 {dimension_numbers = #tpu.dot_dimension_numbers<[1], [0], [0], [1], [0, 0, 1, 1], [], []>} : vector<2x32xf32>, vector<32x32xf32>, vector<2x32xf32> -> vector<2x32xf32>
    %136 = arith.addf %134, %135 : vector<2x32xf32>
    %137 = arith.negf %136 : vector<2x32xf32>
    %138 = math.exp %137 : vector<2x32xf32>
    %cst_39 = arith.constant 1.000000e+00 : f32
    %139 = vector.broadcast %cst_39 : f32 to vector<2x32xf32>
    %140 = arith.addf %139, %138 : vector<2x32xf32>
    %141 = arith.divf %139, %140 : vector<2x32xf32>
    %142 = vector.extract_strided_slice %9 {offsets = [0, 3, 0], sizes = [2, 1, 32], strides = [1, 1, 1]} : vector<2x8x32xf32> to vector<2x1x32xf32>
    %143 = vector.shape_cast %142 : vector<2x1x32xf32> to vector<2x32xf32>
    %cst_40 = arith.constant dense<0.000000e+00> : vector<2x32xf32>
    %144 = tpu.matmul %132, %15, %cst_40 {dimension_numbers = #tpu.dot_dimension_numbers<[1], [0], [0], [1], [0, 0, 1, 1], [], []>} : vector<2x32xf32>, vector<32x32xf32>, vector<2x32xf32> -> vector<2x32xf32>
    %145 = arith.addf %143, %144 : vector<2x32xf32>
    %146 = arith.negf %145 : vector<2x32xf32>
    %147 = math.exp %146 : vector<2x32xf32>
    %cst_41 = arith.constant 1.000000e+00 : f32
    %148 = vector.broadcast %cst_41 : f32 to vector<2x32xf32>
    %149 = arith.addf %148, %147 : vector<2x32xf32>
    %150 = arith.divf %148, %149 : vector<2x32xf32>
    %151 = vector.extract_strided_slice %10 {offsets = [0, 3, 0], sizes = [2, 1, 32], strides = [1, 1, 1]} : vector<2x8x32xf32> to vector<2x1x32xf32>
    %152 = vector.shape_cast %151 : vector<2x1x32xf32> to vector<2x32xf32>
    %cst_42 = arith.constant dense<0.000000e+00> : vector<2x32xf32>
    %153 = tpu.matmul %132, %17, %cst_42 {dimension_numbers = #tpu.dot_dimension_numbers<[1], [0], [0], [1], [0, 0, 1, 1], [], []>} : vector<2x32xf32>, vector<32x32xf32>, vector<2x32xf32> -> vector<2x32xf32>
    %154 = arith.addf %152, %153 : vector<2x32xf32>
    %155 = math.tanh %154 : vector<2x32xf32>
    %156 = vector.extract_strided_slice %11 {offsets = [0, 3, 0], sizes = [2, 1, 32], strides = [1, 1, 1]} : vector<2x8x32xf32> to vector<2x1x32xf32>
    %157 = vector.shape_cast %156 : vector<2x1x32xf32> to vector<2x32xf32>
    %cst_43 = arith.constant dense<0.000000e+00> : vector<2x32xf32>
    %158 = tpu.matmul %132, %19, %cst_43 {dimension_numbers = #tpu.dot_dimension_numbers<[1], [0], [0], [1], [0, 0, 1, 1], [], []>} : vector<2x32xf32>, vector<32x32xf32>, vector<2x32xf32> -> vector<2x32xf32>
    %159 = arith.addf %157, %158 : vector<2x32xf32>
    %160 = arith.negf %159 : vector<2x32xf32>
    %161 = math.exp %160 : vector<2x32xf32>
    %cst_44 = arith.constant 1.000000e+00 : f32
    %162 = vector.broadcast %cst_44 : f32 to vector<2x32xf32>
    %163 = arith.addf %162, %161 : vector<2x32xf32>
    %164 = arith.divf %162, %163 : vector<2x32xf32>
    %165 = arith.mulf %150, %130 : vector<2x32xf32>
    %166 = arith.mulf %141, %155 : vector<2x32xf32>
    %167 = arith.addf %165, %166 : vector<2x32xf32>
    %168 = math.tanh %167 : vector<2x32xf32>
    %169 = arith.mulf %164, %168 : vector<2x32xf32>
    %170 = vector.extract_strided_slice %8 {offsets = [0, 4, 0], sizes = [2, 1, 32], strides = [1, 1, 1]} : vector<2x8x32xf32> to vector<2x1x32xf32>
    %171 = vector.shape_cast %170 : vector<2x1x32xf32> to vector<2x32xf32>
    %cst_45 = arith.constant dense<0.000000e+00> : vector<2x32xf32>
    %172 = tpu.matmul %169, %13, %cst_45 {dimension_numbers = #tpu.dot_dimension_numbers<[1], [0], [0], [1], [0, 0, 1, 1], [], []>} : vector<2x32xf32>, vector<32x32xf32>, vector<2x32xf32> -> vector<2x32xf32>
    %173 = arith.addf %171, %172 : vector<2x32xf32>
    %174 = arith.negf %173 : vector<2x32xf32>
    %175 = math.exp %174 : vector<2x32xf32>
    %cst_46 = arith.constant 1.000000e+00 : f32
    %176 = vector.broadcast %cst_46 : f32 to vector<2x32xf32>
    %177 = arith.addf %176, %175 : vector<2x32xf32>
    %178 = arith.divf %176, %177 : vector<2x32xf32>
    %179 = vector.extract_strided_slice %9 {offsets = [0, 4, 0], sizes = [2, 1, 32], strides = [1, 1, 1]} : vector<2x8x32xf32> to vector<2x1x32xf32>
    %180 = vector.shape_cast %179 : vector<2x1x32xf32> to vector<2x32xf32>
    %cst_47 = arith.constant dense<0.000000e+00> : vector<2x32xf32>
    %181 = tpu.matmul %169, %15, %cst_47 {dimension_numbers = #tpu.dot_dimension_numbers<[1], [0], [0], [1], [0, 0, 1, 1], [], []>} : vector<2x32xf32>, vector<32x32xf32>, vector<2x32xf32> -> vector<2x32xf32>
    %182 = arith.addf %180, %181 : vector<2x32xf32>
    %183 = arith.negf %182 : vector<2x32xf32>
    %184 = math.exp %183 : vector<2x32xf32>
    %cst_48 = arith.constant 1.000000e+00 : f32
    %185 = vector.broadcast %cst_48 : f32 to vector<2x32xf32>
    %186 = arith.addf %185, %184 : vector<2x32xf32>
    %187 = arith.divf %185, %186 : vector<2x32xf32>
    %188 = vector.extract_strided_slice %10 {offsets = [0, 4, 0], sizes = [2, 1, 32], strides = [1, 1, 1]} : vector<2x8x32xf32> to vector<2x1x32xf32>
    %189 = vector.shape_cast %188 : vector<2x1x32xf32> to vector<2x32xf32>
    %cst_49 = arith.constant dense<0.000000e+00> : vector<2x32xf32>
    %190 = tpu.matmul %169, %17, %cst_49 {dimension_numbers = #tpu.dot_dimension_numbers<[1], [0], [0], [1], [0, 0, 1, 1], [], []>} : vector<2x32xf32>, vector<32x32xf32>, vector<2x32xf32> -> vector<2x32xf32>
    %191 = arith.addf %189, %190 : vector<2x32xf32>
    %192 = math.tanh %191 : vector<2x32xf32>
    %193 = vector.extract_strided_slice %11 {offsets = [0, 4, 0], sizes = [2, 1, 32], strides = [1, 1, 1]} : vector<2x8x32xf32> to vector<2x1x32xf32>
    %194 = vector.shape_cast %193 : vector<2x1x32xf32> to vector<2x32xf32>
    %cst_50 = arith.constant dense<0.000000e+00> : vector<2x32xf32>
    %195 = tpu.matmul %169, %19, %cst_50 {dimension_numbers = #tpu.dot_dimension_numbers<[1], [0], [0], [1], [0, 0, 1, 1], [], []>} : vector<2x32xf32>, vector<32x32xf32>, vector<2x32xf32> -> vector<2x32xf32>
    %196 = arith.addf %194, %195 : vector<2x32xf32>
    %197 = arith.negf %196 : vector<2x32xf32>
    %198 = math.exp %197 : vector<2x32xf32>
    %cst_51 = arith.constant 1.000000e+00 : f32
    %199 = vector.broadcast %cst_51 : f32 to vector<2x32xf32>
    %200 = arith.addf %199, %198 : vector<2x32xf32>
    %201 = arith.divf %199, %200 : vector<2x32xf32>
    %202 = arith.mulf %187, %167 : vector<2x32xf32>
    %203 = arith.mulf %178, %192 : vector<2x32xf32>
    %204 = arith.addf %202, %203 : vector<2x32xf32>
    %205 = math.tanh %204 : vector<2x32xf32>
    %206 = arith.mulf %201, %205 : vector<2x32xf32>
    %207 = vector.extract_strided_slice %8 {offsets = [0, 5, 0], sizes = [2, 1, 32], strides = [1, 1, 1]} : vector<2x8x32xf32> to vector<2x1x32xf32>
    %208 = vector.shape_cast %207 : vector<2x1x32xf32> to vector<2x32xf32>
    %cst_52 = arith.constant dense<0.000000e+00> : vector<2x32xf32>
    %209 = tpu.matmul %206, %13, %cst_52 {dimension_numbers = #tpu.dot_dimension_numbers<[1], [0], [0], [1], [0, 0, 1, 1], [], []>} : vector<2x32xf32>, vector<32x32xf32>, vector<2x32xf32> -> vector<2x32xf32>
    %210 = arith.addf %208, %209 : vector<2x32xf32>
    %211 = arith.negf %210 : vector<2x32xf32>
    %212 = math.exp %211 : vector<2x32xf32>
    %cst_53 = arith.constant 1.000000e+00 : f32
    %213 = vector.broadcast %cst_53 : f32 to vector<2x32xf32>
    %214 = arith.addf %213, %212 : vector<2x32xf32>
    %215 = arith.divf %213, %214 : vector<2x32xf32>
    %216 = vector.extract_strided_slice %9 {offsets = [0, 5, 0], sizes = [2, 1, 32], strides = [1, 1, 1]} : vector<2x8x32xf32> to vector<2x1x32xf32>
    %217 = vector.shape_cast %216 : vector<2x1x32xf32> to vector<2x32xf32>
    %cst_54 = arith.constant dense<0.000000e+00> : vector<2x32xf32>
    %218 = tpu.matmul %206, %15, %cst_54 {dimension_numbers = #tpu.dot_dimension_numbers<[1], [0], [0], [1], [0, 0, 1, 1], [], []>} : vector<2x32xf32>, vector<32x32xf32>, vector<2x32xf32> -> vector<2x32xf32>
    %219 = arith.addf %217, %218 : vector<2x32xf32>
    %220 = arith.negf %219 : vector<2x32xf32>
    %221 = math.exp %220 : vector<2x32xf32>
    %cst_55 = arith.constant 1.000000e+00 : f32
    %222 = vector.broadcast %cst_55 : f32 to vector<2x32xf32>
    %223 = arith.addf %222, %221 : vector<2x32xf32>
    %224 = arith.divf %222, %223 : vector<2x32xf32>
    %225 = vector.extract_strided_slice %10 {offsets = [0, 5, 0], sizes = [2, 1, 32], strides = [1, 1, 1]} : vector<2x8x32xf32> to vector<2x1x32xf32>
    %226 = vector.shape_cast %225 : vector<2x1x32xf32> to vector<2x32xf32>
    %cst_56 = arith.constant dense<0.000000e+00> : vector<2x32xf32>
    %227 = tpu.matmul %206, %17, %cst_56 {dimension_numbers = #tpu.dot_dimension_numbers<[1], [0], [0], [1], [0, 0, 1, 1], [], []>} : vector<2x32xf32>, vector<32x32xf32>, vector<2x32xf32> -> vector<2x32xf32>
    %228 = arith.addf %226, %227 : vector<2x32xf32>
    %229 = math.tanh %228 : vector<2x32xf32>
    %230 = vector.extract_strided_slice %11 {offsets = [0, 5, 0], sizes = [2, 1, 32], strides = [1, 1, 1]} : vector<2x8x32xf32> to vector<2x1x32xf32>
    %231 = vector.shape_cast %230 : vector<2x1x32xf32> to vector<2x32xf32>
    %cst_57 = arith.constant dense<0.000000e+00> : vector<2x32xf32>
    %232 = tpu.matmul %206, %19, %cst_57 {dimension_numbers = #tpu.dot_dimension_numbers<[1], [0], [0], [1], [0, 0, 1, 1], [], []>} : vector<2x32xf32>, vector<32x32xf32>, vector<2x32xf32> -> vector<2x32xf32>
    %233 = arith.addf %231, %232 : vector<2x32xf32>
    %234 = arith.negf %233 : vector<2x32xf32>
    %235 = math.exp %234 : vector<2x32xf32>
    %cst_58 = arith.constant 1.000000e+00 : f32
    %236 = vector.broadcast %cst_58 : f32 to vector<2x32xf32>
    %237 = arith.addf %236, %235 : vector<2x32xf32>
    %238 = arith.divf %236, %237 : vector<2x32xf32>
    %239 = arith.mulf %224, %204 : vector<2x32xf32>
    %240 = arith.mulf %215, %229 : vector<2x32xf32>
    %241 = arith.addf %239, %240 : vector<2x32xf32>
    %242 = math.tanh %241 : vector<2x32xf32>
    %243 = arith.mulf %238, %242 : vector<2x32xf32>
    %244 = vector.extract_strided_slice %8 {offsets = [0, 6, 0], sizes = [2, 1, 32], strides = [1, 1, 1]} : vector<2x8x32xf32> to vector<2x1x32xf32>
    %245 = vector.shape_cast %244 : vector<2x1x32xf32> to vector<2x32xf32>
    %cst_59 = arith.constant dense<0.000000e+00> : vector<2x32xf32>
    %246 = tpu.matmul %243, %13, %cst_59 {dimension_numbers = #tpu.dot_dimension_numbers<[1], [0], [0], [1], [0, 0, 1, 1], [], []>} : vector<2x32xf32>, vector<32x32xf32>, vector<2x32xf32> -> vector<2x32xf32>
    %247 = arith.addf %245, %246 : vector<2x32xf32>
    %248 = arith.negf %247 : vector<2x32xf32>
    %249 = math.exp %248 : vector<2x32xf32>
    %cst_60 = arith.constant 1.000000e+00 : f32
    %250 = vector.broadcast %cst_60 : f32 to vector<2x32xf32>
    %251 = arith.addf %250, %249 : vector<2x32xf32>
    %252 = arith.divf %250, %251 : vector<2x32xf32>
    %253 = vector.extract_strided_slice %9 {offsets = [0, 6, 0], sizes = [2, 1, 32], strides = [1, 1, 1]} : vector<2x8x32xf32> to vector<2x1x32xf32>
    %254 = vector.shape_cast %253 : vector<2x1x32xf32> to vector<2x32xf32>
    %cst_61 = arith.constant dense<0.000000e+00> : vector<2x32xf32>
    %255 = tpu.matmul %243, %15, %cst_61 {dimension_numbers = #tpu.dot_dimension_numbers<[1], [0], [0], [1], [0, 0, 1, 1], [], []>} : vector<2x32xf32>, vector<32x32xf32>, vector<2x32xf32> -> vector<2x32xf32>
    %256 = arith.addf %254, %255 : vector<2x32xf32>
    %257 = arith.negf %256 : vector<2x32xf32>
    %258 = math.exp %257 : vector<2x32xf32>
    %cst_62 = arith.constant 1.000000e+00 : f32
    %259 = vector.broadcast %cst_62 : f32 to vector<2x32xf32>
    %260 = arith.addf %259, %258 : vector<2x32xf32>
    %261 = arith.divf %259, %260 : vector<2x32xf32>
    %262 = vector.extract_strided_slice %10 {offsets = [0, 6, 0], sizes = [2, 1, 32], strides = [1, 1, 1]} : vector<2x8x32xf32> to vector<2x1x32xf32>
    %263 = vector.shape_cast %262 : vector<2x1x32xf32> to vector<2x32xf32>
    %cst_63 = arith.constant dense<0.000000e+00> : vector<2x32xf32>
    %264 = tpu.matmul %243, %17, %cst_63 {dimension_numbers = #tpu.dot_dimension_numbers<[1], [0], [0], [1], [0, 0, 1, 1], [], []>} : vector<2x32xf32>, vector<32x32xf32>, vector<2x32xf32> -> vector<2x32xf32>
    %265 = arith.addf %263, %264 : vector<2x32xf32>
    %266 = math.tanh %265 : vector<2x32xf32>
    %267 = vector.extract_strided_slice %11 {offsets = [0, 6, 0], sizes = [2, 1, 32], strides = [1, 1, 1]} : vector<2x8x32xf32> to vector<2x1x32xf32>
    %268 = vector.shape_cast %267 : vector<2x1x32xf32> to vector<2x32xf32>
    %cst_64 = arith.constant dense<0.000000e+00> : vector<2x32xf32>
    %269 = tpu.matmul %243, %19, %cst_64 {dimension_numbers = #tpu.dot_dimension_numbers<[1], [0], [0], [1], [0, 0, 1, 1], [], []>} : vector<2x32xf32>, vector<32x32xf32>, vector<2x32xf32> -> vector<2x32xf32>
    %270 = arith.addf %268, %269 : vector<2x32xf32>
    %271 = arith.negf %270 : vector<2x32xf32>
    %272 = math.exp %271 : vector<2x32xf32>
    %cst_65 = arith.constant 1.000000e+00 : f32
    %273 = vector.broadcast %cst_65 : f32 to vector<2x32xf32>
    %274 = arith.addf %273, %272 : vector<2x32xf32>
    %275 = arith.divf %273, %274 : vector<2x32xf32>
    %276 = arith.mulf %261, %241 : vector<2x32xf32>
    %277 = arith.mulf %252, %266 : vector<2x32xf32>
    %278 = arith.addf %276, %277 : vector<2x32xf32>
    %279 = math.tanh %278 : vector<2x32xf32>
    %280 = arith.mulf %275, %279 : vector<2x32xf32>
    %281 = vector.extract_strided_slice %8 {offsets = [0, 7, 0], sizes = [2, 1, 32], strides = [1, 1, 1]} : vector<2x8x32xf32> to vector<2x1x32xf32>
    %282 = vector.shape_cast %281 : vector<2x1x32xf32> to vector<2x32xf32>
    %cst_66 = arith.constant dense<0.000000e+00> : vector<2x32xf32>
    %283 = tpu.matmul %280, %13, %cst_66 {dimension_numbers = #tpu.dot_dimension_numbers<[1], [0], [0], [1], [0, 0, 1, 1], [], []>} : vector<2x32xf32>, vector<32x32xf32>, vector<2x32xf32> -> vector<2x32xf32>
    %284 = arith.addf %282, %283 : vector<2x32xf32>
    %285 = arith.negf %284 : vector<2x32xf32>
    %286 = math.exp %285 : vector<2x32xf32>
    %cst_67 = arith.constant 1.000000e+00 : f32
    %287 = vector.broadcast %cst_67 : f32 to vector<2x32xf32>
    %288 = arith.addf %287, %286 : vector<2x32xf32>
    %289 = arith.divf %287, %288 : vector<2x32xf32>
    %290 = vector.extract_strided_slice %9 {offsets = [0, 7, 0], sizes = [2, 1, 32], strides = [1, 1, 1]} : vector<2x8x32xf32> to vector<2x1x32xf32>
    %291 = vector.shape_cast %290 : vector<2x1x32xf32> to vector<2x32xf32>
    %cst_68 = arith.constant dense<0.000000e+00> : vector<2x32xf32>
    %292 = tpu.matmul %280, %15, %cst_68 {dimension_numbers = #tpu.dot_dimension_numbers<[1], [0], [0], [1], [0, 0, 1, 1], [], []>} : vector<2x32xf32>, vector<32x32xf32>, vector<2x32xf32> -> vector<2x32xf32>
    %293 = arith.addf %291, %292 : vector<2x32xf32>
    %294 = arith.negf %293 : vector<2x32xf32>
    %295 = math.exp %294 : vector<2x32xf32>
    %cst_69 = arith.constant 1.000000e+00 : f32
    %296 = vector.broadcast %cst_69 : f32 to vector<2x32xf32>
    %297 = arith.addf %296, %295 : vector<2x32xf32>
    %298 = arith.divf %296, %297 : vector<2x32xf32>
    %299 = vector.extract_strided_slice %10 {offsets = [0, 7, 0], sizes = [2, 1, 32], strides = [1, 1, 1]} : vector<2x8x32xf32> to vector<2x1x32xf32>
    %300 = vector.shape_cast %299 : vector<2x1x32xf32> to vector<2x32xf32>
    %cst_70 = arith.constant dense<0.000000e+00> : vector<2x32xf32>
    %301 = tpu.matmul %280, %17, %cst_70 {dimension_numbers = #tpu.dot_dimension_numbers<[1], [0], [0], [1], [0, 0, 1, 1], [], []>} : vector<2x32xf32>, vector<32x32xf32>, vector<2x32xf32> -> vector<2x32xf32>
    %302 = arith.addf %300, %301 : vector<2x32xf32>
    %303 = math.tanh %302 : vector<2x32xf32>
    %304 = vector.extract_strided_slice %11 {offsets = [0, 7, 0], sizes = [2, 1, 32], strides = [1, 1, 1]} : vector<2x8x32xf32> to vector<2x1x32xf32>
    %305 = vector.shape_cast %304 : vector<2x1x32xf32> to vector<2x32xf32>
    %cst_71 = arith.constant dense<0.000000e+00> : vector<2x32xf32>
    %306 = tpu.matmul %280, %19, %cst_71 {dimension_numbers = #tpu.dot_dimension_numbers<[1], [0], [0], [1], [0, 0, 1, 1], [], []>} : vector<2x32xf32>, vector<32x32xf32>, vector<2x32xf32> -> vector<2x32xf32>
    %307 = arith.addf %305, %306 : vector<2x32xf32>
    %308 = arith.negf %307 : vector<2x32xf32>
    %309 = math.exp %308 : vector<2x32xf32>
    %cst_72 = arith.constant 1.000000e+00 : f32
    %310 = vector.broadcast %cst_72 : f32 to vector<2x32xf32>
    %311 = arith.addf %310, %309 : vector<2x32xf32>
    %312 = arith.divf %310, %311 : vector<2x32xf32>
    %313 = arith.mulf %298, %278 : vector<2x32xf32>
    %314 = arith.mulf %289, %303 : vector<2x32xf32>
    %315 = arith.addf %313, %314 : vector<2x32xf32>
    %316 = math.tanh %315 : vector<2x32xf32>
    %317 = arith.mulf %312, %316 : vector<2x32xf32>
    %318 = vector.shape_cast %58 : vector<2x32xf32> to vector<2x1x32xf32>
    %319 = vector.shape_cast %95 : vector<2x32xf32> to vector<2x1x32xf32>
    %320 = vector.shape_cast %132 : vector<2x32xf32> to vector<2x1x32xf32>
    %321 = vector.shape_cast %169 : vector<2x32xf32> to vector<2x1x32xf32>
    %322 = vector.shape_cast %206 : vector<2x32xf32> to vector<2x1x32xf32>
    %323 = vector.shape_cast %243 : vector<2x32xf32> to vector<2x1x32xf32>
    %324 = vector.shape_cast %280 : vector<2x32xf32> to vector<2x1x32xf32>
    %325 = vector.shape_cast %317 : vector<2x32xf32> to vector<2x1x32xf32>
    %326 = tpu.concatenate %318, %319, %320, %321, %322, %323, %324, %325 in 1 : vector<2x1x32xf32>, vector<2x1x32xf32>, vector<2x1x32xf32>, vector<2x1x32xf32>, vector<2x1x32xf32>, vector<2x1x32xf32>, vector<2x1x32xf32>, vector<2x1x32xf32> -> vector<2x8x32xf32>
    %327 = vector.shape_cast %326 : vector<2x8x32xf32> to vector<16x32xf32>
    %c0_73 = arith.constant 0 : index
    %c0_74 = arith.constant 0 : index
    %328 = vector.load %arg4[%c0_73, %c0_74] : memref<32x128xf32, #tpu.memory_space<vmem>>, vector<32x128xf32>
    %cst_75 = arith.constant dense<0.000000e+00> : vector<16x128xf32>
    %329 = tpu.matmul %327, %328, %cst_75 {dimension_numbers = #tpu.dot_dimension_numbers<[1], [0], [0], [1], [0, 0, 1, 1], [], []>} : vector<16x32xf32>, vector<32x128xf32>, vector<16x128xf32> -> vector<16x128xf32>
    %c0_76 = arith.constant 0 : index
    %c0_77 = arith.constant 0 : index
    %330 = vector.load %arg6[%c0_76, %c0_77] : memref<1x128xf32, #tpu.memory_space<vmem>>, vector<1x128xf32>
    %331 = vector.broadcast %330 : vector<1x128xf32> to vector<16x128xf32>
    %332 = arith.addf %329, %331 : vector<16x128xf32>
    %333 = vector.shape_cast %332 : vector<16x128xf32> to vector<2x8x128xf32>
    %334 = vector.extract_strided_slice %333 {offsets = [0, 0, 0], sizes = [2, 8, 32], strides = [1, 1, 1]} : vector<2x8x128xf32> to vector<2x8x32xf32>
    %335 = vector.extract_strided_slice %333 {offsets = [0, 0, 32], sizes = [2, 8, 32], strides = [1, 1, 1]} : vector<2x8x128xf32> to vector<2x8x32xf32>
    %336 = vector.extract_strided_slice %333 {offsets = [0, 0, 64], sizes = [2, 8, 32], strides = [1, 1, 1]} : vector<2x8x128xf32> to vector<2x8x32xf32>
    %337 = vector.extract_strided_slice %333 {offsets = [0, 0, 96], sizes = [2, 8, 32], strides = [1, 1, 1]} : vector<2x8x128xf32> to vector<2x8x32xf32>
    %c0_78 = arith.constant 0 : index
    %c0_79 = arith.constant 0 : index
    %c0_80 = arith.constant 0 : index
    %338 = vector.load %arg5[%c0_78, %c0_79, %c0_80] : memref<4x32x32xf32, #tpu.memory_space<vmem>>, vector<1x32x32xf32>
    %339 = vector.shape_cast %338 : vector<1x32x32xf32> to vector<32x32xf32>
    %c1_81 = arith.constant 1 : index
    %c0_82 = arith.constant 0 : index
    %c0_83 = arith.constant 0 : index
    %340 = vector.load %arg5[%c1_81, %c0_82, %c0_83] : memref<4x32x32xf32, #tpu.memory_space<vmem>>, vector<1x32x32xf32>
    %341 = vector.shape_cast %340 : vector<1x32x32xf32> to vector<32x32xf32>
    %c2_84 = arith.constant 2 : index
    %c0_85 = arith.constant 0 : index
    %c0_86 = arith.constant 0 : index
    %342 = vector.load %arg5[%c2_84, %c0_85, %c0_86] : memref<4x32x32xf32, #tpu.memory_space<vmem>>, vector<1x32x32xf32>
    %343 = vector.shape_cast %342 : vector<1x32x32xf32> to vector<32x32xf32>
    %c3_87 = arith.constant 3 : index
    %c0_88 = arith.constant 0 : index
    %c0_89 = arith.constant 0 : index
    %344 = vector.load %arg5[%c3_87, %c0_88, %c0_89] : memref<4x32x32xf32, #tpu.memory_space<vmem>>, vector<1x32x32xf32>
    %345 = vector.shape_cast %344 : vector<1x32x32xf32> to vector<32x32xf32>
    %cst_90 = arith.constant 0.000000e+00 : f32
    %346 = vector.broadcast %cst_90 : f32 to vector<2x32xf32>
    %cst_91 = arith.constant 0.000000e+00 : f32
    %347 = vector.broadcast %cst_91 : f32 to vector<2x32xf32>
    %348 = vector.extract_strided_slice %334 {offsets = [0, 0, 0], sizes = [2, 1, 32], strides = [1, 1, 1]} : vector<2x8x32xf32> to vector<2x1x32xf32>
    %349 = vector.shape_cast %348 : vector<2x1x32xf32> to vector<2x32xf32>
    %cst_92 = arith.constant dense<0.000000e+00> : vector<2x32xf32>
    %350 = tpu.matmul %346, %339, %cst_92 {dimension_numbers = #tpu.dot_dimension_numbers<[1], [0], [0], [1], [0, 0, 1, 1], [], []>} : vector<2x32xf32>, vector<32x32xf32>, vector<2x32xf32> -> vector<2x32xf32>
    %351 = arith.addf %349, %350 : vector<2x32xf32>
    %352 = arith.negf %351 : vector<2x32xf32>
    %353 = math.exp %352 : vector<2x32xf32>
    %cst_93 = arith.constant 1.000000e+00 : f32
    %354 = vector.broadcast %cst_93 : f32 to vector<2x32xf32>
    %355 = arith.addf %354, %353 : vector<2x32xf32>
    %356 = arith.divf %354, %355 : vector<2x32xf32>
    %357 = vector.extract_strided_slice %335 {offsets = [0, 0, 0], sizes = [2, 1, 32], strides = [1, 1, 1]} : vector<2x8x32xf32> to vector<2x1x32xf32>
    %358 = vector.shape_cast %357 : vector<2x1x32xf32> to vector<2x32xf32>
    %cst_94 = arith.constant dense<0.000000e+00> : vector<2x32xf32>
    %359 = tpu.matmul %346, %341, %cst_94 {dimension_numbers = #tpu.dot_dimension_numbers<[1], [0], [0], [1], [0, 0, 1, 1], [], []>} : vector<2x32xf32>, vector<32x32xf32>, vector<2x32xf32> -> vector<2x32xf32>
    %360 = arith.addf %358, %359 : vector<2x32xf32>
    %361 = arith.negf %360 : vector<2x32xf32>
    %362 = math.exp %361 : vector<2x32xf32>
    %cst_95 = arith.constant 1.000000e+00 : f32
    %363 = vector.broadcast %cst_95 : f32 to vector<2x32xf32>
    %364 = arith.addf %363, %362 : vector<2x32xf32>
    %365 = arith.divf %363, %364 : vector<2x32xf32>
    %366 = vector.extract_strided_slice %336 {offsets = [0, 0, 0], sizes = [2, 1, 32], strides = [1, 1, 1]} : vector<2x8x32xf32> to vector<2x1x32xf32>
    %367 = vector.shape_cast %366 : vector<2x1x32xf32> to vector<2x32xf32>
    %cst_96 = arith.constant dense<0.000000e+00> : vector<2x32xf32>
    %368 = tpu.matmul %346, %343, %cst_96 {dimension_numbers = #tpu.dot_dimension_numbers<[1], [0], [0], [1], [0, 0, 1, 1], [], []>} : vector<2x32xf32>, vector<32x32xf32>, vector<2x32xf32> -> vector<2x32xf32>
    %369 = arith.addf %367, %368 : vector<2x32xf32>
    %370 = math.tanh %369 : vector<2x32xf32>
    %371 = vector.extract_strided_slice %337 {offsets = [0, 0, 0], sizes = [2, 1, 32], strides = [1, 1, 1]} : vector<2x8x32xf32> to vector<2x1x32xf32>
    %372 = vector.shape_cast %371 : vector<2x1x32xf32> to vector<2x32xf32>
    %cst_97 = arith.constant dense<0.000000e+00> : vector<2x32xf32>
    %373 = tpu.matmul %346, %345, %cst_97 {dimension_numbers = #tpu.dot_dimension_numbers<[1], [0], [0], [1], [0, 0, 1, 1], [], []>} : vector<2x32xf32>, vector<32x32xf32>, vector<2x32xf32> -> vector<2x32xf32>
    %374 = arith.addf %372, %373 : vector<2x32xf32>
    %375 = arith.negf %374 : vector<2x32xf32>
    %376 = math.exp %375 : vector<2x32xf32>
    %cst_98 = arith.constant 1.000000e+00 : f32
    %377 = vector.broadcast %cst_98 : f32 to vector<2x32xf32>
    %378 = arith.addf %377, %376 : vector<2x32xf32>
    %379 = arith.divf %377, %378 : vector<2x32xf32>
    %380 = arith.mulf %365, %347 : vector<2x32xf32>
    %381 = arith.mulf %356, %370 : vector<2x32xf32>
    %382 = arith.addf %380, %381 : vector<2x32xf32>
    %383 = math.tanh %382 : vector<2x32xf32>
    %384 = arith.mulf %379, %383 : vector<2x32xf32>
    %385 = vector.extract_strided_slice %334 {offsets = [0, 1, 0], sizes = [2, 1, 32], strides = [1, 1, 1]} : vector<2x8x32xf32> to vector<2x1x32xf32>
    %386 = vector.shape_cast %385 : vector<2x1x32xf32> to vector<2x32xf32>
    %cst_99 = arith.constant dense<0.000000e+00> : vector<2x32xf32>
    %387 = tpu.matmul %384, %339, %cst_99 {dimension_numbers = #tpu.dot_dimension_numbers<[1], [0], [0], [1], [0, 0, 1, 1], [], []>} : vector<2x32xf32>, vector<32x32xf32>, vector<2x32xf32> -> vector<2x32xf32>
    %388 = arith.addf %386, %387 : vector<2x32xf32>
    %389 = arith.negf %388 : vector<2x32xf32>
    %390 = math.exp %389 : vector<2x32xf32>
    %cst_100 = arith.constant 1.000000e+00 : f32
    %391 = vector.broadcast %cst_100 : f32 to vector<2x32xf32>
    %392 = arith.addf %391, %390 : vector<2x32xf32>
    %393 = arith.divf %391, %392 : vector<2x32xf32>
    %394 = vector.extract_strided_slice %335 {offsets = [0, 1, 0], sizes = [2, 1, 32], strides = [1, 1, 1]} : vector<2x8x32xf32> to vector<2x1x32xf32>
    %395 = vector.shape_cast %394 : vector<2x1x32xf32> to vector<2x32xf32>
    %cst_101 = arith.constant dense<0.000000e+00> : vector<2x32xf32>
    %396 = tpu.matmul %384, %341, %cst_101 {dimension_numbers = #tpu.dot_dimension_numbers<[1], [0], [0], [1], [0, 0, 1, 1], [], []>} : vector<2x32xf32>, vector<32x32xf32>, vector<2x32xf32> -> vector<2x32xf32>
    %397 = arith.addf %395, %396 : vector<2x32xf32>
    %398 = arith.negf %397 : vector<2x32xf32>
    %399 = math.exp %398 : vector<2x32xf32>
    %cst_102 = arith.constant 1.000000e+00 : f32
    %400 = vector.broadcast %cst_102 : f32 to vector<2x32xf32>
    %401 = arith.addf %400, %399 : vector<2x32xf32>
    %402 = arith.divf %400, %401 : vector<2x32xf32>
    %403 = vector.extract_strided_slice %336 {offsets = [0, 1, 0], sizes = [2, 1, 32], strides = [1, 1, 1]} : vector<2x8x32xf32> to vector<2x1x32xf32>
    %404 = vector.shape_cast %403 : vector<2x1x32xf32> to vector<2x32xf32>
    %cst_103 = arith.constant dense<0.000000e+00> : vector<2x32xf32>
    %405 = tpu.matmul %384, %343, %cst_103 {dimension_numbers = #tpu.dot_dimension_numbers<[1], [0], [0], [1], [0, 0, 1, 1], [], []>} : vector<2x32xf32>, vector<32x32xf32>, vector<2x32xf32> -> vector<2x32xf32>
    %406 = arith.addf %404, %405 : vector<2x32xf32>
    %407 = math.tanh %406 : vector<2x32xf32>
    %408 = vector.extract_strided_slice %337 {offsets = [0, 1, 0], sizes = [2, 1, 32], strides = [1, 1, 1]} : vector<2x8x32xf32> to vector<2x1x32xf32>
    %409 = vector.shape_cast %408 : vector<2x1x32xf32> to vector<2x32xf32>
    %cst_104 = arith.constant dense<0.000000e+00> : vector<2x32xf32>
    %410 = tpu.matmul %384, %345, %cst_104 {dimension_numbers = #tpu.dot_dimension_numbers<[1], [0], [0], [1], [0, 0, 1, 1], [], []>} : vector<2x32xf32>, vector<32x32xf32>, vector<2x32xf32> -> vector<2x32xf32>
    %411 = arith.addf %409, %410 : vector<2x32xf32>
    %412 = arith.negf %411 : vector<2x32xf32>
    %413 = math.exp %412 : vector<2x32xf32>
    %cst_105 = arith.constant 1.000000e+00 : f32
    %414 = vector.broadcast %cst_105 : f32 to vector<2x32xf32>
    %415 = arith.addf %414, %413 : vector<2x32xf32>
    %416 = arith.divf %414, %415 : vector<2x32xf32>
    %417 = arith.mulf %402, %382 : vector<2x32xf32>
    %418 = arith.mulf %393, %407 : vector<2x32xf32>
    %419 = arith.addf %417, %418 : vector<2x32xf32>
    %420 = math.tanh %419 : vector<2x32xf32>
    %421 = arith.mulf %416, %420 : vector<2x32xf32>
    %422 = vector.extract_strided_slice %334 {offsets = [0, 2, 0], sizes = [2, 1, 32], strides = [1, 1, 1]} : vector<2x8x32xf32> to vector<2x1x32xf32>
    %423 = vector.shape_cast %422 : vector<2x1x32xf32> to vector<2x32xf32>
    %cst_106 = arith.constant dense<0.000000e+00> : vector<2x32xf32>
    %424 = tpu.matmul %421, %339, %cst_106 {dimension_numbers = #tpu.dot_dimension_numbers<[1], [0], [0], [1], [0, 0, 1, 1], [], []>} : vector<2x32xf32>, vector<32x32xf32>, vector<2x32xf32> -> vector<2x32xf32>
    %425 = arith.addf %423, %424 : vector<2x32xf32>
    %426 = arith.negf %425 : vector<2x32xf32>
    %427 = math.exp %426 : vector<2x32xf32>
    %cst_107 = arith.constant 1.000000e+00 : f32
    %428 = vector.broadcast %cst_107 : f32 to vector<2x32xf32>
    %429 = arith.addf %428, %427 : vector<2x32xf32>
    %430 = arith.divf %428, %429 : vector<2x32xf32>
    %431 = vector.extract_strided_slice %335 {offsets = [0, 2, 0], sizes = [2, 1, 32], strides = [1, 1, 1]} : vector<2x8x32xf32> to vector<2x1x32xf32>
    %432 = vector.shape_cast %431 : vector<2x1x32xf32> to vector<2x32xf32>
    %cst_108 = arith.constant dense<0.000000e+00> : vector<2x32xf32>
    %433 = tpu.matmul %421, %341, %cst_108 {dimension_numbers = #tpu.dot_dimension_numbers<[1], [0], [0], [1], [0, 0, 1, 1], [], []>} : vector<2x32xf32>, vector<32x32xf32>, vector<2x32xf32> -> vector<2x32xf32>
    %434 = arith.addf %432, %433 : vector<2x32xf32>
    %435 = arith.negf %434 : vector<2x32xf32>
    %436 = math.exp %435 : vector<2x32xf32>
    %cst_109 = arith.constant 1.000000e+00 : f32
    %437 = vector.broadcast %cst_109 : f32 to vector<2x32xf32>
    %438 = arith.addf %437, %436 : vector<2x32xf32>
    %439 = arith.divf %437, %438 : vector<2x32xf32>
    %440 = vector.extract_strided_slice %336 {offsets = [0, 2, 0], sizes = [2, 1, 32], strides = [1, 1, 1]} : vector<2x8x32xf32> to vector<2x1x32xf32>
    %441 = vector.shape_cast %440 : vector<2x1x32xf32> to vector<2x32xf32>
    %cst_110 = arith.constant dense<0.000000e+00> : vector<2x32xf32>
    %442 = tpu.matmul %421, %343, %cst_110 {dimension_numbers = #tpu.dot_dimension_numbers<[1], [0], [0], [1], [0, 0, 1, 1], [], []>} : vector<2x32xf32>, vector<32x32xf32>, vector<2x32xf32> -> vector<2x32xf32>
    %443 = arith.addf %441, %442 : vector<2x32xf32>
    %444 = math.tanh %443 : vector<2x32xf32>
    %445 = vector.extract_strided_slice %337 {offsets = [0, 2, 0], sizes = [2, 1, 32], strides = [1, 1, 1]} : vector<2x8x32xf32> to vector<2x1x32xf32>
    %446 = vector.shape_cast %445 : vector<2x1x32xf32> to vector<2x32xf32>
    %cst_111 = arith.constant dense<0.000000e+00> : vector<2x32xf32>
    %447 = tpu.matmul %421, %345, %cst_111 {dimension_numbers = #tpu.dot_dimension_numbers<[1], [0], [0], [1], [0, 0, 1, 1], [], []>} : vector<2x32xf32>, vector<32x32xf32>, vector<2x32xf32> -> vector<2x32xf32>
    %448 = arith.addf %446, %447 : vector<2x32xf32>
    %449 = arith.negf %448 : vector<2x32xf32>
    %450 = math.exp %449 : vector<2x32xf32>
    %cst_112 = arith.constant 1.000000e+00 : f32
    %451 = vector.broadcast %cst_112 : f32 to vector<2x32xf32>
    %452 = arith.addf %451, %450 : vector<2x32xf32>
    %453 = arith.divf %451, %452 : vector<2x32xf32>
    %454 = arith.mulf %439, %419 : vector<2x32xf32>
    %455 = arith.mulf %430, %444 : vector<2x32xf32>
    %456 = arith.addf %454, %455 : vector<2x32xf32>
    %457 = math.tanh %456 : vector<2x32xf32>
    %458 = arith.mulf %453, %457 : vector<2x32xf32>
    %459 = vector.extract_strided_slice %334 {offsets = [0, 3, 0], sizes = [2, 1, 32], strides = [1, 1, 1]} : vector<2x8x32xf32> to vector<2x1x32xf32>
    %460 = vector.shape_cast %459 : vector<2x1x32xf32> to vector<2x32xf32>
    %cst_113 = arith.constant dense<0.000000e+00> : vector<2x32xf32>
    %461 = tpu.matmul %458, %339, %cst_113 {dimension_numbers = #tpu.dot_dimension_numbers<[1], [0], [0], [1], [0, 0, 1, 1], [], []>} : vector<2x32xf32>, vector<32x32xf32>, vector<2x32xf32> -> vector<2x32xf32>
    %462 = arith.addf %460, %461 : vector<2x32xf32>
    %463 = arith.negf %462 : vector<2x32xf32>
    %464 = math.exp %463 : vector<2x32xf32>
    %cst_114 = arith.constant 1.000000e+00 : f32
    %465 = vector.broadcast %cst_114 : f32 to vector<2x32xf32>
    %466 = arith.addf %465, %464 : vector<2x32xf32>
    %467 = arith.divf %465, %466 : vector<2x32xf32>
    %468 = vector.extract_strided_slice %335 {offsets = [0, 3, 0], sizes = [2, 1, 32], strides = [1, 1, 1]} : vector<2x8x32xf32> to vector<2x1x32xf32>
    %469 = vector.shape_cast %468 : vector<2x1x32xf32> to vector<2x32xf32>
    %cst_115 = arith.constant dense<0.000000e+00> : vector<2x32xf32>
    %470 = tpu.matmul %458, %341, %cst_115 {dimension_numbers = #tpu.dot_dimension_numbers<[1], [0], [0], [1], [0, 0, 1, 1], [], []>} : vector<2x32xf32>, vector<32x32xf32>, vector<2x32xf32> -> vector<2x32xf32>
    %471 = arith.addf %469, %470 : vector<2x32xf32>
    %472 = arith.negf %471 : vector<2x32xf32>
    %473 = math.exp %472 : vector<2x32xf32>
    %cst_116 = arith.constant 1.000000e+00 : f32
    %474 = vector.broadcast %cst_116 : f32 to vector<2x32xf32>
    %475 = arith.addf %474, %473 : vector<2x32xf32>
    %476 = arith.divf %474, %475 : vector<2x32xf32>
    %477 = vector.extract_strided_slice %336 {offsets = [0, 3, 0], sizes = [2, 1, 32], strides = [1, 1, 1]} : vector<2x8x32xf32> to vector<2x1x32xf32>
    %478 = vector.shape_cast %477 : vector<2x1x32xf32> to vector<2x32xf32>
    %cst_117 = arith.constant dense<0.000000e+00> : vector<2x32xf32>
    %479 = tpu.matmul %458, %343, %cst_117 {dimension_numbers = #tpu.dot_dimension_numbers<[1], [0], [0], [1], [0, 0, 1, 1], [], []>} : vector<2x32xf32>, vector<32x32xf32>, vector<2x32xf32> -> vector<2x32xf32>
    %480 = arith.addf %478, %479 : vector<2x32xf32>
    %481 = math.tanh %480 : vector<2x32xf32>
    %482 = vector.extract_strided_slice %337 {offsets = [0, 3, 0], sizes = [2, 1, 32], strides = [1, 1, 1]} : vector<2x8x32xf32> to vector<2x1x32xf32>
    %483 = vector.shape_cast %482 : vector<2x1x32xf32> to vector<2x32xf32>
    %cst_118 = arith.constant dense<0.000000e+00> : vector<2x32xf32>
    %484 = tpu.matmul %458, %345, %cst_118 {dimension_numbers = #tpu.dot_dimension_numbers<[1], [0], [0], [1], [0, 0, 1, 1], [], []>} : vector<2x32xf32>, vector<32x32xf32>, vector<2x32xf32> -> vector<2x32xf32>
    %485 = arith.addf %483, %484 : vector<2x32xf32>
    %486 = arith.negf %485 : vector<2x32xf32>
    %487 = math.exp %486 : vector<2x32xf32>
    %cst_119 = arith.constant 1.000000e+00 : f32
    %488 = vector.broadcast %cst_119 : f32 to vector<2x32xf32>
    %489 = arith.addf %488, %487 : vector<2x32xf32>
    %490 = arith.divf %488, %489 : vector<2x32xf32>
    %491 = arith.mulf %476, %456 : vector<2x32xf32>
    %492 = arith.mulf %467, %481 : vector<2x32xf32>
    %493 = arith.addf %491, %492 : vector<2x32xf32>
    %494 = math.tanh %493 : vector<2x32xf32>
    %495 = arith.mulf %490, %494 : vector<2x32xf32>
    %496 = vector.extract_strided_slice %334 {offsets = [0, 4, 0], sizes = [2, 1, 32], strides = [1, 1, 1]} : vector<2x8x32xf32> to vector<2x1x32xf32>
    %497 = vector.shape_cast %496 : vector<2x1x32xf32> to vector<2x32xf32>
    %cst_120 = arith.constant dense<0.000000e+00> : vector<2x32xf32>
    %498 = tpu.matmul %495, %339, %cst_120 {dimension_numbers = #tpu.dot_dimension_numbers<[1], [0], [0], [1], [0, 0, 1, 1], [], []>} : vector<2x32xf32>, vector<32x32xf32>, vector<2x32xf32> -> vector<2x32xf32>
    %499 = arith.addf %497, %498 : vector<2x32xf32>
    %500 = arith.negf %499 : vector<2x32xf32>
    %501 = math.exp %500 : vector<2x32xf32>
    %cst_121 = arith.constant 1.000000e+00 : f32
    %502 = vector.broadcast %cst_121 : f32 to vector<2x32xf32>
    %503 = arith.addf %502, %501 : vector<2x32xf32>
    %504 = arith.divf %502, %503 : vector<2x32xf32>
    %505 = vector.extract_strided_slice %335 {offsets = [0, 4, 0], sizes = [2, 1, 32], strides = [1, 1, 1]} : vector<2x8x32xf32> to vector<2x1x32xf32>
    %506 = vector.shape_cast %505 : vector<2x1x32xf32> to vector<2x32xf32>
    %cst_122 = arith.constant dense<0.000000e+00> : vector<2x32xf32>
    %507 = tpu.matmul %495, %341, %cst_122 {dimension_numbers = #tpu.dot_dimension_numbers<[1], [0], [0], [1], [0, 0, 1, 1], [], []>} : vector<2x32xf32>, vector<32x32xf32>, vector<2x32xf32> -> vector<2x32xf32>
    %508 = arith.addf %506, %507 : vector<2x32xf32>
    %509 = arith.negf %508 : vector<2x32xf32>
    %510 = math.exp %509 : vector<2x32xf32>
    %cst_123 = arith.constant 1.000000e+00 : f32
    %511 = vector.broadcast %cst_123 : f32 to vector<2x32xf32>
    %512 = arith.addf %511, %510 : vector<2x32xf32>
    %513 = arith.divf %511, %512 : vector<2x32xf32>
    %514 = vector.extract_strided_slice %336 {offsets = [0, 4, 0], sizes = [2, 1, 32], strides = [1, 1, 1]} : vector<2x8x32xf32> to vector<2x1x32xf32>
    %515 = vector.shape_cast %514 : vector<2x1x32xf32> to vector<2x32xf32>
    %cst_124 = arith.constant dense<0.000000e+00> : vector<2x32xf32>
    %516 = tpu.matmul %495, %343, %cst_124 {dimension_numbers = #tpu.dot_dimension_numbers<[1], [0], [0], [1], [0, 0, 1, 1], [], []>} : vector<2x32xf32>, vector<32x32xf32>, vector<2x32xf32> -> vector<2x32xf32>
    %517 = arith.addf %515, %516 : vector<2x32xf32>
    %518 = math.tanh %517 : vector<2x32xf32>
    %519 = vector.extract_strided_slice %337 {offsets = [0, 4, 0], sizes = [2, 1, 32], strides = [1, 1, 1]} : vector<2x8x32xf32> to vector<2x1x32xf32>
    %520 = vector.shape_cast %519 : vector<2x1x32xf32> to vector<2x32xf32>
    %cst_125 = arith.constant dense<0.000000e+00> : vector<2x32xf32>
    %521 = tpu.matmul %495, %345, %cst_125 {dimension_numbers = #tpu.dot_dimension_numbers<[1], [0], [0], [1], [0, 0, 1, 1], [], []>} : vector<2x32xf32>, vector<32x32xf32>, vector<2x32xf32> -> vector<2x32xf32>
    %522 = arith.addf %520, %521 : vector<2x32xf32>
    %523 = arith.negf %522 : vector<2x32xf32>
    %524 = math.exp %523 : vector<2x32xf32>
    %cst_126 = arith.constant 1.000000e+00 : f32
    %525 = vector.broadcast %cst_126 : f32 to vector<2x32xf32>
    %526 = arith.addf %525, %524 : vector<2x32xf32>
    %527 = arith.divf %525, %526 : vector<2x32xf32>
    %528 = arith.mulf %513, %493 : vector<2x32xf32>
    %529 = arith.mulf %504, %518 : vector<2x32xf32>
    %530 = arith.addf %528, %529 : vector<2x32xf32>
    %531 = math.tanh %530 : vector<2x32xf32>
    %532 = arith.mulf %527, %531 : vector<2x32xf32>
    %533 = vector.extract_strided_slice %334 {offsets = [0, 5, 0], sizes = [2, 1, 32], strides = [1, 1, 1]} : vector<2x8x32xf32> to vector<2x1x32xf32>
    %534 = vector.shape_cast %533 : vector<2x1x32xf32> to vector<2x32xf32>
    %cst_127 = arith.constant dense<0.000000e+00> : vector<2x32xf32>
    %535 = tpu.matmul %532, %339, %cst_127 {dimension_numbers = #tpu.dot_dimension_numbers<[1], [0], [0], [1], [0, 0, 1, 1], [], []>} : vector<2x32xf32>, vector<32x32xf32>, vector<2x32xf32> -> vector<2x32xf32>
    %536 = arith.addf %534, %535 : vector<2x32xf32>
    %537 = arith.negf %536 : vector<2x32xf32>
    %538 = math.exp %537 : vector<2x32xf32>
    %cst_128 = arith.constant 1.000000e+00 : f32
    %539 = vector.broadcast %cst_128 : f32 to vector<2x32xf32>
    %540 = arith.addf %539, %538 : vector<2x32xf32>
    %541 = arith.divf %539, %540 : vector<2x32xf32>
    %542 = vector.extract_strided_slice %335 {offsets = [0, 5, 0], sizes = [2, 1, 32], strides = [1, 1, 1]} : vector<2x8x32xf32> to vector<2x1x32xf32>
    %543 = vector.shape_cast %542 : vector<2x1x32xf32> to vector<2x32xf32>
    %cst_129 = arith.constant dense<0.000000e+00> : vector<2x32xf32>
    %544 = tpu.matmul %532, %341, %cst_129 {dimension_numbers = #tpu.dot_dimension_numbers<[1], [0], [0], [1], [0, 0, 1, 1], [], []>} : vector<2x32xf32>, vector<32x32xf32>, vector<2x32xf32> -> vector<2x32xf32>
    %545 = arith.addf %543, %544 : vector<2x32xf32>
    %546 = arith.negf %545 : vector<2x32xf32>
    %547 = math.exp %546 : vector<2x32xf32>
    %cst_130 = arith.constant 1.000000e+00 : f32
    %548 = vector.broadcast %cst_130 : f32 to vector<2x32xf32>
    %549 = arith.addf %548, %547 : vector<2x32xf32>
    %550 = arith.divf %548, %549 : vector<2x32xf32>
    %551 = vector.extract_strided_slice %336 {offsets = [0, 5, 0], sizes = [2, 1, 32], strides = [1, 1, 1]} : vector<2x8x32xf32> to vector<2x1x32xf32>
    %552 = vector.shape_cast %551 : vector<2x1x32xf32> to vector<2x32xf32>
    %cst_131 = arith.constant dense<0.000000e+00> : vector<2x32xf32>
    %553 = tpu.matmul %532, %343, %cst_131 {dimension_numbers = #tpu.dot_dimension_numbers<[1], [0], [0], [1], [0, 0, 1, 1], [], []>} : vector<2x32xf32>, vector<32x32xf32>, vector<2x32xf32> -> vector<2x32xf32>
    %554 = arith.addf %552, %553 : vector<2x32xf32>
    %555 = math.tanh %554 : vector<2x32xf32>
    %556 = vector.extract_strided_slice %337 {offsets = [0, 5, 0], sizes = [2, 1, 32], strides = [1, 1, 1]} : vector<2x8x32xf32> to vector<2x1x32xf32>
    %557 = vector.shape_cast %556 : vector<2x1x32xf32> to vector<2x32xf32>
    %cst_132 = arith.constant dense<0.000000e+00> : vector<2x32xf32>
    %558 = tpu.matmul %532, %345, %cst_132 {dimension_numbers = #tpu.dot_dimension_numbers<[1], [0], [0], [1], [0, 0, 1, 1], [], []>} : vector<2x32xf32>, vector<32x32xf32>, vector<2x32xf32> -> vector<2x32xf32>
    %559 = arith.addf %557, %558 : vector<2x32xf32>
    %560 = arith.negf %559 : vector<2x32xf32>
    %561 = math.exp %560 : vector<2x32xf32>
    %cst_133 = arith.constant 1.000000e+00 : f32
    %562 = vector.broadcast %cst_133 : f32 to vector<2x32xf32>
    %563 = arith.addf %562, %561 : vector<2x32xf32>
    %564 = arith.divf %562, %563 : vector<2x32xf32>
    %565 = arith.mulf %550, %530 : vector<2x32xf32>
    %566 = arith.mulf %541, %555 : vector<2x32xf32>
    %567 = arith.addf %565, %566 : vector<2x32xf32>
    %568 = math.tanh %567 : vector<2x32xf32>
    %569 = arith.mulf %564, %568 : vector<2x32xf32>
    %570 = vector.extract_strided_slice %334 {offsets = [0, 6, 0], sizes = [2, 1, 32], strides = [1, 1, 1]} : vector<2x8x32xf32> to vector<2x1x32xf32>
    %571 = vector.shape_cast %570 : vector<2x1x32xf32> to vector<2x32xf32>
    %cst_134 = arith.constant dense<0.000000e+00> : vector<2x32xf32>
    %572 = tpu.matmul %569, %339, %cst_134 {dimension_numbers = #tpu.dot_dimension_numbers<[1], [0], [0], [1], [0, 0, 1, 1], [], []>} : vector<2x32xf32>, vector<32x32xf32>, vector<2x32xf32> -> vector<2x32xf32>
    %573 = arith.addf %571, %572 : vector<2x32xf32>
    %574 = arith.negf %573 : vector<2x32xf32>
    %575 = math.exp %574 : vector<2x32xf32>
    %cst_135 = arith.constant 1.000000e+00 : f32
    %576 = vector.broadcast %cst_135 : f32 to vector<2x32xf32>
    %577 = arith.addf %576, %575 : vector<2x32xf32>
    %578 = arith.divf %576, %577 : vector<2x32xf32>
    %579 = vector.extract_strided_slice %335 {offsets = [0, 6, 0], sizes = [2, 1, 32], strides = [1, 1, 1]} : vector<2x8x32xf32> to vector<2x1x32xf32>
    %580 = vector.shape_cast %579 : vector<2x1x32xf32> to vector<2x32xf32>
    %cst_136 = arith.constant dense<0.000000e+00> : vector<2x32xf32>
    %581 = tpu.matmul %569, %341, %cst_136 {dimension_numbers = #tpu.dot_dimension_numbers<[1], [0], [0], [1], [0, 0, 1, 1], [], []>} : vector<2x32xf32>, vector<32x32xf32>, vector<2x32xf32> -> vector<2x32xf32>
    %582 = arith.addf %580, %581 : vector<2x32xf32>
    %583 = arith.negf %582 : vector<2x32xf32>
    %584 = math.exp %583 : vector<2x32xf32>
    %cst_137 = arith.constant 1.000000e+00 : f32
    %585 = vector.broadcast %cst_137 : f32 to vector<2x32xf32>
    %586 = arith.addf %585, %584 : vector<2x32xf32>
    %587 = arith.divf %585, %586 : vector<2x32xf32>
    %588 = vector.extract_strided_slice %336 {offsets = [0, 6, 0], sizes = [2, 1, 32], strides = [1, 1, 1]} : vector<2x8x32xf32> to vector<2x1x32xf32>
    %589 = vector.shape_cast %588 : vector<2x1x32xf32> to vector<2x32xf32>
    %cst_138 = arith.constant dense<0.000000e+00> : vector<2x32xf32>
    %590 = tpu.matmul %569, %343, %cst_138 {dimension_numbers = #tpu.dot_dimension_numbers<[1], [0], [0], [1], [0, 0, 1, 1], [], []>} : vector<2x32xf32>, vector<32x32xf32>, vector<2x32xf32> -> vector<2x32xf32>
    %591 = arith.addf %589, %590 : vector<2x32xf32>
    %592 = math.tanh %591 : vector<2x32xf32>
    %593 = vector.extract_strided_slice %337 {offsets = [0, 6, 0], sizes = [2, 1, 32], strides = [1, 1, 1]} : vector<2x8x32xf32> to vector<2x1x32xf32>
    %594 = vector.shape_cast %593 : vector<2x1x32xf32> to vector<2x32xf32>
    %cst_139 = arith.constant dense<0.000000e+00> : vector<2x32xf32>
    %595 = tpu.matmul %569, %345, %cst_139 {dimension_numbers = #tpu.dot_dimension_numbers<[1], [0], [0], [1], [0, 0, 1, 1], [], []>} : vector<2x32xf32>, vector<32x32xf32>, vector<2x32xf32> -> vector<2x32xf32>
    %596 = arith.addf %594, %595 : vector<2x32xf32>
    %597 = arith.negf %596 : vector<2x32xf32>
    %598 = math.exp %597 : vector<2x32xf32>
    %cst_140 = arith.constant 1.000000e+00 : f32
    %599 = vector.broadcast %cst_140 : f32 to vector<2x32xf32>
    %600 = arith.addf %599, %598 : vector<2x32xf32>
    %601 = arith.divf %599, %600 : vector<2x32xf32>
    %602 = arith.mulf %587, %567 : vector<2x32xf32>
    %603 = arith.mulf %578, %592 : vector<2x32xf32>
    %604 = arith.addf %602, %603 : vector<2x32xf32>
    %605 = math.tanh %604 : vector<2x32xf32>
    %606 = arith.mulf %601, %605 : vector<2x32xf32>
    %607 = vector.extract_strided_slice %334 {offsets = [0, 7, 0], sizes = [2, 1, 32], strides = [1, 1, 1]} : vector<2x8x32xf32> to vector<2x1x32xf32>
    %608 = vector.shape_cast %607 : vector<2x1x32xf32> to vector<2x32xf32>
    %cst_141 = arith.constant dense<0.000000e+00> : vector<2x32xf32>
    %609 = tpu.matmul %606, %339, %cst_141 {dimension_numbers = #tpu.dot_dimension_numbers<[1], [0], [0], [1], [0, 0, 1, 1], [], []>} : vector<2x32xf32>, vector<32x32xf32>, vector<2x32xf32> -> vector<2x32xf32>
    %610 = arith.addf %608, %609 : vector<2x32xf32>
    %611 = arith.negf %610 : vector<2x32xf32>
    %612 = math.exp %611 : vector<2x32xf32>
    %cst_142 = arith.constant 1.000000e+00 : f32
    %613 = vector.broadcast %cst_142 : f32 to vector<2x32xf32>
    %614 = arith.addf %613, %612 : vector<2x32xf32>
    %615 = arith.divf %613, %614 : vector<2x32xf32>
    %616 = vector.extract_strided_slice %335 {offsets = [0, 7, 0], sizes = [2, 1, 32], strides = [1, 1, 1]} : vector<2x8x32xf32> to vector<2x1x32xf32>
    %617 = vector.shape_cast %616 : vector<2x1x32xf32> to vector<2x32xf32>
    %cst_143 = arith.constant dense<0.000000e+00> : vector<2x32xf32>
    %618 = tpu.matmul %606, %341, %cst_143 {dimension_numbers = #tpu.dot_dimension_numbers<[1], [0], [0], [1], [0, 0, 1, 1], [], []>} : vector<2x32xf32>, vector<32x32xf32>, vector<2x32xf32> -> vector<2x32xf32>
    %619 = arith.addf %617, %618 : vector<2x32xf32>
    %620 = arith.negf %619 : vector<2x32xf32>
    %621 = math.exp %620 : vector<2x32xf32>
    %cst_144 = arith.constant 1.000000e+00 : f32
    %622 = vector.broadcast %cst_144 : f32 to vector<2x32xf32>
    %623 = arith.addf %622, %621 : vector<2x32xf32>
    %624 = arith.divf %622, %623 : vector<2x32xf32>
    %625 = vector.extract_strided_slice %336 {offsets = [0, 7, 0], sizes = [2, 1, 32], strides = [1, 1, 1]} : vector<2x8x32xf32> to vector<2x1x32xf32>
    %626 = vector.shape_cast %625 : vector<2x1x32xf32> to vector<2x32xf32>
    %cst_145 = arith.constant dense<0.000000e+00> : vector<2x32xf32>
    %627 = tpu.matmul %606, %343, %cst_145 {dimension_numbers = #tpu.dot_dimension_numbers<[1], [0], [0], [1], [0, 0, 1, 1], [], []>} : vector<2x32xf32>, vector<32x32xf32>, vector<2x32xf32> -> vector<2x32xf32>
    %628 = arith.addf %626, %627 : vector<2x32xf32>
    %629 = math.tanh %628 : vector<2x32xf32>
    %630 = vector.extract_strided_slice %337 {offsets = [0, 7, 0], sizes = [2, 1, 32], strides = [1, 1, 1]} : vector<2x8x32xf32> to vector<2x1x32xf32>
    %631 = vector.shape_cast %630 : vector<2x1x32xf32> to vector<2x32xf32>
    %cst_146 = arith.constant dense<0.000000e+00> : vector<2x32xf32>
    %632 = tpu.matmul %606, %345, %cst_146 {dimension_numbers = #tpu.dot_dimension_numbers<[1], [0], [0], [1], [0, 0, 1, 1], [], []>} : vector<2x32xf32>, vector<32x32xf32>, vector<2x32xf32> -> vector<2x32xf32>
    %633 = arith.addf %631, %632 : vector<2x32xf32>
    %634 = arith.negf %633 : vector<2x32xf32>
    %635 = math.exp %634 : vector<2x32xf32>
    %cst_147 = arith.constant 1.000000e+00 : f32
    %636 = vector.broadcast %cst_147 : f32 to vector<2x32xf32>
    %637 = arith.addf %636, %635 : vector<2x32xf32>
    %638 = arith.divf %636, %637 : vector<2x32xf32>
    %639 = arith.mulf %624, %604 : vector<2x32xf32>
    %640 = arith.mulf %615, %629 : vector<2x32xf32>
    %641 = arith.addf %639, %640 : vector<2x32xf32>
    %642 = math.tanh %641 : vector<2x32xf32>
    %643 = arith.mulf %638, %642 : vector<2x32xf32>
    %c0_148 = arith.constant 0 : index
    %c0_149 = arith.constant 0 : index
    %644 = vector.load %arg7[%c0_148, %c0_149] : memref<32x8xf32, #tpu.memory_space<vmem>>, vector<32x8xf32>
    %cst_150 = arith.constant dense<0.000000e+00> : vector<2x8xf32>
    %645 = tpu.matmul %643, %644, %cst_150 {dimension_numbers = #tpu.dot_dimension_numbers<[1], [0], [0], [1], [0, 0, 1, 1], [], []>} : vector<2x32xf32>, vector<32x8xf32>, vector<2x8xf32> -> vector<2x8xf32>
    %c0_151 = arith.constant 0 : index
    %c0_152 = arith.constant 0 : index
    %646 = vector.load %arg8[%c0_151, %c0_152] : memref<1x8xf32, #tpu.memory_space<vmem>>, vector<1x8xf32>
    %647 = vector.broadcast %646 : vector<1x8xf32> to vector<2x8xf32>
    %648 = arith.addf %645, %647 : vector<2x8xf32>
    %c0_153 = arith.constant 0 : index
    %c0_154 = arith.constant 0 : index
    %649 = vector.load %arg9[%c0_153, %c0_154] : memref<2x8xf32, #tpu.memory_space<vmem>>, vector<2x8xf32>
    tpu.vector_store %arg9[%c0_153, %c0_154], %648 {strides = array<i32>} : memref<2x8xf32, #tpu.memory_space<vmem>>, vector<2x8xf32>,
    return
  }
}

</mosaic_0001>

<llo_original>
// kernel: tpu_custom_call.1
$region0: #{tpu_custom_call.1}
  #allocation0 [shape = 'u32[]', space=smem, size = 0x4, offset = 0x4, fixed_abs, tag = 'smem constant byte address 0x4 - core index']
  #allocation1 [shape = 'u32[72,128]{1,0:T(1,128)}', space=vmem, size = 0x9000, scoped, tag = 'internal scratch']
  %s0 = inlined_call_operand.hbm [shape: f32[2,8,16], index: 0, kind: input, shape index: {}]
  %s1 = inlined_call_operand.hbm [shape: f32[16,128], index: 1, kind: input, shape index: {}]
  %s2 = inlined_call_operand.hbm [shape: f32[4,32,32], index: 2, kind: input, shape index: {}]
  %s3 = inlined_call_operand.vmem [shape: f32[1,128], index: 3, kind: input, shape index: {}]
  %s4 = inlined_call_operand.vmem [shape: f32[32,128], index: 4, kind: input, shape index: {}]
  %s5 = inlined_call_operand.hbm [shape: f32[4,32,32], index: 5, kind: input, shape index: {}]
  %s6 = inlined_call_operand.vmem [shape: f32[1,128], index: 6, kind: input, shape index: {}]
  %s7 = inlined_call_operand.vmem [shape: f32[32,8], index: 7, kind: input, shape index: {}]
  %s8 = inlined_call_operand.vmem [shape: f32[1,8], index: 8, kind: input, shape index: {}]
  %s9 = inlined_call_operand.hbm [shape: f32[2,8], index: 9, kind: output, shape index: {}]
  %s10 = sld [smem:[#allocation0]]
  $region62: #{tpu_custom_call.1} parent=0
    _
  %s12 = ssub.s32 1, %s10
  %s13 = scalar_select 0, %s12, %s10
  $region1: #{tpu_custom_call.1} parent=0
    #allocation2 [shape = 'u8[8192]{0}', space=vmem, size = 0x2000, scoped, tag = 'input window, operand 0, single buffered']
    #allocation3 [shape = 's32[1]{0}', space=sflag, size = 0x4, scoped, tag = 'scoped memory for tpu_custom_call.1']
    #allocation4 [shape = 's32[1]{0}', space=sflag, size = 0x4, scoped, tag = 'scoped memory for tpu_custom_call.1']
    #allocation5 [shape = 'u8[8192]{0}', space=vmem, size = 0x2000, scoped, tag = 'input window, operand 1, single buffered']
    #allocation6 [shape = 's32[1]{0}', space=sflag, size = 0x4, scoped, tag = 'scoped memory for tpu_custom_call.1']
    #allocation7 [shape = 'u8[65536]{0}', space=vmem, size = 0x10000, scoped, tag = 'input window, operand 2, single buffered']
    #allocation8 [shape = 'u8[65536]{0}', space=vmem, size = 0x10000, scoped, tag = 'input window, operand 5, single buffered']
    #allocation9 [shape = 's32[1]{0}', space=sflag, size = 0x4, scoped, tag = 'scoped memory for tpu_custom_call.1']
    #allocation10 [shape = 'u8[1024]{0}', space=vmem, size = 0x400, scoped, tag = 'output window, operand 0, single buffered']
    %14 = vsyncpa [#allocation3], 0
    %15 = vsyncpa [#allocation6], 0
    %16 = vsyncpa [#allocation9], 0
    %17 = vsyncpa [#allocation4], 0
    // Predicated region
    $region2: #{tpu_custom_call.1} parent=1 // pred_check
      _
    $region3: #{tpu_custom_call.1} parent=1 // pred_check_branch
      %19 = sbr.rel (0) target = $region5
    $region4: #{tpu_custom_call.1} parent=1 // pred_region
      %21 = vsyncadd [#allocation3], 0
      %s22 = sshll.u32 %s0, 4
      %s23 = int_to_ptr.hbm [resolvable:$true] %s22
      %s24 = sshll.u32 [#allocation2], 4
      %s25 = int_to_ptr.vmem [resolvable:$true] %s24
      %30 = dma.hbm_to_vmem [thread:$0]  %s23, 256, %s25, [#allocation3], 128, 128, 8
    $region5: #{tpu_custom_call.1} parent=1 // pred_fallthru
      _
    // Predicated region
    $region6: #{tpu_custom_call.1} parent=1 // pred_check
      _
    $region7: #{tpu_custom_call.1} parent=1 // pred_check_branch
      %32 = sbr.rel (0) target = $region9
    $region8: #{tpu_custom_call.1} parent=1 // pred_region
      %34 = vsyncadd [#allocation6], 0
      %s35 = sshll.u32 %s1, 4
      %s36 = int_to_ptr.hbm [resolvable:$true] %s35
      %s37 = sshll.u32 [#allocation5], 4
      %s38 = int_to_ptr.vmem [resolvable:$true] %s37
      %43 = dma.hbm_to_vmem [thread:$0]  %s36, 256, %s38, [#allocation6], 128, 128, 8
    $region9: #{tpu_custom_call.1} parent=1 // pred_fallthru
      _
    // Predicated region
    $region10: #{tpu_custom_call.1} parent=1 // pred_check
      _
    $region11: #{tpu_custom_call.1} parent=1 // pred_check_branch
      %45 = sbr.rel (0) target = $region13
    $region12: #{tpu_custom_call.1} parent=1 // pred_region
      %47 = vsyncadd [#allocation6], 0
      %s48 = sshll.u32 %s2, 4
      %s49 = int_to_ptr.hbm [resolvable:$true] %s48
      %s50 = sshll.u32 [#allocation7], 4
      %s51 = int_to_ptr.vmem [resolvable:$true] %s50
      %56 = dma.hbm_to_vmem [thread:$0]  %s49, 2048, %s51, [#allocation6], 128, 128, 8
    $region13: #{tpu_custom_call.1} parent=1 // pred_fallthru
      _
    // Predicated region
    $region14: #{tpu_custom_call.1} parent=1 // pred_check
      _
    $region15: #{tpu_custom_call.1} parent=1 // pred_check_branch
      %58 = sbr.rel (0) target = $region17
    $region16: #{tpu_custom_call.1} parent=1 // pred_region
      _
    $region17: #{tpu_custom_call.1} parent=1 // pred_fallthru
      _
    // Predicated region
    $region18: #{tpu_custom_call.1} parent=1 // pred_check
      _
    $region19: #{tpu_custom_call.1} parent=1 // pred_check_branch
      %60 = sbr.rel (0) target = $region21
    $region20: #{tpu_custom_call.1} parent=1 // pred_region
      _
    $region21: #{tpu_custom_call.1} parent=1 // pred_fallthru
      _
    // Predicated region
    $region22: #{tpu_custom_call.1} parent=1 // pred_check
      _
    $region23: #{tpu_custom_call.1} parent=1 // pred_check_branch
      %62 = sbr.rel (0) target = $region25
    $region24: #{tpu_custom_call.1} parent=1 // pred_region
      %64 = vsyncadd [#allocation9], 0
      %s65 = sshll.u32 %s5, 4
      %s66 = int_to_ptr.hbm [resolvable:$true] %s65
      %s67 = sshll.u32 [#allocation8], 4
      %s68 = int_to_ptr.vmem [resolvable:$true] %s67
      %73 = dma.hbm_to_vmem [thread:$0]  %s66, 2048, %s68, [#allocation9], 128, 128, 8
    $region25: #{tpu_custom_call.1} parent=1 // pred_fallthru
      _
    // Predicated region
    $region26: #{tpu_custom_call.1} parent=1 // pred_check
      _
    $region27: #{tpu_custom_call.1} parent=1 // pred_check_branch
      %75 = sbr.rel (0) target = $region29
    $region28: #{tpu_custom_call.1} parent=1 // pred_region
      _
    $region29: #{tpu_custom_call.1} parent=1 // pred_fallthru
      _
    // Predicated region
    $region30: #{tpu_custom_call.1} parent=1 // pred_check
      _
    $region31: #{tpu_custom_call.1} parent=1 // pred_check_branch
      %77 = sbr.rel (0) target = $region33
    $region32: #{tpu_custom_call.1} parent=1 // pred_region
      _
    $region33: #{tpu_custom_call.1} parent=1 // pred_fallthru
      _
    // Predicated region
    $region34: #{tpu_custom_call.1} parent=1 // pred_check
      _
    $region35: #{tpu_custom_call.1} parent=1 // pred_check_branch
      %79 = sbr.rel (0) target = $region37
    $region36: #{tpu_custom_call.1} parent=1 // pred_region
      _
    $region37: #{tpu_custom_call.1} parent=1 // pred_fallthru
      _
    // Predicated region
    $region38: #{tpu_custom_call.1} parent=1 // pred_check
      _
    $region39: #{tpu_custom_call.1} parent=1 // pred_check_branch
      %81 = sbr.rel (0) target = $region41
    $region40: #{tpu_custom_call.1} parent=1 // pred_region
      %83 = dma.done [#allocation3], 256
    $region41: #{tpu_custom_call.1} parent=1 // pred_fallthru
      _
    // Predicated region
    $region42: #{tpu_custom_call.1} parent=1 // pred_check
      _
    $region43: #{tpu_custom_call.1} parent=1 // pred_check_branch
      %85 = sbr.rel (0) target = $region45
    $region44: #{tpu_custom_call.1} parent=1 // pred_region
      %87 = dma.done [#allocation6], 256
    $region45: #{tpu_custom_call.1} parent=1 // pred_fallthru
      _
    // Predicated region
    $region46: #{tpu_custom_call.1} parent=1 // pred_check
      _
    $region47: #{tpu_custom_call.1} parent=1 // pred_check_branch
      %89 = sbr.rel (0) target = $region49
    $region48: #{tpu_custom_call.1} parent=1 // pred_region
      %91 = dma.done [#allocation6], 2048
    $region49: #{tpu_custom_call.1} parent=1 // pred_fallthru
      _
    // Predicated region
    $region50: #{tpu_custom_call.1} parent=1 // pred_check
      _
    $region51: #{tpu_custom_call.1} parent=1 // pred_check_branch
      %93 = sbr.rel (0) target = $region53
    $region52: #{tpu_custom_call.1} parent=1 // pred_region
      %95 = dma.done [#allocation9], 2048
    $region53: #{tpu_custom_call.1} parent=1 // pred_fallthru
      _
    %v96 = vld [vmem:[#allocation2] sm:$0xff]
    %v97 = vld [vmem:[#allocation2 + $0x8] sm:$0xff]
    %v98 = vld [vmem:[#allocation5] sm:$0xff]
    %v99 = vld [vmem:[#allocation5 + $0x8] sm:$0xff]
    %v100 = vld [vmem:[%s3] sm:$0x1]
    %v102 = vperm.slane %v100, 0
    %vm104 = vcmask 130048
    %v106 = vsel %vm104, %v96, 0
    %v109 = vsel %vm104, %v97, 0
    %111 = vmatpush.msra.mxu0 0.0
    %112 = vmatpush.msra.mxu0 0.0
    %113 = vmatpush.msra.mxu0 0.0
    %114 = vmatpush.msra.mxu0 0.0
    %115 = vmatpush.msra.mxu0 0.0
    %116 = vmatpush.msra.mxu0 0.0
    %117 = vmatpush.msra.mxu0 0.0
    %118 = vmatpush.msra.mxu0 0.0
    %119 = vmatpush.msra.mxu0 0.0
    %120 = vmatpush.msra.mxu0 0.0
    %121 = vmatpush.msra.mxu0 0.0
    %122 = vmatpush.msra.mxu0 0.0
    %123 = vmatpush.msra.mxu0 0.0
    %124 = vmatpush.msra.mxu0 0.0
    %125 = vmatpush.msra.mxu0 %v99
    %126 = vmatpush.msra.mxu0 %v98
    %127 = vmatmul.f32.gmra.mxu0 %v106
    %v128 = vpop.f32.mrf.mxu0
    %v129 = vadd.f32 %v102, %v128
    %130 = vmatmul.f32.gmra.mxu0 %v109
    %v131 = vpop.f32.mrf.mxu0
    %v132 = vadd.f32 %v102, %v131
    %133 = vdwg.mxu0
    %v134 = vld [vmem:[#allocation7] sm:$0xff]
    %v135 = vld [vmem:[#allocation7 + $0x8] sm:$0xff]
    %v136 = vld [vmem:[#allocation7 + $0x10] sm:$0xff]
    %v137 = vld [vmem:[#allocation7 + $0x18] sm:$0xff]
    %s138 = scalar_lea.vmem [#allocation7], 32
    %v139 = vld [vmem:[%s138] sm:$0xff]
    %v140 = vld [vmem:[%s138 + $0x8] sm:$0xff]
    %v141 = vld [vmem:[%s138 + $0x10] sm:$0xff]
    %v142 = vld [vmem:[%s138 + $0x18] sm:$0xff]
    %s143 = scalar_lea.vmem [#allocation7], 64
    %v144 = vld [vmem:[%s143] sm:$0xff]
    %v145 = vld [vmem:[%s143 + $0x8] sm:$0xff]
    %v146 = vld [vmem:[%s143 + $0x10] sm:$0xff]
    %v147 = vld [vmem:[%s143 + $0x18] sm:$0xff]
    %s148 = scalar_lea.vmem [#allocation7], 96
    %v149 = vld [vmem:[%s148] sm:$0xff]
    %v150 = vld [vmem:[%s148 + $0x8] sm:$0xff]
    %v151 = vld [vmem:[%s148 + $0x10] sm:$0xff]
    %v152 = vld [vmem:[%s148 + $0x18] sm:$0xff]
    %vm153 = vcmask 261120
    %v155 = vsel %vm153, 0.0, 0
    %157 = vmatpush.msra.mxu0 0.0
    %158 = vmatpush.msra.mxu0 0.0
    %159 = vmatpush.msra.mxu0 0.0
    %160 = vmatpush.msra.mxu0 0.0
    %161 = vmatpush.msra.mxu0 0.0
    %162 = vmatpush.msra.mxu0 0.0
    %163 = vmatpush.msra.mxu0 0.0
    %164 = vmatpush.msra.mxu0 0.0
    %165 = vmatpush.msra.mxu0 0.0
    %166 = vmatpush.msra.mxu0 0.0
    %167 = vmatpush.msra.mxu0 0.0
    %168 = vmatpush.msra.mxu0 0.0
    %169 = vmatpush.msra.mxu0 %v137
    %170 = vmatpush.msra.mxu0 %v136
    %171 = vmatpush.msra.mxu0 %v135
    %172 = vmatpush.msra.mxu0 %v134
    %173 = vmatmul.f32.gmra.mxu0 %v155
    %v174 = vpop.f32.mrf.mxu0
    %v175 = vadd.f32 0.0, %v174
    %176 = vdwg.mxu0
    %v178 = vrot.slane %v175, 1
    %v181 = vadd.f32 %v129, %v175
    %v182 = vadd.f32 %v132, %v178
    %v183 = vxor.u32 %v181, 2147483648
    %v184 = vxor.u32 %v182, 2147483648
    %v185 = vmul.f32 %v183, 1.442695
    %v186 = vpow.pop %v185
    %v187 = vmul.f32 %v184, 1.442695
    %v188 = vpow.pop %v187
    %v189 = vadd.f32 %v186, 1.0
    %v190 = vadd.f32 %v188, 1.0
    %v191 = vrcp.pop %v189
    %v192 = vmul.f32 %v189, %v191
    %v193 = vsub.f32 1.0, %v192
    %v194 = vmul.f32 %v191, %v193
    %v195 = vadd.f32 %v191, %v194
    %vm196 = vweird.f32 %v189
    %vm197 = vweird.f32 %v191
    %vm198 = vmor %vm196, %vm197
    %v199 = vsel %vm198, %v191, %v195
    %v200 = vand.u32 2147483647, %v189
    %vm201 = vcmp.eq.f32.partialorder %v200, 8.507059e+37
    %v202 = vand.u32 %v189, 2147483648
    %v203 = vor.u32 1.1754944e-38, %v202
    %v204 = vsel %vm201, %v203, %v199
    %v205 = vmul.f32 1.0, %v204
    %v206 = vrcp.pop %v190
    %v207 = vmul.f32 %v190, %v206
    %v208 = vsub.f32 1.0, %v207
    %v209 = vmul.f32 %v206, %v208
    %v210 = vadd.f32 %v206, %v209
    %vm211 = vweird.f32 %v190
    %vm212 = vweird.f32 %v206
    %vm213 = vmor %vm211, %vm212
    %v214 = vsel %vm213, %v206, %v210
    %v215 = vand.u32 2147483647, %v190
    %vm216 = vcmp.eq.f32.partialorder %v215, 8.507059e+37
    %v217 = vand.u32 %v190, 2147483648
    %v218 = vor.u32 1.1754944e-38, %v217
    %v219 = vsel %vm216, %v218, %v214
    %v220 = vmul.f32 1.0, %v219
    %221 = vmatpush.msra.mxu0 0.0
    %222 = vmatpush.msra.mxu0 0.0
    %223 = vmatpush.msra.mxu0 0.0
    %224 = vmatpush.msra.mxu0 0.0
    %225 = vmatpush.msra.mxu0 0.0
    %226 = vmatpush.msra.mxu0 0.0
    %227 = vmatpush.msra.mxu0 0.0
    %228 = vmatpush.msra.mxu0 0.0
    %229 = vmatpush.msra.mxu0 0.0
    %230 = vmatpush.msra.mxu0 0.0
    %231 = vmatpush.msra.mxu0 0.0
    %232 = vmatpush.msra.mxu0 0.0
    %233 = vmatpush.msra.mxu0 %v142
    %234 = vmatpush.msra.mxu0 %v141
    %235 = vmatpush.msra.mxu0 %v140
    %236 = vmatpush.msra.mxu0 %v139
    %237 = vmatmul.f32.gmra.mxu0 %v155
    %v238 = vpop.f32.mrf.mxu0
    %v239 = vadd.f32 0.0, %v238
    %240 = vdwg.mxu0
    %v242 = vrot.slane %v239, 1
    %243 = vrot.lane.b32.xlu0 %v239, 32
    %v244 = vpop.permute.xlu0 %243
    %245 = vrot.lane.b32.xlu0 %v242, 32
    %v246 = vpop.permute.xlu0 %245
    %v249 = vadd.f32 %v129, %v244
    %v250 = vadd.f32 %v132, %v246
    %v251 = vxor.u32 %v249, 2147483648
    %v252 = vxor.u32 %v250, 2147483648
    %v253 = vmul.f32 %v251, 1.442695
    %v254 = vpow.pop %v253
    %v255 = vmul.f32 %v252, 1.442695
    %v256 = vpow.pop %v255
    %v257 = vadd.f32 %v254, 1.0
    %v258 = vadd.f32 %v256, 1.0
    %v259 = vrcp.pop %v257
    %v260 = vmul.f32 %v257, %v259
    %v261 = vsub.f32 1.0, %v260
    %v262 = vmul.f32 %v259, %v261
    %v263 = vadd.f32 %v259, %v262
    %vm264 = vweird.f32 %v257
    %vm265 = vweird.f32 %v259
    %vm266 = vmor %vm264, %vm265
    %v267 = vsel %vm266, %v259, %v263
    %v268 = vand.u32 2147483647, %v257
    %vm269 = vcmp.eq.f32.partialorder %v268, 8.507059e+37
    %v270 = vand.u32 %v257, 2147483648
    %v271 = vor.u32 1.1754944e-38, %v270
    %v272 = vsel %vm269, %v271, %v267
    %v273 = vmul.f32 1.0, %v272
    %v274 = vrcp.pop %v258
    %v275 = vmul.f32 %v258, %v274
    %v276 = vsub.f32 1.0, %v275
    %v277 = vmul.f32 %v274, %v276
    %v278 = vadd.f32 %v274, %v277
    %vm279 = vweird.f32 %v258
    %vm280 = vweird.f32 %v274
    %vm281 = vmor %vm279, %vm280
    %v282 = vsel %vm281, %v274, %v278
    %v283 = vand.u32 2147483647, %v258
    %vm284 = vcmp.eq.f32.partialorder %v283, 8.507059e+37
    %v285 = vand.u32 %v258, 2147483648
    %v286 = vor.u32 1.1754944e-38, %v285
    %v287 = vsel %vm284, %v286, %v282
    %v288 = vmul.f32 1.0, %v287
    %289 = vmatpush.msra.mxu0 0.0
    %290 = vmatpush.msra.mxu0 0.0
    %291 = vmatpush.msra.mxu0 0.0
    %292 = vmatpush.msra.mxu0 0.0
    %293 = vmatpush.msra.mxu0 0.0
    %294 = vmatpush.msra.mxu0 0.0
    %295 = vmatpush.msra.mxu0 0.0
    %296 = vmatpush.msra.mxu0 0.0
    %297 = vmatpush.msra.mxu0 0.0
    %298 = vmatpush.msra.mxu0 0.0
    %299 = vmatpush.msra.mxu0 0.0
    %300 = vmatpush.msra.mxu0 0.0
    %301 = vmatpush.msra.mxu0 %v147
    %302 = vmatpush.msra.mxu0 %v146
    %303 = vmatpush.msra.mxu0 %v145
    %304 = vmatpush.msra.mxu0 %v144
    %305 = vmatmul.f32.gmra.mxu0 %v155
    %v306 = vpop.f32.mrf.mxu0
    %v307 = vadd.f32 0.0, %v306
    %308 = vdwg.mxu0
    %v310 = vrot.slane %v307, 1
    %311 = vrot.lane.b32.xlu0 %v307, 64
    %v312 = vpop.permute.xlu0 %311
    %313 = vrot.lane.b32.xlu0 %v310, 64
    %v314 = vpop.permute.xlu0 %313
    %v317 = vadd.f32 %v129, %v312
    %v318 = vadd.f32 %v132, %v314
    %v319 = vtanh.pop %v317
    %v320 = vtanh.pop %v318
    %321 = vmatpush.msra.mxu0 0.0
    %322 = vmatpush.msra.mxu0 0.0
    %323 = vmatpush.msra.mxu0 0.0
    %324 = vmatpush.msra.mxu0 0.0
    %325 = vmatpush.msra.mxu0 0.0
    %326 = vmatpush.msra.mxu0 0.0
    %327 = vmatpush.msra.mxu0 0.0
    %328 = vmatpush.msra.mxu0 0.0
    %329 = vmatpush.msra.mxu0 0.0
    %330 = vmatpush.msra.mxu0 0.0
    %331 = vmatpush.msra.mxu0 0.0
    %332 = vmatpush.msra.mxu0 0.0
    %333 = vmatpush.msra.mxu0 %v152
    %334 = vmatpush.msra.mxu0 %v151
    %335 = vmatpush.msra.mxu0 %v150
    %336 = vmatpush.msra.mxu0 %v149
    %337 = vmatmul.f32.gmra.mxu0 %v155
    %v338 = vpop.f32.mrf.mxu0
    %v339 = vadd.f32 0.0, %v338
    %340 = vdwg.mxu0
    %v342 = vrot.slane %v339, 1
    %343 = vrot.lane.b32.xlu0 %v339, 96
    %v344 = vpop.permute.xlu0 %343
    %345 = vrot.lane.b32.xlu0 %v342, 96
    %v346 = vpop.permute.xlu0 %345
    %v349 = vadd.f32 %v129, %v344
    %v350 = vadd.f32 %v132, %v346
    %v351 = vxor.u32 %v349, 2147483648
    %v352 = vxor.u32 %v350, 2147483648
    %v353 = vmul.f32 %v351, 1.442695
    %v354 = vpow.pop %v353
    %v355 = vmul.f32 %v352, 1.442695
    %v356 = vpow.pop %v355
    %v357 = vadd.f32 %v354, 1.0
    %v358 = vadd.f32 %v356, 1.0
    %v359 = vrcp.pop %v357
    %v360 = vmul.f32 %v357, %v359
    %v361 = vsub.f32 1.0, %v360
    %v362 = vmul.f32 %v359, %v361
    %v363 = vadd.f32 %v359, %v362
    %vm364 = vweird.f32 %v357
    %vm365 = vweird.f32 %v359
    %vm366 = vmor %vm364, %vm365
    %v367 = vsel %vm366, %v359, %v363
    %v368 = vand.u32 2147483647, %v357
    %vm369 = vcmp.eq.f32.partialorder %v368, 8.507059e+37
    %v370 = vand.u32 %v357, 2147483648
    %v371 = vor.u32 1.1754944e-38, %v370
    %v372 = vsel %vm369, %v371, %v367
    %v373 = vmul.f32 1.0, %v372
    %v374 = vrcp.pop %v358
    %v375 = vmul.f32 %v358, %v374
    %v376 = vsub.f32 1.0, %v375
    %v377 = vmul.f32 %v374, %v376
    %v378 = vadd.f32 %v374, %v377
    %vm379 = vweird.f32 %v358
    %vm380 = vweird.f32 %v374
    %vm381 = vmor %vm379, %vm380
    %v382 = vsel %vm381, %v374, %v378
    %v383 = vand.u32 2147483647, %v358
    %vm384 = vcmp.eq.f32.partialorder %v383, 8.507059e+37
    %v385 = vand.u32 %v358, 2147483648
    %v386 = vor.u32 1.1754944e-38, %v385
    %v387 = vsel %vm384, %v386, %v382
    %v388 = vmul.f32 1.0, %v387
    %v389 = vmul.f32 %v273, 0.0
    %v390 = vmul.f32 %v288, 0.0
    %393 = vrot.lane.b32.xlu0 %v319, 64
    %v394 = vpop.permute.xlu0 %393
    %395 = vrot.lane.b32.xlu0 %v320, 64
    %v396 = vpop.permute.xlu0 %395
    %v399 = vmul.f32 %v205, %v394
    %v400 = vmul.f32 %v220, %v396
    %403 = vrot.lane.b32.xlu0 %v399, 32
    %v404 = vpop.permute.xlu0 %403
    %405 = vrot.lane.b32.xlu0 %v400, 32
    %v406 = vpop.permute.xlu0 %405
    %v409 = vadd.f32 %v389, %v404
    %v410 = vadd.f32 %v390, %v406
    %v411 = vtanh.pop %v409
    %v412 = vtanh.pop %v410
    %415 = vrot.lane.b32.xlu0 %v411, 64
    %v416 = vpop.permute.xlu0 %415
    %417 = vrot.lane.b32.xlu0 %v412, 64
    %v418 = vpop.permute.xlu0 %417
    %v421 = vmul.f32 %v373, %v416
    %v422 = vmul.f32 %v388, %v418
    %v425 = vrot.slane %v422, 7
    %vm426 = vcmask 1041409
    %v427 = vsel %vm426, %v425, %v421
    %428 = vrot.lane.b32.xlu0 %v427, 32
    %v429 = vpop.permute.xlu0 %428
    %v430 = vsel %vm153, %v429, 0
    %432 = vmatpush.msra.mxu0 0.0
    %433 = vmatpush.msra.mxu0 0.0
    %434 = vmatpush.msra.mxu0 0.0
    %435 = vmatpush.msra.mxu0 0.0
    %436 = vmatpush.msra.mxu0 0.0
    %437 = vmatpush.msra.mxu0 0.0
    %438 = vmatpush.msra.mxu0 0.0
    %439 = vmatpush.msra.mxu0 0.0
    %440 = vmatpush.msra.mxu0 0.0
    %441 = vmatpush.msra.mxu0 0.0
    %442 = vmatpush.msra.mxu0 0.0
    %443 = vmatpush.msra.mxu0 0.0
    %444 = vmatpush.msra.mxu0 %v137
    %445 = vmatpush.msra.mxu0 %v136
    %446 = vmatpush.msra.mxu0 %v135
    %447 = vmatpush.msra.mxu0 %v134
    %448 = vmatmul.f32.gmra.mxu0 %v430
    %v449 = vpop.f32.mrf.mxu0
    %v450 = vadd.f32 0.0, %v449
    %451 = vdwg.mxu0
    %v453 = vrot.slane %v450, 7
    %v456 = vadd.f32 %v129, %v453
    %v457 = vadd.f32 %v132, %v450
    %v458 = vxor.u32 %v456, 2147483648
    %v459 = vxor.u32 %v457, 2147483648
    %v460 = vmul.f32 %v458, 1.442695
    %v461 = vpow.pop %v460
    %v462 = vmul.f32 %v459, 1.442695
    %v463 = vpow.pop %v462
    %v464 = vadd.f32 %v461, 1.0
    %v465 = vadd.f32 %v463, 1.0
    %v466 = vrcp.pop %v464
    %v467 = vmul.f32 %v464, %v466
    %v468 = vsub.f32 1.0, %v467
    %v469 = vmul.f32 %v466, %v468
    %v470 = vadd.f32 %v466, %v469
    %vm471 = vweird.f32 %v464
    %vm472 = vweird.f32 %v466
    %vm473 = vmor %vm471, %vm472
    %v474 = vsel %vm473, %v466, %v470
    %v475 = vand.u32 2147483647, %v464
    %vm476 = vcmp.eq.f32.partialorder %v475, 8.507059e+37
    %v477 = vand.u32 %v464, 2147483648
    %v478 = vor.u32 1.1754944e-38, %v477
    %v479 = vsel %vm476, %v478, %v474
    %v480 = vmul.f32 1.0, %v479
    %v481 = vrcp.pop %v465
    %v482 = vmul.f32 %v465, %v481
    %v483 = vsub.f32 1.0, %v482
    %v484 = vmul.f32 %v481, %v483
    %v485 = vadd.f32 %v481, %v484
    %vm486 = vweird.f32 %v465
    %vm487 = vweird.f32 %v481
    %vm488 = vmor %vm486, %vm487
    %v489 = vsel %vm488, %v481, %v485
    %v490 = vand.u32 2147483647, %v465
    %vm491 = vcmp.eq.f32.partialorder %v490, 8.507059e+37
    %v492 = vand.u32 %v465, 2147483648
    %v493 = vor.u32 1.1754944e-38, %v492
    %v494 = vsel %vm491, %v493, %v489
    %v495 = vmul.f32 1.0, %v494
    %496 = vmatpush.msra.mxu0 0.0
    %497 = vmatpush.msra.mxu0 0.0
    %498 = vmatpush.msra.mxu0 0.0
    %499 = vmatpush.msra.mxu0 0.0
    %500 = vmatpush.msra.mxu0 0.0
    %501 = vmatpush.msra.mxu0 0.0
    %502 = vmatpush.msra.mxu0 0.0
    %503 = vmatpush.msra.mxu0 0.0
    %504 = vmatpush.msra.mxu0 0.0
    %505 = vmatpush.msra.mxu0 0.0
    %506 = vmatpush.msra.mxu0 0.0
    %507 = vmatpush.msra.mxu0 0.0
    %508 = vmatpush.msra.mxu0 %v142
    %509 = vmatpush.msra.mxu0 %v141
    %510 = vmatpush.msra.mxu0 %v140
    %511 = vmatpush.msra.mxu0 %v139
    %512 = vmatmul.f32.gmra.mxu0 %v430
    %v513 = vpop.f32.mrf.mxu0
    %v514 = vadd.f32 0.0, %v513
    %515 = vdwg.mxu0
    %v517 = vrot.slane %v514, 7
    %518 = vrot.lane.b32.xlu0 %v517, 32
    %v519 = vpop.permute.xlu0 %518
    %520 = vrot.lane.b32.xlu0 %v514, 32
    %v521 = vpop.permute.xlu0 %520
    %v524 = vadd.f32 %v129, %v519
    %v525 = vadd.f32 %v132, %v521
    %v526 = vxor.u32 %v524, 2147483648
    %v527 = vxor.u32 %v525, 2147483648
    %v528 = vmul.f32 %v526, 1.442695
    %v529 = vpow.pop %v528
    %v530 = vmul.f32 %v527, 1.442695
    %v531 = vpow.pop %v530
    %v532 = vadd.f32 %v529, 1.0
    %v533 = vadd.f32 %v531, 1.0
    %v534 = vrcp.pop %v532
    %v535 = vmul.f32 %v532, %v534
    %v536 = vsub.f32 1.0, %v535
    %v537 = vmul.f32 %v534, %v536
    %v538 = vadd.f32 %v534, %v537
    %vm539 = vweird.f32 %v532
    %vm540 = vweird.f32 %v534
    %vm541 = vmor %vm539, %vm540
    %v542 = vsel %vm541, %v534, %v538
    %v543 = vand.u32 2147483647, %v532
    %vm544 = vcmp.eq.f32.partialorder %v543, 8.507059e+37
    %v545 = vand.u32 %v532, 2147483648
    %v546 = vor.u32 1.1754944e-38, %v545
    %v547 = vsel %vm544, %v546, %v542
    %v548 = vmul.f32 1.0, %v547
    %v549 = vrcp.pop %v533
    %v550 = vmul.f32 %v533, %v549
    %v551 = vsub.f32 1.0, %v550
    %v552 = vmul.f32 %v549, %v551
    %v553 = vadd.f32 %v549, %v552
    %vm554 = vweird.f32 %v533
    %vm555 = vweird.f32 %v549
    %vm556 = vmor %vm554, %vm555
    %v557 = vsel %vm556, %v549, %v553
    %v558 = vand.u32 2147483647, %v533
    %vm559 = vcmp.eq.f32.partialorder %v558, 8.507059e+37
    %v560 = vand.u32 %v533, 2147483648
    %v561 = vor.u32 1.1754944e-38, %v560
    %v562 = vsel %vm559, %v561, %v557
    %v563 = vmul.f32 1.0, %v562
    %564 = vmatpush.msra.mxu0 0.0
    %565 = vmatpush.msra.mxu0 0.0
    %566 = vmatpush.msra.mxu0 0.0
    %567 = vmatpush.msra.mxu0 0.0
    %568 = vmatpush.msra.mxu0 0.0
    %569 = vmatpush.msra.mxu0 0.0
    %570 = vmatpush.msra.mxu0 0.0
    %571 = vmatpush.msra.mxu0 0.0
    %572 = vmatpush.msra.mxu0 0.0
    %573 = vmatpush.msra.mxu0 0.0
    %574 = vmatpush.msra.mxu0 0.0
    %575 = vmatpush.msra.mxu0 0.0
    %576 = vmatpush.msra.mxu0 %v147
    %577 = vmatpush.msra.mxu0 %v146
    %578 = vmatpush.msra.mxu0 %v145
    %579 = vmatpush.msra.mxu0 %v144
    %580 = vmatmul.f32.gmra.mxu0 %v430
    %v581 = vpop.f32.mrf.mxu0
    %v582 = vadd.f32 0.0, %v581
    %583 = vdwg.mxu0
    %v585 = vrot.slane %v582, 7
    %586 = vrot.lane.b32.xlu0 %v585, 64
    %v587 = vpop.permute.xlu0 %586
    %588 = vrot.lane.b32.xlu0 %v582, 64
    %v589 = vpop.permute.xlu0 %588
    %v592 = vadd.f32 %v129, %v587
    %v593 = vadd.f32 %v132, %v589
    %v594 = vtanh.pop %v592
    %v595 = vtanh.pop %v593
    %596 = vmatpush.msra.mxu0 0.0
    %597 = vmatpush.msra.mxu0 0.0
    %598 = vmatpush.msra.mxu0 0.0
    %599 = vmatpush.msra.mxu0 0.0
    %600 = vmatpush.msra.mxu0 0.0
    %601 = vmatpush.msra.mxu0 0.0
    %602 = vmatpush.msra.mxu0 0.0
    %603 = vmatpush.msra.mxu0 0.0
    %604 = vmatpush.msra.mxu0 0.0
    %605 = vmatpush.msra.mxu0 0.0
    %606 = vmatpush.msra.mxu0 0.0
    %607 = vmatpush.msra.mxu0 0.0
    %608 = vmatpush.msra.mxu0 %v152
    %609 = vmatpush.msra.mxu0 %v151
    %610 = vmatpush.msra.mxu0 %v150
    %611 = vmatpush.msra.mxu0 %v149
    %612 = vmatmul.f32.gmra.mxu0 %v430
    %v613 = vpop.f32.mrf.mxu0
    %v614 = vadd.f32 0.0, %v613
    %615 = vdwg.mxu0
    %v617 = vrot.slane %v614, 7
    %618 = vrot.lane.b32.xlu0 %v617, 96
    %v619 = vpop.permute.xlu0 %618
    %620 = vrot.lane.b32.xlu0 %v614, 96
    %v621 = vpop.permute.xlu0 %620
    %v624 = vadd.f32 %v129, %v619
    %v625 = vadd.f32 %v132, %v621
    %v626 = vxor.u32 %v624, 2147483648
    %v627 = vxor.u32 %v625, 2147483648
    %v628 = vmul.f32 %v626, 1.442695
    %v629 = vpow.pop %v628
    %v630 = vmul.f32 %v627, 1.442695
    %v631 = vpow.pop %v630
    %v632 = vadd.f32 %v629, 1.0
    %v633 = vadd.f32 %v631, 1.0
    %v634 = vrcp.pop %v632
    %v635 = vmul.f32 %v632, %v634
    %v636 = vsub.f32 1.0, %v635
    %v637 = vmul.f32 %v634, %v636
    %v638 = vadd.f32 %v634, %v637
    %vm639 = vweird.f32 %v632
    %vm640 = vweird.f32 %v634
    %vm641 = vmor %vm639, %vm640
    %v642 = vsel %vm641, %v634, %v638
    %v643 = vand.u32 2147483647, %v632
    %vm644 = vcmp.eq.f32.partialorder %v643, 8.507059e+37
    %v645 = vand.u32 %v632, 2147483648
    %v646 = vor.u32 1.1754944e-38, %v645
    %v647 = vsel %vm644, %v646, %v642
    %v648 = vmul.f32 1.0, %v647
    %v649 = vrcp.pop %v633
    %v650 = vmul.f32 %v633, %v649
    %v651 = vsub.f32 1.0, %v650
    %v652 = vmul.f32 %v649, %v651
    %v653 = vadd.f32 %v649, %v652
    %vm654 = vweird.f32 %v633
    %vm655 = vweird.f32 %v649
    %vm656 = vmor %vm654, %vm655
    %v657 = vsel %vm656, %v649, %v653
    %v658 = vand.u32 2147483647, %v633
    %vm659 = vcmp.eq.f32.partialorder %v658, 8.507059e+37
    %v660 = vand.u32 %v633, 2147483648
    %v661 = vor.u32 1.1754944e-38, %v660
    %v662 = vsel %vm659, %v661, %v657
    %v663 = vmul.f32 1.0, %v662
    %v666 = vrot.slane %v409, 7
    %v667 = vrot.slane %v410, 7
    %v670 = vmul.f32 %v548, %v666
    %v671 = vmul.f32 %v563, %v667
    %674 = vrot.lane.b32.xlu0 %v594, 64
    %v675 = vpop.permute.xlu0 %674
    %676 = vrot.lane.b32.xlu0 %v595, 64
    %v677 = vpop.permute.xlu0 %676
    %v680 = vmul.f32 %v480, %v675
    %v681 = vmul.f32 %v495, %v677
    %684 = vrot.lane.b32.xlu0 %v680, 32
    %v685 = vpop.permute.xlu0 %684
    %686 = vrot.lane.b32.xlu0 %v681, 32
    %v687 = vpop.permute.xlu0 %686
    %v690 = vadd.f32 %v670, %v685
    %v691 = vadd.f32 %v671, %v687
    %v692 = vtanh.pop %v690
    %v693 = vtanh.pop %v691
    %696 = vrot.lane.b32.xlu0 %v692, 64
    %v697 = vpop.permute.xlu0 %696
    %698 = vrot.lane.b32.xlu0 %v693, 64
    %v699 = vpop.permute.xlu0 %698
    %v702 = vmul.f32 %v648, %v697
    %v703 = vmul.f32 %v663, %v699
    %v706 = vrot.slane %v702, 1
    %v707 = vsel %vm426, %v703, %v706
    %708 = vrot.lane.b32.xlu0 %v707, 32
    %v709 = vpop.permute.xlu0 %708
    %v710 = vsel %vm153, %v709, 0
    %712 = vmatpush.msra.mxu0 0.0
    %713 = vmatpush.msra.mxu0 0.0
    %714 = vmatpush.msra.mxu0 0.0
    %715 = vmatpush.msra.mxu0 0.0
    %716 = vmatpush.msra.mxu0 0.0
    %717 = vmatpush.msra.mxu0 0.0
    %718 = vmatpush.msra.mxu0 0.0
    %719 = vmatpush.msra.mxu0 0.0
    %720 = vmatpush.msra.mxu0 0.0
    %721 = vmatpush.msra.mxu0 0.0
    %722 = vmatpush.msra.mxu0 0.0
    %723 = vmatpush.msra.mxu0 0.0
    %724 = vmatpush.msra.mxu0 %v137
    %725 = vmatpush.msra.mxu0 %v136
    %726 = vmatpush.msra.mxu0 %v135
    %727 = vmatpush.msra.mxu0 %v134
    %728 = vmatmul.f32.gmra.mxu0 %v710
    %v729 = vpop.f32.mrf.mxu0
    %v730 = vadd.f32 0.0, %v729
    %731 = vdwg.mxu0
    %v733 = vrot.slane %v730, 6
    %v734 = vrot.slane %v730, 7
    %v737 = vadd.f32 %v129, %v733
    %v738 = vadd.f32 %v132, %v734
    %v739 = vxor.u32 %v737, 2147483648
    %v740 = vxor.u32 %v738, 2147483648
    %v741 = vmul.f32 %v739, 1.442695
    %v742 = vpow.pop %v741
    %v743 = vmul.f32 %v740, 1.442695
    %v744 = vpow.pop %v743
    %v745 = vadd.f32 %v742, 1.0
    %v746 = vadd.f32 %v744, 1.0
    %v747 = vrcp.pop %v745
    %v748 = vmul.f32 %v745, %v747
    %v749 = vsub.f32 1.0, %v748
    %v750 = vmul.f32 %v747, %v749
    %v751 = vadd.f32 %v747, %v750
    %vm752 = vweird.f32 %v745
    %vm753 = vweird.f32 %v747
    %vm754 = vmor %vm752, %vm753
    %v755 = vsel %vm754, %v747, %v751
    %v756 = vand.u32 2147483647, %v745
    %vm757 = vcmp.eq.f32.partialorder %v756, 8.507059e+37
    %v758 = vand.u32 %v745, 2147483648
    %v759 = vor.u32 1.1754944e-38, %v758
    %v760 = vsel %vm757, %v759, %v755
    %v761 = vmul.f32 1.0, %v760
    %v762 = vrcp.pop %v746
    %v763 = vmul.f32 %v746, %v762
    %v764 = vsub.f32 1.0, %v763
    %v765 = vmul.f32 %v762, %v764
    %v766 = vadd.f32 %v762, %v765
    %vm767 = vweird.f32 %v746
    %vm768 = vweird.f32 %v762
    %vm769 = vmor %vm767, %vm768
    %v770 = vsel %vm769, %v762, %v766
    %v771 = vand.u32 2147483647, %v746
    %vm772 = vcmp.eq.f32.partialorder %v771, 8.507059e+37
    %v773 = vand.u32 %v746, 2147483648
    %v774 = vor.u32 1.1754944e-38, %v773
    %v775 = vsel %vm772, %v774, %v770
    %v776 = vmul.f32 1.0, %v775
    %777 = vmatpush.msra.mxu0 0.0
    %778 = vmatpush.msra.mxu0 0.0
    %779 = vmatpush.msra.mxu0 0.0
    %780 = vmatpush.msra.mxu0 0.0
    %781 = vmatpush.msra.mxu0 0.0
    %782 = vmatpush.msra.mxu0 0.0
    %783 = vmatpush.msra.mxu0 0.0
    %784 = vmatpush.msra.mxu0 0.0
    %785 = vmatpush.msra.mxu0 0.0
    %786 = vmatpush.msra.mxu0 0.0
    %787 = vmatpush.msra.mxu0 0.0
    %788 = vmatpush.msra.mxu0 0.0
    %789 = vmatpush.msra.mxu0 %v142
    %790 = vmatpush.msra.mxu0 %v141
    %791 = vmatpush.msra.mxu0 %v140
    %792 = vmatpush.msra.mxu0 %v139
    %793 = vmatmul.f32.gmra.mxu0 %v710
    %v794 = vpop.f32.mrf.mxu0
    %v795 = vadd.f32 0.0, %v794
    %796 = vdwg.mxu0
    %v798 = vrot.slane %v795, 6
    %v799 = vrot.slane %v795, 7
    %800 = vrot.lane.b32.xlu0 %v798, 32
    %v801 = vpop.permute.xlu0 %800
    %802 = vrot.lane.b32.xlu0 %v799, 32
    %v803 = vpop.permute.xlu0 %802
    %v806 = vadd.f32 %v129, %v801
    %v807 = vadd.f32 %v132, %v803
    %v808 = vxor.u32 %v806, 2147483648
    %v809 = vxor.u32 %v807, 2147483648
    %v810 = vmul.f32 %v808, 1.442695
    %v811 = vpow.pop %v810
    %v812 = vmul.f32 %v809, 1.442695
    %v813 = vpow.pop %v812
    %v814 = vadd.f32 %v811, 1.0
    %v815 = vadd.f32 %v813, 1.0
    %v816 = vrcp.pop %v814
    %v817 = vmul.f32 %v814, %v816
    %v818 = vsub.f32 1.0, %v817
    %v819 = vmul.f32 %v816, %v818
    %v820 = vadd.f32 %v816, %v819
    %vm821 = vweird.f32 %v814
    %vm822 = vweird.f32 %v816
    %vm823 = vmor %vm821, %vm822
    %v824 = vsel %vm823, %v816, %v820
    %v825 = vand.u32 2147483647, %v814
    %vm826 = vcmp.eq.f32.partialorder %v825, 8.507059e+37
    %v827 = vand.u32 %v814, 2147483648
    %v828 = vor.u32 1.1754944e-38, %v827
    %v829 = vsel %vm826, %v828, %v824
    %v830 = vmul.f32 1.0, %v829
    %v831 = vrcp.pop %v815
    %v832 = vmul.f32 %v815, %v831
    %v833 = vsub.f32 1.0, %v832
    %v834 = vmul.f32 %v831, %v833
    %v835 = vadd.f32 %v831, %v834
    %vm836 = vweird.f32 %v815
    %vm837 = vweird.f32 %v831
    %vm838 = vmor %vm836, %vm837
    %v839 = vsel %vm838, %v831, %v835
    %v840 = vand.u32 2147483647, %v815
    %vm841 = vcmp.eq.f32.partialorder %v840, 8.507059e+37
    %v842 = vand.u32 %v815, 2147483648
    %v843 = vor.u32 1.1754944e-38, %v842
    %v844 = vsel %vm841, %v843, %v839
    %v845 = vmul.f32 1.0, %v844
    %846 = vmatpush.msra.mxu0 0.0
    %847 = vmatpush.msra.mxu0 0.0
    %848 = vmatpush.msra.mxu0 0.0
    %849 = vmatpush.msra.mxu0 0.0
    %850 = vmatpush.msra.mxu0 0.0
    %851 = vmatpush.msra.mxu0 0.0
    %852 = vmatpush.msra.mxu0 0.0
    %853 = vmatpush.msra.mxu0 0.0
    %854 = vmatpush.msra.mxu0 0.0
    %855 = vmatpush.msra.mxu0 0.0
    %856 = vmatpush.msra.mxu0 0.0
    %857 = vmatpush.msra.mxu0 0.0
    %858 = vmatpush.msra.mxu0 %v147
    %859 = vmatpush.msra.mxu0 %v146
    %860 = vmatpush.msra.mxu0 %v145
    %861 = vmatpush.msra.mxu0 %v144
    %862 = vmatmul.f32.gmra.mxu0 %v710
    %v863 = vpop.f32.mrf.mxu0
    %v864 = vadd.f32 0.0, %v863
    %865 = vdwg.mxu0
    %v867 = vrot.slane %v864, 6
    %v868 = vrot.slane %v864, 7
    %869 = vrot.lane.b32.xlu0 %v867, 64
    %v870 = vpop.permute.xlu0 %869
    %871 = vrot.lane.b32.xlu0 %v868, 64
    %v872 = vpop.permute.xlu0 %871
    %v875 = vadd.f32 %v129, %v870
    %v876 = vadd.f32 %v132, %v872
    %v877 = vtanh.pop %v875
    %v878 = vtanh.pop %v876
    %879 = vmatpush.msra.mxu0 0.0
    %880 = vmatpush.msra.mxu0 0.0
    %881 = vmatpush.msra.mxu0 0.0
    %882 = vmatpush.msra.mxu0 0.0
    %883 = vmatpush.msra.mxu0 0.0
    %884 = vmatpush.msra.mxu0 0.0
    %885 = vmatpush.msra.mxu0 0.0
    %886 = vmatpush.msra.mxu0 0.0
    %887 = vmatpush.msra.mxu0 0.0
    %888 = vmatpush.msra.mxu0 0.0
    %889 = vmatpush.msra.mxu0 0.0
    %890 = vmatpush.msra.mxu0 0.0
    %891 = vmatpush.msra.mxu0 %v152
    %892 = vmatpush.msra.mxu0 %v151
    %893 = vmatpush.msra.mxu0 %v150
    %894 = vmatpush.msra.mxu0 %v149
    %895 = vmatmul.f32.gmra.mxu0 %v710
    %v896 = vpop.f32.mrf.mxu0
    %v897 = vadd.f32 0.0, %v896
    %898 = vdwg.mxu0
    %v900 = vrot.slane %v897, 6
    %v901 = vrot.slane %v897, 7
    %902 = vrot.lane.b32.xlu0 %v900, 96
    %v903 = vpop.permute.xlu0 %902
    %904 = vrot.lane.b32.xlu0 %v901, 96
    %v905 = vpop.permute.xlu0 %904
    %v908 = vadd.f32 %v129, %v903
    %v909 = vadd.f32 %v132, %v905
    %v910 = vxor.u32 %v908, 2147483648
    %v911 = vxor.u32 %v909, 2147483648
    %v912 = vmul.f32 %v910, 1.442695
    %v913 = vpow.pop %v912
    %v914 = vmul.f32 %v911, 1.442695
    %v915 = vpow.pop %v914
    %v916 = vadd.f32 %v913, 1.0
    %v917 = vadd.f32 %v915, 1.0
    %v918 = vrcp.pop %v916
    %v919 = vmul.f32 %v916, %v918
    %v920 = vsub.f32 1.0, %v919
    %v921 = vmul.f32 %v918, %v920
    %v922 = vadd.f32 %v918, %v921
    %vm923 = vweird.f32 %v916
    %vm924 = vweird.f32 %v918
    %vm925 = vmor %vm923, %vm924
    %v926 = vsel %vm925, %v918, %v922
    %v927 = vand.u32 2147483647, %v916
    %vm928 = vcmp.eq.f32.partialorder %v927, 8.507059e+37
    %v929 = vand.u32 %v916, 2147483648
    %v930 = vor.u32 1.1754944e-38, %v929
    %v931 = vsel %vm928, %v930, %v926
    %v932 = vmul.f32 1.0, %v931
    %v933 = vrcp.pop %v917
    %v934 = vmul.f32 %v917, %v933
    %v935 = vsub.f32 1.0, %v934
    %v936 = vmul.f32 %v933, %v935
    %v937 = vadd.f32 %v933, %v936
    %vm938 = vweird.f32 %v917
    %vm939 = vweird.f32 %v933
    %vm940 = vmor %vm938, %vm939
    %v941 = vsel %vm940, %v933, %v937
    %v942 = vand.u32 2147483647, %v917
    %vm943 = vcmp.eq.f32.partialorder %v942, 8.507059e+37
    %v944 = vand.u32 %v917, 2147483648
    %v945 = vor.u32 1.1754944e-38, %v944
    %v946 = vsel %vm943, %v945, %v941
    %v947 = vmul.f32 1.0, %v946
    %v950 = vrot.slane %v690, 7
    %v951 = vrot.slane %v691, 7
    %v954 = vmul.f32 %v830, %v950
    %v955 = vmul.f32 %v845, %v951
    %958 = vrot.lane.b32.xlu0 %v877, 64
    %v959 = vpop.permute.xlu0 %958
    %960 = vrot.lane.b32.xlu0 %v878, 64
    %v961 = vpop.permute.xlu0 %960
    %v964 = vmul.f32 %v761, %v959
    %v965 = vmul.f32 %v776, %v961
    %968 = vrot.lane.b32.xlu0 %v964, 32
    %v969 = vpop.permute.xlu0 %968
    %970 = vrot.lane.b32.xlu0 %v965, 32
    %v971 = vpop.permute.xlu0 %970
    %v974 = vadd.f32 %v954, %v969
    %v975 = vadd.f32 %v955, %v971
    %v976 = vtanh.pop %v974
    %v977 = vtanh.pop %v975
    %980 = vrot.lane.b32.xlu0 %v976, 64
    %v981 = vpop.permute.xlu0 %980
    %982 = vrot.lane.b32.xlu0 %v977, 64
    %v983 = vpop.permute.xlu0 %982
    %v986 = vmul.f32 %v932, %v981
    %v987 = vmul.f32 %v947, %v983
    %v990 = vrot.slane %v986, 2
    %v991 = vrot.slane %v987, 1
    %v992 = vsel %vm426, %v991, %v990
    %993 = vrot.lane.b32.xlu0 %v992, 32
    %v994 = vpop.permute.xlu0 %993
    %v995 = vsel %vm153, %v994, 0
    %997 = vmatpush.msra.mxu0 0.0
    %998 = vmatpush.msra.mxu0 0.0
    %999 = vmatpush.msra.mxu0 0.0
    %1000 = vmatpush.msra.mxu0 0.0
    %1001 = vmatpush.msra.mxu0 0.0
    %1002 = vmatpush.msra.mxu0 0.0
    %1003 = vmatpush.msra.mxu0 0.0
    %1004 = vmatpush.msra.mxu0 0.0
    %1005 = vmatpush.msra.mxu0 0.0
    %1006 = vmatpush.msra.mxu0 0.0
    %1007 = vmatpush.msra.mxu0 0.0
    %1008 = vmatpush.msra.mxu0 0.0
    %1009 = vmatpush.msra.mxu0 %v137
    %1010 = vmatpush.msra.mxu0 %v136
    %1011 = vmatpush.msra.mxu0 %v135
    %1012 = vmatpush.msra.mxu0 %v134
    %1013 = vmatmul.f32.gmra.mxu0 %v995
    %v1014 = vpop.f32.mrf.mxu0
    %v1015 = vadd.f32 0.0, %v1014
    %1016 = vdwg.mxu0
    %v1018 = vrot.slane %v1015, 5
    %v1019 = vrot.slane %v1015, 6
    %v1022 = vadd.f32 %v129, %v1018
    %v1023 = vadd.f32 %v132, %v1019
    %v1024 = vxor.u32 %v1022, 2147483648
    %v1025 = vxor.u32 %v1023, 2147483648
    %v1026 = vmul.f32 %v1024, 1.442695
    %v1027 = vpow.pop %v1026
    %v1028 = vmul.f32 %v1025, 1.442695
    %v1029 = vpow.pop %v1028
    %v1030 = vadd.f32 %v1027, 1.0
    %v1031 = vadd.f32 %v1029, 1.0
    %v1032 = vrcp.pop %v1030
    %v1033 = vmul.f32 %v1030, %v1032
    %v1034 = vsub.f32 1.0, %v1033
    %v1035 = vmul.f32 %v1032, %v1034
    %v1036 = vadd.f32 %v1032, %v1035
    %vm1037 = vweird.f32 %v1030
    %vm1038 = vweird.f32 %v1032
    %vm1039 = vmor %vm1037, %vm1038
    %v1040 = vsel %vm1039, %v1032, %v1036
    %v1041 = vand.u32 2147483647, %v1030
    %vm1042 = vcmp.eq.f32.partialorder %v1041, 8.507059e+37
    %v1043 = vand.u32 %v1030, 2147483648
    %v1044 = vor.u32 1.1754944e-38, %v1043
    %v1045 = vsel %vm1042, %v1044, %v1040
    %v1046 = vmul.f32 1.0, %v1045
    %v1047 = vrcp.pop %v1031
    %v1048 = vmul.f32 %v1031, %v1047
    %v1049 = vsub.f32 1.0, %v1048
    %v1050 = vmul.f32 %v1047, %v1049
    %v1051 = vadd.f32 %v1047, %v1050
    %vm1052 = vweird.f32 %v1031
    %vm1053 = vweird.f32 %v1047
    %vm1054 = vmor %vm1052, %vm1053
    %v1055 = vsel %vm1054, %v1047, %v1051
    %v1056 = vand.u32 2147483647, %v1031
    %vm1057 = vcmp.eq.f32.partialorder %v1056, 8.507059e+37
    %v1058 = vand.u32 %v1031, 2147483648
    %v1059 = vor.u32 1.1754944e-38, %v1058
    %v1060 = vsel %vm1057, %v1059, %v1055
    %v1061 = vmul.f32 1.0, %v1060
    %1062 = vmatpush.msra.mxu0 0.0
    %1063 = vmatpush.msra.mxu0 0.0
    %1064 = vmatpush.msra.mxu0 0.0
    %1065 = vmatpush.msra.mxu0 0.0
    %1066 = vmatpush.msra.mxu0 0.0
    %1067 = vmatpush.msra.mxu0 0.0
    %1068 = vmatpush.msra.mxu0 0.0
    %1069 = vmatpush.msra.mxu0 0.0
    %1070 = vmatpush.msra.mxu0 0.0
    %1071 = vmatpush.msra.mxu0 0.0
    %1072 = vmatpush.msra.mxu0 0.0
    %1073 = vmatpush.msra.mxu0 0.0
    %1074 = vmatpush.msra.mxu0 %v142
    %1075 = vmatpush.msra.mxu0 %v141
    %1076 = vmatpush.msra.mxu0 %v140
    %1077 = vmatpush.msra.mxu0 %v139
    %1078 = vmatmul.f32.gmra.mxu0 %v995
    %v1079 = vpop.f32.mrf.mxu0
    %v1080 = vadd.f32 0.0, %v1079
    %1081 = vdwg.mxu0
    %v1083 = vrot.slane %v1080, 5
    %v1084 = vrot.slane %v1080, 6
    %1085 = vrot.lane.b32.xlu0 %v1083, 32
    %v1086 = vpop.permute.xlu0 %1085
    %1087 = vrot.lane.b32.xlu0 %v1084, 32
    %v1088 = vpop.permute.xlu0 %1087
    %v1091 = vadd.f32 %v129, %v1086
    %v1092 = vadd.f32 %v132, %v1088
    %v1093 = vxor.u32 %v1091, 2147483648
    %v1094 = vxor.u32 %v1092, 2147483648
    %v1095 = vmul.f32 %v1093, 1.442695
    %v1096 = vpow.pop %v1095
    %v1097 = vmul.f32 %v1094, 1.442695
    %v1098 = vpow.pop %v1097
    %v1099 = vadd.f32 %v1096, 1.0
    %v1100 = vadd.f32 %v1098, 1.0
    %v1101 = vrcp.pop %v1099
    %v1102 = vmul.f32 %v1099, %v1101
    %v1103 = vsub.f32 1.0, %v1102
    %v1104 = vmul.f32 %v1101, %v1103
    %v1105 = vadd.f32 %v1101, %v1104
    %vm1106 = vweird.f32 %v1099
    %vm1107 = vweird.f32 %v1101
    %vm1108 = vmor %vm1106, %vm1107
    %v1109 = vsel %vm1108, %v1101, %v1105
    %v1110 = vand.u32 2147483647, %v1099
    %vm1111 = vcmp.eq.f32.partialorder %v1110, 8.507059e+37
    %v1112 = vand.u32 %v1099, 2147483648
    %v1113 = vor.u32 1.1754944e-38, %v1112
    %v1114 = vsel %vm1111, %v1113, %v1109
    %v1115 = vmul.f32 1.0, %v1114
    %v1116 = vrcp.pop %v1100
    %v1117 = vmul.f32 %v1100, %v1116
    %v1118 = vsub.f32 1.0, %v1117
    %v1119 = vmul.f32 %v1116, %v1118
    %v1120 = vadd.f32 %v1116, %v1119
    %vm1121 = vweird.f32 %v1100
    %vm1122 = vweird.f32 %v1116
    %vm1123 = vmor %vm1121, %vm1122
    %v1124 = vsel %vm1123, %v1116, %v1120
    %v1125 = vand.u32 2147483647, %v1100
    %vm1126 = vcmp.eq.f32.partialorder %v1125, 8.507059e+37
    %v1127 = vand.u32 %v1100, 2147483648
    %v1128 = vor.u32 1.1754944e-38, %v1127
    %v1129 = vsel %vm1126, %v1128, %v1124
    %v1130 = vmul.f32 1.0, %v1129
    %1131 = vmatpush.msra.mxu0 0.0
    %1132 = vmatpush.msra.mxu0 0.0
    %1133 = vmatpush.msra.mxu0 0.0
    %1134 = vmatpush.msra.mxu0 0.0
    %1135 = vmatpush.msra.mxu0 0.0
    %1136 = vmatpush.msra.mxu0 0.0
    %1137 = vmatpush.msra.mxu0 0.0
    %1138 = vmatpush.msra.mxu0 0.0
    %1139 = vmatpush.msra.mxu0 0.0
    %1140 = vmatpush.msra.mxu0 0.0
    %1141 = vmatpush.msra.mxu0 0.0
    %1142 = vmatpush.msra.mxu0 0.0
    %1143 = vmatpush.msra.mxu0 %v147
    %1144 = vmatpush.msra.mxu0 %v146
    %1145 = vmatpush.msra.mxu0 %v145
    %1146 = vmatpush.msra.mxu0 %v144
    %1147 = vmatmul.f32.gmra.mxu0 %v995
    %v1148 = vpop.f32.mrf.mxu0
    %v1149 = vadd.f32 0.0, %v1148
    %1150 = vdwg.mxu0
    %v1152 = vrot.slane %v1149, 5
    %v1153 = vrot.slane %v1149, 6
    %1154 = vrot.lane.b32.xlu0 %v1152, 64
    %v1155 = vpop.permute.xlu0 %1154
    %1156 = vrot.lane.b32.xlu0 %v1153, 64
    %v1157 = vpop.permute.xlu0 %1156
    %v1160 = vadd.f32 %v129, %v1155
    %v1161 = vadd.f32 %v132, %v1157
    %v1162 = vtanh.pop %v1160
    %v1163 = vtanh.pop %v1161
    %1164 = vmatpush.msra.mxu0 0.0
    %1165 = vmatpush.msra.mxu0 0.0
    %1166 = vmatpush.msra.mxu0 0.0
    %1167 = vmatpush.msra.mxu0 0.0
    %1168 = vmatpush.msra.mxu0 0.0
    %1169 = vmatpush.msra.mxu0 0.0
    %1170 = vmatpush.msra.mxu0 0.0
    %1171 = vmatpush.msra.mxu0 0.0
    %1172 = vmatpush.msra.mxu0 0.0
    %1173 = vmatpush.msra.mxu0 0.0
    %1174 = vmatpush.msra.mxu0 0.0
    %1175 = vmatpush.msra.mxu0 0.0
    %1176 = vmatpush.msra.mxu0 %v152
    %1177 = vmatpush.msra.mxu0 %v151
    %1178 = vmatpush.msra.mxu0 %v150
    %1179 = vmatpush.msra.mxu0 %v149
    %1180 = vmatmul.f32.gmra.mxu0 %v995
    %v1181 = vpop.f32.mrf.mxu0
    %v1182 = vadd.f32 0.0, %v1181
    %1183 = vdwg.mxu0
    %v1185 = vrot.slane %v1182, 5
    %v1186 = vrot.slane %v1182, 6
    %1187 = vrot.lane.b32.xlu0 %v1185, 96
    %v1188 = vpop.permute.xlu0 %1187
    %1189 = vrot.lane.b32.xlu0 %v1186, 96
    %v1190 = vpop.permute.xlu0 %1189
    %v1193 = vadd.f32 %v129, %v1188
    %v1194 = vadd.f32 %v132, %v1190
    %v1195 = vxor.u32 %v1193, 2147483648
    %v1196 = vxor.u32 %v1194, 2147483648
    %v1197 = vmul.f32 %v1195, 1.442695
    %v1198 = vpow.pop %v1197
    %v1199 = vmul.f32 %v1196, 1.442695
    %v1200 = vpow.pop %v1199
    %v1201 = vadd.f32 %v1198, 1.0
    %v1202 = vadd.f32 %v1200, 1.0
    %v1203 = vrcp.pop %v1201
    %v1204 = vmul.f32 %v1201, %v1203
    %v1205 = vsub.f32 1.0, %v1204
    %v1206 = vmul.f32 %v1203, %v1205
    %v1207 = vadd.f32 %v1203, %v1206
    %vm1208 = vweird.f32 %v1201
    %vm1209 = vweird.f32 %v1203
    %vm1210 = vmor %vm1208, %vm1209
    %v1211 = vsel %vm1210, %v1203, %v1207
    %v1212 = vand.u32 2147483647, %v1201
    %vm1213 = vcmp.eq.f32.partialorder %v1212, 8.507059e+37
    %v1214 = vand.u32 %v1201, 2147483648
    %v1215 = vor.u32 1.1754944e-38, %v1214
    %v1216 = vsel %vm1213, %v1215, %v1211
    %v1217 = vmul.f32 1.0, %v1216
    %v1218 = vrcp.pop %v1202
    %v1219 = vmul.f32 %v1202, %v1218
    %v1220 = vsub.f32 1.0, %v1219
    %v1221 = vmul.f32 %v1218, %v1220
    %v1222 = vadd.f32 %v1218, %v1221
    %vm1223 = vweird.f32 %v1202
    %vm1224 = vweird.f32 %v1218
    %vm1225 = vmor %vm1223, %vm1224
    %v1226 = vsel %vm1225, %v1218, %v1222
    %v1227 = vand.u32 2147483647, %v1202
    %vm1228 = vcmp.eq.f32.partialorder %v1227, 8.507059e+37
    %v1229 = vand.u32 %v1202, 2147483648
    %v1230 = vor.u32 1.1754944e-38, %v1229
    %v1231 = vsel %vm1228, %v1230, %v1226
    %v1232 = vmul.f32 1.0, %v1231
    %v1235 = vrot.slane %v974, 7
    %v1236 = vrot.slane %v975, 7
    %v1239 = vmul.f32 %v1115, %v1235
    %v1240 = vmul.f32 %v1130, %v1236
    %1243 = vrot.lane.b32.xlu0 %v1162, 64
    %v1244 = vpop.permute.xlu0 %1243
    %1245 = vrot.lane.b32.xlu0 %v1163, 64
    %v1246 = vpop.permute.xlu0 %1245
    %v1249 = vmul.f32 %v1046, %v1244
    %v1250 = vmul.f32 %v1061, %v1246
    %1253 = vrot.lane.b32.xlu0 %v1249, 32
    %v1254 = vpop.permute.xlu0 %1253
    %1255 = vrot.lane.b32.xlu0 %v1250, 32
    %v1256 = vpop.permute.xlu0 %1255
    %v1259 = vadd.f32 %v1239, %v1254
    %v1260 = vadd.f32 %v1240, %v1256
    %v1261 = vtanh.pop %v1259
    %v1262 = vtanh.pop %v1260
    %1265 = vrot.lane.b32.xlu0 %v1261, 64
    %v1266 = vpop.permute.xlu0 %1265
    %1267 = vrot.lane.b32.xlu0 %v1262, 64
    %v1268 = vpop.permute.xlu0 %1267
    %v1271 = vmul.f32 %v1217, %v1266
    %v1272 = vmul.f32 %v1232, %v1268
    %v1275 = vrot.slane %v1271, 3
    %v1276 = vrot.slane %v1272, 2
    %v1277 = vsel %vm426, %v1276, %v1275
    %1278 = vrot.lane.b32.xlu0 %v1277, 32
    %v1279 = vpop.permute.xlu0 %1278
    %v1280 = vsel %vm153, %v1279, 0
    %1282 = vmatpush.msra.mxu0 0.0
    %1283 = vmatpush.msra.mxu0 0.0
    %1284 = vmatpush.msra.mxu0 0.0
    %1285 = vmatpush.msra.mxu0 0.0
    %1286 = vmatpush.msra.mxu0 0.0
    %1287 = vmatpush.msra.mxu0 0.0
    %1288 = vmatpush.msra.mxu0 0.0
    %1289 = vmatpush.msra.mxu0 0.0
    %1290 = vmatpush.msra.mxu0 0.0
    %1291 = vmatpush.msra.mxu0 0.0
    %1292 = vmatpush.msra.mxu0 0.0
    %1293 = vmatpush.msra.mxu0 0.0
    %1294 = vmatpush.msra.mxu0 %v137
    %1295 = vmatpush.msra.mxu0 %v136
    %1296 = vmatpush.msra.mxu0 %v135
    %1297 = vmatpush.msra.mxu0 %v134
    %1298 = vmatmul.f32.gmra.mxu0 %v1280
    %v1299 = vpop.f32.mrf.mxu0
    %v1300 = vadd.f32 0.0, %v1299
    %1301 = vdwg.mxu0
    %v1303 = vrot.slane %v1300, 4
    %v1304 = vrot.slane %v1300, 5
    %v1307 = vadd.f32 %v129, %v1303
    %v1308 = vadd.f32 %v132, %v1304
    %v1309 = vxor.u32 %v1307, 2147483648
    %v1310 = vxor.u32 %v1308, 2147483648
    %v1311 = vmul.f32 %v1309, 1.442695
    %v1312 = vpow.pop %v1311
    %v1313 = vmul.f32 %v1310, 1.442695
    %v1314 = vpow.pop %v1313
    %v1315 = vadd.f32 %v1312, 1.0
    %v1316 = vadd.f32 %v1314, 1.0
    %v1317 = vrcp.pop %v1315
    %v1318 = vmul.f32 %v1315, %v1317
    %v1319 = vsub.f32 1.0, %v1318
    %v1320 = vmul.f32 %v1317, %v1319
    %v1321 = vadd.f32 %v1317, %v1320
    %vm1322 = vweird.f32 %v1315
    %vm1323 = vweird.f32 %v1317
    %vm1324 = vmor %vm1322, %vm1323
    %v1325 = vsel %vm1324, %v1317, %v1321
    %v1326 = vand.u32 2147483647, %v1315
    %vm1327 = vcmp.eq.f32.partialorder %v1326, 8.507059e+37
    %v1328 = vand.u32 %v1315, 2147483648
    %v1329 = vor.u32 1.1754944e-38, %v1328
    %v1330 = vsel %vm1327, %v1329, %v1325
    %v1331 = vmul.f32 1.0, %v1330
    %v1332 = vrcp.pop %v1316
    %v1333 = vmul.f32 %v1316, %v1332
    %v1334 = vsub.f32 1.0, %v1333
    %v1335 = vmul.f32 %v1332, %v1334
    %v1336 = vadd.f32 %v1332, %v1335
    %vm1337 = vweird.f32 %v1316
    %vm1338 = vweird.f32 %v1332
    %vm1339 = vmor %vm1337, %vm1338
    %v1340 = vsel %vm1339, %v1332, %v1336
    %v1341 = vand.u32 2147483647, %v1316
    %vm1342 = vcmp.eq.f32.partialorder %v1341, 8.507059e+37
    %v1343 = vand.u32 %v1316, 2147483648
    %v1344 = vor.u32 1.1754944e-38, %v1343
    %v1345 = vsel %vm1342, %v1344, %v1340
    %v1346 = vmul.f32 1.0, %v1345
    %1347 = vmatpush.msra.mxu0 0.0
    %1348 = vmatpush.msra.mxu0 0.0
    %1349 = vmatpush.msra.mxu0 0.0
    %1350 = vmatpush.msra.mxu0 0.0
    %1351 = vmatpush.msra.mxu0 0.0
    %1352 = vmatpush.msra.mxu0 0.0
    %1353 = vmatpush.msra.mxu0 0.0
    %1354 = vmatpush.msra.mxu0 0.0
    %1355 = vmatpush.msra.mxu0 0.0
    %1356 = vmatpush.msra.mxu0 0.0
    %1357 = vmatpush.msra.mxu0 0.0
    %1358 = vmatpush.msra.mxu0 0.0
    %1359 = vmatpush.msra.mxu0 %v142
    %1360 = vmatpush.msra.mxu0 %v141
    %1361 = vmatpush.msra.mxu0 %v140
    %1362 = vmatpush.msra.mxu0 %v139
    %1363 = vmatmul.f32.gmra.mxu0 %v1280
    %v1364 = vpop.f32.mrf.mxu0
    %v1365 = vadd.f32 0.0, %v1364
    %1366 = vdwg.mxu0
    %v1368 = vrot.slane %v1365, 4
    %v1369 = vrot.slane %v1365, 5
    %1370 = vrot.lane.b32.xlu0 %v1368, 32
    %v1371 = vpop.permute.xlu0 %1370
    %1372 = vrot.lane.b32.xlu0 %v1369, 32
    %v1373 = vpop.permute.xlu0 %1372
    %v1376 = vadd.f32 %v129, %v1371
    %v1377 = vadd.f32 %v132, %v1373
    %v1378 = vxor.u32 %v1376, 2147483648
    %v1379 = vxor.u32 %v1377, 2147483648
    %v1380 = vmul.f32 %v1378, 1.442695
    %v1381 = vpow.pop %v1380
    %v1382 = vmul.f32 %v1379, 1.442695
    %v1383 = vpow.pop %v1382
    %v1384 = vadd.f32 %v1381, 1.0
    %v1385 = vadd.f32 %v1383, 1.0
    %v1386 = vrcp.pop %v1384
    %v1387 = vmul.f32 %v1384, %v1386
    %v1388 = vsub.f32 1.0, %v1387
    %v1389 = vmul.f32 %v1386, %v1388
    %v1390 = vadd.f32 %v1386, %v1389
    %vm1391 = vweird.f32 %v1384
    %vm1392 = vweird.f32 %v1386
    %vm1393 = vmor %vm1391, %vm1392
    %v1394 = vsel %vm1393, %v1386, %v1390
    %v1395 = vand.u32 2147483647, %v1384
    %vm1396 = vcmp.eq.f32.partialorder %v1395, 8.507059e+37
    %v1397 = vand.u32 %v1384, 2147483648
    %v1398 = vor.u32 1.1754944e-38, %v1397
    %v1399 = vsel %vm1396, %v1398, %v1394
    %v1400 = vmul.f32 1.0, %v1399
    %v1401 = vrcp.pop %v1385
    %v1402 = vmul.f32 %v1385, %v1401
    %v1403 = vsub.f32 1.0, %v1402
    %v1404 = vmul.f32 %v1401, %v1403
    %v1405 = vadd.f32 %v1401, %v1404
    %vm1406 = vweird.f32 %v1385
    %vm1407 = vweird.f32 %v1401
    %vm1408 = vmor %vm1406, %vm1407
    %v1409 = vsel %vm1408, %v1401, %v1405
    %v1410 = vand.u32 2147483647, %v1385
    %vm1411 = vcmp.eq.f32.partialorder %v1410, 8.507059e+37
    %v1412 = vand.u32 %v1385, 2147483648
    %v1413 = vor.u32 1.1754944e-38, %v1412
    %v1414 = vsel %vm1411, %v1413, %v1409
    %v1415 = vmul.f32 1.0, %v1414
    %1416 = vmatpush.msra.mxu0 0.0
    %1417 = vmatpush.msra.mxu0 0.0
    %1418 = vmatpush.msra.mxu0 0.0
    %1419 = vmatpush.msra.mxu0 0.0
    %1420 = vmatpush.msra.mxu0 0.0
    %1421 = vmatpush.msra.mxu0 0.0
    %1422 = vmatpush.msra.mxu0 0.0
    %1423 = vmatpush.msra.mxu0 0.0
    %1424 = vmatpush.msra.mxu0 0.0
    %1425 = vmatpush.msra.mxu0 0.0
    %1426 = vmatpush.msra.mxu0 0.0
    %1427 = vmatpush.msra.mxu0 0.0
    %1428 = vmatpush.msra.mxu0 %v147
    %1429 = vmatpush.msra.mxu0 %v146
    %1430 = vmatpush.msra.mxu0 %v145
    %1431 = vmatpush.msra.mxu0 %v144
    %1432 = vmatmul.f32.gmra.mxu0 %v1280
    %v1433 = vpop.f32.mrf.mxu0
    %v1434 = vadd.f32 0.0, %v1433
    %1435 = vdwg.mxu0
    %v1437 = vrot.slane %v1434, 4
    %v1438 = vrot.slane %v1434, 5
    %1439 = vrot.lane.b32.xlu0 %v1437, 64
    %v1440 = vpop.permute.xlu0 %1439
    %1441 = vrot.lane.b32.xlu0 %v1438, 64
    %v1442 = vpop.permute.xlu0 %1441
    %v1445 = vadd.f32 %v129, %v1440
    %v1446 = vadd.f32 %v132, %v1442
    %v1447 = vtanh.pop %v1445
    %v1448 = vtanh.pop %v1446
    %1449 = vmatpush.msra.mxu0 0.0
    %1450 = vmatpush.msra.mxu0 0.0
    %1451 = vmatpush.msra.mxu0 0.0
    %1452 = vmatpush.msra.mxu0 0.0
    %1453 = vmatpush.msra.mxu0 0.0
    %1454 = vmatpush.msra.mxu0 0.0
    %1455 = vmatpush.msra.mxu0 0.0
    %1456 = vmatpush.msra.mxu0 0.0
    %1457 = vmatpush.msra.mxu0 0.0
    %1458 = vmatpush.msra.mxu0 0.0
    %1459 = vmatpush.msra.mxu0 0.0
    %1460 = vmatpush.msra.mxu0 0.0
    %1461 = vmatpush.msra.mxu0 %v152
    %1462 = vmatpush.msra.mxu0 %v151
    %1463 = vmatpush.msra.mxu0 %v150
    %1464 = vmatpush.msra.mxu0 %v149
    %1465 = vmatmul.f32.gmra.mxu0 %v1280
    %v1466 = vpop.f32.mrf.mxu0
    %v1467 = vadd.f32 0.0, %v1466
    %1468 = vdwg.mxu0
    %v1470 = vrot.slane %v1467, 4
    %v1471 = vrot.slane %v1467, 5
    %1472 = vrot.lane.b32.xlu0 %v1470, 96
    %v1473 = vpop.permute.xlu0 %1472
    %1474 = vrot.lane.b32.xlu0 %v1471, 96
    %v1475 = vpop.permute.xlu0 %1474
    %v1478 = vadd.f32 %v129, %v1473
    %v1479 = vadd.f32 %v132, %v1475
    %v1480 = vxor.u32 %v1478, 2147483648
    %v1481 = vxor.u32 %v1479, 2147483648
    %v1482 = vmul.f32 %v1480, 1.442695
    %v1483 = vpow.pop %v1482
    %v1484 = vmul.f32 %v1481, 1.442695
    %v1485 = vpow.pop %v1484
    %v1486 = vadd.f32 %v1483, 1.0
    %v1487 = vadd.f32 %v1485, 1.0
    %v1488 = vrcp.pop %v1486
    %v1489 = vmul.f32 %v1486, %v1488
    %v1490 = vsub.f32 1.0, %v1489
    %v1491 = vmul.f32 %v1488, %v1490
    %v1492 = vadd.f32 %v1488, %v1491
    %vm1493 = vweird.f32 %v1486
    %vm1494 = vweird.f32 %v1488
    %vm1495 = vmor %vm1493, %vm1494
    %v1496 = vsel %vm1495, %v1488, %v1492
    %v1497 = vand.u32 2147483647, %v1486
    %vm1498 = vcmp.eq.f32.partialorder %v1497, 8.507059e+37
    %v1499 = vand.u32 %v1486, 2147483648
    %v1500 = vor.u32 1.1754944e-38, %v1499
    %v1501 = vsel %vm1498, %v1500, %v1496
    %v1502 = vmul.f32 1.0, %v1501
    %v1503 = vrcp.pop %v1487
    %v1504 = vmul.f32 %v1487, %v1503
    %v1505 = vsub.f32 1.0, %v1504
    %v1506 = vmul.f32 %v1503, %v1505
    %v1507 = vadd.f32 %v1503, %v1506
    %vm1508 = vweird.f32 %v1487
    %vm1509 = vweird.f32 %v1503
    %vm1510 = vmor %vm1508, %vm1509
    %v1511 = vsel %vm1510, %v1503, %v1507
    %v1512 = vand.u32 2147483647, %v1487
    %vm1513 = vcmp.eq.f32.partialorder %v1512, 8.507059e+37
    %v1514 = vand.u32 %v1487, 2147483648
    %v1515 = vor.u32 1.1754944e-38, %v1514
    %v1516 = vsel %vm1513, %v1515, %v1511
    %v1517 = vmul.f32 1.0, %v1516
    %v1520 = vrot.slane %v1259, 7
    %v1521 = vrot.slane %v1260, 7
    %v1524 = vmul.f32 %v1400, %v1520
    %v1525 = vmul.f32 %v1415, %v1521
    %1528 = vrot.lane.b32.xlu0 %v1447, 64
    %v1529 = vpop.permute.xlu0 %1528
    %1530 = vrot.lane.b32.xlu0 %v1448, 64
    %v1531 = vpop.permute.xlu0 %1530
    %v1534 = vmul.f32 %v1331, %v1529
    %v1535 = vmul.f32 %v1346, %v1531
    %1538 = vrot.lane.b32.xlu0 %v1534, 32
    %v1539 = vpop.permute.xlu0 %1538
    %1540 = vrot.lane.b32.xlu0 %v1535, 32
    %v1541 = vpop.permute.xlu0 %1540
    %v1544 = vadd.f32 %v1524, %v1539
    %v1545 = vadd.f32 %v1525, %v1541
    %v1546 = vtanh.pop %v1544
    %v1547 = vtanh.pop %v1545
    %1550 = vrot.lane.b32.xlu0 %v1546, 64
    %v1551 = vpop.permute.xlu0 %1550
    %1552 = vrot.lane.b32.xlu0 %v1547, 64
    %v1553 = vpop.permute.xlu0 %1552
    %v1556 = vmul.f32 %v1502, %v1551
    %v1557 = vmul.f32 %v1517, %v1553
    %v1560 = vrot.slane %v1556, 4
    %v1561 = vrot.slane %v1557, 3
    %v1562 = vsel %vm426, %v1561, %v1560
    %1563 = vrot.lane.b32.xlu0 %v1562, 32
    %v1564 = vpop.permute.xlu0 %1563
    %v1565 = vsel %vm153, %v1564, 0
    %1567 = vmatpush.msra.mxu0 0.0
    %1568 = vmatpush.msra.mxu0 0.0
    %1569 = vmatpush.msra.mxu0 0.0
    %1570 = vmatpush.msra.mxu0 0.0
    %1571 = vmatpush.msra.mxu0 0.0
    %1572 = vmatpush.msra.mxu0 0.0
    %1573 = vmatpush.msra.mxu0 0.0
    %1574 = vmatpush.msra.mxu0 0.0
    %1575 = vmatpush.msra.mxu0 0.0
    %1576 = vmatpush.msra.mxu0 0.0
    %1577 = vmatpush.msra.mxu0 0.0
    %1578 = vmatpush.msra.mxu0 0.0
    %1579 = vmatpush.msra.mxu0 %v137
    %1580 = vmatpush.msra.mxu0 %v136
    %1581 = vmatpush.msra.mxu0 %v135
    %1582 = vmatpush.msra.mxu0 %v134
    %1583 = vmatmul.f32.gmra.mxu0 %v1565
    %v1584 = vpop.f32.mrf.mxu0
    %v1585 = vadd.f32 0.0, %v1584
    %1586 = vdwg.mxu0
    %v1588 = vrot.slane %v1585, 3
    %v1589 = vrot.slane %v1585, 4
    %v1592 = vadd.f32 %v129, %v1588
    %v1593 = vadd.f32 %v132, %v1589
    %v1594 = vxor.u32 %v1592, 2147483648
    %v1595 = vxor.u32 %v1593, 2147483648
    %v1596 = vmul.f32 %v1594, 1.442695
    %v1597 = vpow.pop %v1596
    %v1598 = vmul.f32 %v1595, 1.442695
    %v1599 = vpow.pop %v1598
    %v1600 = vadd.f32 %v1597, 1.0
    %v1601 = vadd.f32 %v1599, 1.0
    %v1602 = vrcp.pop %v1600
    %v1603 = vmul.f32 %v1600, %v1602
    %v1604 = vsub.f32 1.0, %v1603
    %v1605 = vmul.f32 %v1602, %v1604
    %v1606 = vadd.f32 %v1602, %v1605
    %vm1607 = vweird.f32 %v1600
    %vm1608 = vweird.f32 %v1602
    %vm1609 = vmor %vm1607, %vm1608
    %v1610 = vsel %vm1609, %v1602, %v1606
    %v1611 = vand.u32 2147483647, %v1600
    %vm1612 = vcmp.eq.f32.partialorder %v1611, 8.507059e+37
    %v1613 = vand.u32 %v1600, 2147483648
    %v1614 = vor.u32 1.1754944e-38, %v1613
    %v1615 = vsel %vm1612, %v1614, %v1610
    %v1616 = vmul.f32 1.0, %v1615
    %v1617 = vrcp.pop %v1601
    %v1618 = vmul.f32 %v1601, %v1617
    %v1619 = vsub.f32 1.0, %v1618
    %v1620 = vmul.f32 %v1617, %v1619
    %v1621 = vadd.f32 %v1617, %v1620
    %vm1622 = vweird.f32 %v1601
    %vm1623 = vweird.f32 %v1617
    %vm1624 = vmor %vm1622, %vm1623
    %v1625 = vsel %vm1624, %v1617, %v1621
    %v1626 = vand.u32 2147483647, %v1601
    %vm1627 = vcmp.eq.f32.partialorder %v1626, 8.507059e+37
    %v1628 = vand.u32 %v1601, 2147483648
    %v1629 = vor.u32 1.1754944e-38, %v1628
    %v1630 = vsel %vm1627, %v1629, %v1625
    %v1631 = vmul.f32 1.0, %v1630
    %1632 = vmatpush.msra.mxu0 0.0
    %1633 = vmatpush.msra.mxu0 0.0
    %1634 = vmatpush.msra.mxu0 0.0
    %1635 = vmatpush.msra.mxu0 0.0
    %1636 = vmatpush.msra.mxu0 0.0
    %1637 = vmatpush.msra.mxu0 0.0
    %1638 = vmatpush.msra.mxu0 0.0
    %1639 = vmatpush.msra.mxu0 0.0
    %1640 = vmatpush.msra.mxu0 0.0
    %1641 = vmatpush.msra.mxu0 0.0
    %1642 = vmatpush.msra.mxu0 0.0
    %1643 = vmatpush.msra.mxu0 0.0
    %1644 = vmatpush.msra.mxu0 %v142
    %1645 = vmatpush.msra.mxu0 %v141
    %1646 = vmatpush.msra.mxu0 %v140
    %1647 = vmatpush.msra.mxu0 %v139
    %1648 = vmatmul.f32.gmra.mxu0 %v1565
    %v1649 = vpop.f32.mrf.mxu0
    %v1650 = vadd.f32 0.0, %v1649
    %1651 = vdwg.mxu0
    %v1653 = vrot.slane %v1650, 3
    %v1654 = vrot.slane %v1650, 4
    %1655 = vrot.lane.b32.xlu0 %v1653, 32
    %v1656 = vpop.permute.xlu0 %1655
    %1657 = vrot.lane.b32.xlu0 %v1654, 32
    %v1658 = vpop.permute.xlu0 %1657
    %v1661 = vadd.f32 %v129, %v1656
    %v1662 = vadd.f32 %v132, %v1658
    %v1663 = vxor.u32 %v1661, 2147483648
    %v1664 = vxor.u32 %v1662, 2147483648
    %v1665 = vmul.f32 %v1663, 1.442695
    %v1666 = vpow.pop %v1665
    %v1667 = vmul.f32 %v1664, 1.442695
    %v1668 = vpow.pop %v1667
    %v1669 = vadd.f32 %v1666, 1.0
    %v1670 = vadd.f32 %v1668, 1.0
    %v1671 = vrcp.pop %v1669
    %v1672 = vmul.f32 %v1669, %v1671
    %v1673 = vsub.f32 1.0, %v1672
    %v1674 = vmul.f32 %v1671, %v1673
    %v1675 = vadd.f32 %v1671, %v1674
    %vm1676 = vweird.f32 %v1669
    %vm1677 = vweird.f32 %v1671
    %vm1678 = vmor %vm1676, %vm1677
    %v1679 = vsel %vm1678, %v1671, %v1675
    %v1680 = vand.u32 2147483647, %v1669
    %vm1681 = vcmp.eq.f32.partialorder %v1680, 8.507059e+37
    %v1682 = vand.u32 %v1669, 2147483648
    %v1683 = vor.u32 1.1754944e-38, %v1682
    %v1684 = vsel %vm1681, %v1683, %v1679
    %v1685 = vmul.f32 1.0, %v1684
    %v1686 = vrcp.pop %v1670
    %v1687 = vmul.f32 %v1670, %v1686
    %v1688 = vsub.f32 1.0, %v1687
    %v1689 = vmul.f32 %v1686, %v1688
    %v1690 = vadd.f32 %v1686, %v1689
    %vm1691 = vweird.f32 %v1670
    %vm1692 = vweird.f32 %v1686
    %vm1693 = vmor %vm1691, %vm1692
    %v1694 = vsel %vm1693, %v1686, %v1690
    %v1695 = vand.u32 2147483647, %v1670
    %vm1696 = vcmp.eq.f32.partialorder %v1695, 8.507059e+37
    %v1697 = vand.u32 %v1670, 2147483648
    %v1698 = vor.u32 1.1754944e-38, %v1697
    %v1699 = vsel %vm1696, %v1698, %v1694
    %v1700 = vmul.f32 1.0, %v1699
    %1701 = vmatpush.msra.mxu0 0.0
    %1702 = vmatpush.msra.mxu0 0.0
    %1703 = vmatpush.msra.mxu0 0.0
    %1704 = vmatpush.msra.mxu0 0.0
    %1705 = vmatpush.msra.mxu0 0.0
    %1706 = vmatpush.msra.mxu0 0.0
    %1707 = vmatpush.msra.mxu0 0.0
    %1708 = vmatpush.msra.mxu0 0.0
    %1709 = vmatpush.msra.mxu0 0.0
    %1710 = vmatpush.msra.mxu0 0.0
    %1711 = vmatpush.msra.mxu0 0.0
    %1712 = vmatpush.msra.mxu0 0.0
    %1713 = vmatpush.msra.mxu0 %v147
    %1714 = vmatpush.msra.mxu0 %v146
    %1715 = vmatpush.msra.mxu0 %v145
    %1716 = vmatpush.msra.mxu0 %v144
    %1717 = vmatmul.f32.gmra.mxu0 %v1565
    %v1718 = vpop.f32.mrf.mxu0
    %v1719 = vadd.f32 0.0, %v1718
    %1720 = vdwg.mxu0
    %v1722 = vrot.slane %v1719, 3
    %v1723 = vrot.slane %v1719, 4
    %1724 = vrot.lane.b32.xlu0 %v1722, 64
    %v1725 = vpop.permute.xlu0 %1724
    %1726 = vrot.lane.b32.xlu0 %v1723, 64
    %v1727 = vpop.permute.xlu0 %1726
    %v1730 = vadd.f32 %v129, %v1725
    %v1731 = vadd.f32 %v132, %v1727
    %v1732 = vtanh.pop %v1730
    %v1733 = vtanh.pop %v1731
    %1734 = vmatpush.msra.mxu0 0.0
    %1735 = vmatpush.msra.mxu0 0.0
    %1736 = vmatpush.msra.mxu0 0.0
    %1737 = vmatpush.msra.mxu0 0.0
    %1738 = vmatpush.msra.mxu0 0.0
    %1739 = vmatpush.msra.mxu0 0.0
    %1740 = vmatpush.msra.mxu0 0.0
    %1741 = vmatpush.msra.mxu0 0.0
    %1742 = vmatpush.msra.mxu0 0.0
    %1743 = vmatpush.msra.mxu0 0.0
    %1744 = vmatpush.msra.mxu0 0.0
    %1745 = vmatpush.msra.mxu0 0.0
    %1746 = vmatpush.msra.mxu0 %v152
    %1747 = vmatpush.msra.mxu0 %v151
    %1748 = vmatpush.msra.mxu0 %v150
    %1749 = vmatpush.msra.mxu0 %v149
    %1750 = vmatmul.f32.gmra.mxu0 %v1565
    %v1751 = vpop.f32.mrf.mxu0
    %v1752 = vadd.f32 0.0, %v1751
    %1753 = vdwg.mxu0
    %v1755 = vrot.slane %v1752, 3
    %v1756 = vrot.slane %v1752, 4
    %1757 = vrot.lane.b32.xlu0 %v1755, 96
    %v1758 = vpop.permute.xlu0 %1757
    %1759 = vrot.lane.b32.xlu0 %v1756, 96
    %v1760 = vpop.permute.xlu0 %1759
    %v1763 = vadd.f32 %v129, %v1758
    %v1764 = vadd.f32 %v132, %v1760
    %v1765 = vxor.u32 %v1763, 2147483648
    %v1766 = vxor.u32 %v1764, 2147483648
    %v1767 = vmul.f32 %v1765, 1.442695
    %v1768 = vpow.pop %v1767
    %v1769 = vmul.f32 %v1766, 1.442695
    %v1770 = vpow.pop %v1769
    %v1771 = vadd.f32 %v1768, 1.0
    %v1772 = vadd.f32 %v1770, 1.0
    %v1773 = vrcp.pop %v1771
    %v1774 = vmul.f32 %v1771, %v1773
    %v1775 = vsub.f32 1.0, %v1774
    %v1776 = vmul.f32 %v1773, %v1775
    %v1777 = vadd.f32 %v1773, %v1776
    %vm1778 = vweird.f32 %v1771
    %vm1779 = vweird.f32 %v1773
    %vm1780 = vmor %vm1778, %vm1779
    %v1781 = vsel %vm1780, %v1773, %v1777
    %v1782 = vand.u32 2147483647, %v1771
    %vm1783 = vcmp.eq.f32.partialorder %v1782, 8.507059e+37
    %v1784 = vand.u32 %v1771, 2147483648
    %v1785 = vor.u32 1.1754944e-38, %v1784
    %v1786 = vsel %vm1783, %v1785, %v1781
    %v1787 = vmul.f32 1.0, %v1786
    %v1788 = vrcp.pop %v1772
    %v1789 = vmul.f32 %v1772, %v1788
    %v1790 = vsub.f32 1.0, %v1789
    %v1791 = vmul.f32 %v1788, %v1790
    %v1792 = vadd.f32 %v1788, %v1791
    %vm1793 = vweird.f32 %v1772
    %vm1794 = vweird.f32 %v1788
    %vm1795 = vmor %vm1793, %vm1794
    %v1796 = vsel %vm1795, %v1788, %v1792
    %v1797 = vand.u32 2147483647, %v1772
    %vm1798 = vcmp.eq.f32.partialorder %v1797, 8.507059e+37
    %v1799 = vand.u32 %v1772, 2147483648
    %v1800 = vor.u32 1.1754944e-38, %v1799
    %v1801 = vsel %vm1798, %v1800, %v1796
    %v1802 = vmul.f32 1.0, %v1801
    %v1805 = vrot.slane %v1544, 7
    %v1806 = vrot.slane %v1545, 7
    %v1809 = vmul.f32 %v1685, %v1805
    %v1810 = vmul.f32 %v1700, %v1806
    %1813 = vrot.lane.b32.xlu0 %v1732, 64
    %v1814 = vpop.permute.xlu0 %1813
    %1815 = vrot.lane.b32.xlu0 %v1733, 64
    %v1816 = vpop.permute.xlu0 %1815
    %v1819 = vmul.f32 %v1616, %v1814
    %v1820 = vmul.f32 %v1631, %v1816
    %1823 = vrot.lane.b32.xlu0 %v1819, 32
    %v1824 = vpop.permute.xlu0 %1823
    %1825 = vrot.lane.b32.xlu0 %v1820, 32
    %v1826 = vpop.permute.xlu0 %1825
    %v1829 = vadd.f32 %v1809, %v1824
    %v1830 = vadd.f32 %v1810, %v1826
    %v1831 = vtanh.pop %v1829
    %v1832 = vtanh.pop %v1830
    %1835 = vrot.lane.b32.xlu0 %v1831, 64
    %v1836 = vpop.permute.xlu0 %1835
    %1837 = vrot.lane.b32.xlu0 %v1832, 64
    %v1838 = vpop.permute.xlu0 %1837
    %v1841 = vmul.f32 %v1787, %v1836
    %v1842 = vmul.f32 %v1802, %v1838
    %v1845 = vrot.slane %v1841, 5
    %v1846 = vrot.slane %v1842, 4
    %v1847 = vsel %vm426, %v1846, %v1845
    %1848 = vrot.lane.b32.xlu0 %v1847, 32
    %v1849 = vpop.permute.xlu0 %1848
    %v1850 = vsel %vm153, %v1849, 0
    %1852 = vmatpush.msra.mxu0 0.0
    %1853 = vmatpush.msra.mxu0 0.0
    %1854 = vmatpush.msra.mxu0 0.0
    %1855 = vmatpush.msra.mxu0 0.0
    %1856 = vmatpush.msra.mxu0 0.0
    %1857 = vmatpush.msra.mxu0 0.0
    %1858 = vmatpush.msra.mxu0 0.0
    %1859 = vmatpush.msra.mxu0 0.0
    %1860 = vmatpush.msra.mxu0 0.0
    %1861 = vmatpush.msra.mxu0 0.0
    %1862 = vmatpush.msra.mxu0 0.0
    %1863 = vmatpush.msra.mxu0 0.0
    %1864 = vmatpush.msra.mxu0 %v137
    %1865 = vmatpush.msra.mxu0 %v136
    %1866 = vmatpush.msra.mxu0 %v135
    %1867 = vmatpush.msra.mxu0 %v134
    %1868 = vmatmul.f32.gmra.mxu0 %v1850
    %v1869 = vpop.f32.mrf.mxu0
    %v1870 = vadd.f32 0.0, %v1869
    %1871 = vdwg.mxu0
    %v1873 = vrot.slane %v1870, 2
    %v1874 = vrot.slane %v1870, 3
    %v1877 = vadd.f32 %v129, %v1873
    %v1878 = vadd.f32 %v132, %v1874
    %v1879 = vxor.u32 %v1877, 2147483648
    %v1880 = vxor.u32 %v1878, 2147483648
    %v1881 = vmul.f32 %v1879, 1.442695
    %v1882 = vpow.pop %v1881
    %v1883 = vmul.f32 %v1880, 1.442695
    %v1884 = vpow.pop %v1883
    %v1885 = vadd.f32 %v1882, 1.0
    %v1886 = vadd.f32 %v1884, 1.0
    %v1887 = vrcp.pop %v1885
    %v1888 = vmul.f32 %v1885, %v1887
    %v1889 = vsub.f32 1.0, %v1888
    %v1890 = vmul.f32 %v1887, %v1889
    %v1891 = vadd.f32 %v1887, %v1890
    %vm1892 = vweird.f32 %v1885
    %vm1893 = vweird.f32 %v1887
    %vm1894 = vmor %vm1892, %vm1893
    %v1895 = vsel %vm1894, %v1887, %v1891
    %v1896 = vand.u32 2147483647, %v1885
    %vm1897 = vcmp.eq.f32.partialorder %v1896, 8.507059e+37
    %v1898 = vand.u32 %v1885, 2147483648
    %v1899 = vor.u32 1.1754944e-38, %v1898
    %v1900 = vsel %vm1897, %v1899, %v1895
    %v1901 = vmul.f32 1.0, %v1900
    %v1902 = vrcp.pop %v1886
    %v1903 = vmul.f32 %v1886, %v1902
    %v1904 = vsub.f32 1.0, %v1903
    %v1905 = vmul.f32 %v1902, %v1904
    %v1906 = vadd.f32 %v1902, %v1905
    %vm1907 = vweird.f32 %v1886
    %vm1908 = vweird.f32 %v1902
    %vm1909 = vmor %vm1907, %vm1908
    %v1910 = vsel %vm1909, %v1902, %v1906
    %v1911 = vand.u32 2147483647, %v1886
    %vm1912 = vcmp.eq.f32.partialorder %v1911, 8.507059e+37
    %v1913 = vand.u32 %v1886, 2147483648
    %v1914 = vor.u32 1.1754944e-38, %v1913
    %v1915 = vsel %vm1912, %v1914, %v1910
    %v1916 = vmul.f32 1.0, %v1915
    %1917 = vmatpush.msra.mxu0 0.0
    %1918 = vmatpush.msra.mxu0 0.0
    %1919 = vmatpush.msra.mxu0 0.0
    %1920 = vmatpush.msra.mxu0 0.0
    %1921 = vmatpush.msra.mxu0 0.0
    %1922 = vmatpush.msra.mxu0 0.0
    %1923 = vmatpush.msra.mxu0 0.0
    %1924 = vmatpush.msra.mxu0 0.0
    %1925 = vmatpush.msra.mxu0 0.0
    %1926 = vmatpush.msra.mxu0 0.0
    %1927 = vmatpush.msra.mxu0 0.0
    %1928 = vmatpush.msra.mxu0 0.0
    %1929 = vmatpush.msra.mxu0 %v142
    %1930 = vmatpush.msra.mxu0 %v141
    %1931 = vmatpush.msra.mxu0 %v140
    %1932 = vmatpush.msra.mxu0 %v139
    %1933 = vmatmul.f32.gmra.mxu0 %v1850
    %v1934 = vpop.f32.mrf.mxu0
    %v1935 = vadd.f32 0.0, %v1934
    %1936 = vdwg.mxu0
    %v1938 = vrot.slane %v1935, 2
    %v1939 = vrot.slane %v1935, 3
    %1940 = vrot.lane.b32.xlu0 %v1938, 32
    %v1941 = vpop.permute.xlu0 %1940
    %1942 = vrot.lane.b32.xlu0 %v1939, 32
    %v1943 = vpop.permute.xlu0 %1942
    %v1946 = vadd.f32 %v129, %v1941
    %v1947 = vadd.f32 %v132, %v1943
    %v1948 = vxor.u32 %v1946, 2147483648
    %v1949 = vxor.u32 %v1947, 2147483648
    %v1950 = vmul.f32 %v1948, 1.442695
    %v1951 = vpow.pop %v1950
    %v1952 = vmul.f32 %v1949, 1.442695
    %v1953 = vpow.pop %v1952
    %v1954 = vadd.f32 %v1951, 1.0
    %v1955 = vadd.f32 %v1953, 1.0
    %v1956 = vrcp.pop %v1954
    %v1957 = vmul.f32 %v1954, %v1956
    %v1958 = vsub.f32 1.0, %v1957
    %v1959 = vmul.f32 %v1956, %v1958
    %v1960 = vadd.f32 %v1956, %v1959
    %vm1961 = vweird.f32 %v1954
    %vm1962 = vweird.f32 %v1956
    %vm1963 = vmor %vm1961, %vm1962
    %v1964 = vsel %vm1963, %v1956, %v1960
    %v1965 = vand.u32 2147483647, %v1954
    %vm1966 = vcmp.eq.f32.partialorder %v1965, 8.507059e+37
    %v1967 = vand.u32 %v1954, 2147483648
    %v1968 = vor.u32 1.1754944e-38, %v1967
    %v1969 = vsel %vm1966, %v1968, %v1964
    %v1970 = vmul.f32 1.0, %v1969
    %v1971 = vrcp.pop %v1955
    %v1972 = vmul.f32 %v1955, %v1971
    %v1973 = vsub.f32 1.0, %v1972
    %v1974 = vmul.f32 %v1971, %v1973
    %v1975 = vadd.f32 %v1971, %v1974
    %vm1976 = vweird.f32 %v1955
    %vm1977 = vweird.f32 %v1971
    %vm1978 = vmor %vm1976, %vm1977
    %v1979 = vsel %vm1978, %v1971, %v1975
    %v1980 = vand.u32 2147483647, %v1955
    %vm1981 = vcmp.eq.f32.partialorder %v1980, 8.507059e+37
    %v1982 = vand.u32 %v1955, 2147483648
    %v1983 = vor.u32 1.1754944e-38, %v1982
    %v1984 = vsel %vm1981, %v1983, %v1979
    %v1985 = vmul.f32 1.0, %v1984
    %1986 = vmatpush.msra.mxu0 0.0
    %1987 = vmatpush.msra.mxu0 0.0
    %1988 = vmatpush.msra.mxu0 0.0
    %1989 = vmatpush.msra.mxu0 0.0
    %1990 = vmatpush.msra.mxu0 0.0
    %1991 = vmatpush.msra.mxu0 0.0
    %1992 = vmatpush.msra.mxu0 0.0
    %1993 = vmatpush.msra.mxu0 0.0
    %1994 = vmatpush.msra.mxu0 0.0
    %1995 = vmatpush.msra.mxu0 0.0
    %1996 = vmatpush.msra.mxu0 0.0
    %1997 = vmatpush.msra.mxu0 0.0
    %1998 = vmatpush.msra.mxu0 %v147
    %1999 = vmatpush.msra.mxu0 %v146
    %2000 = vmatpush.msra.mxu0 %v145
    %2001 = vmatpush.msra.mxu0 %v144
    %2002 = vmatmul.f32.gmra.mxu0 %v1850
    %v2003 = vpop.f32.mrf.mxu0
    %v2004 = vadd.f32 0.0, %v2003
    %2005 = vdwg.mxu0
    %v2007 = vrot.slane %v2004, 2
    %v2008 = vrot.slane %v2004, 3
    %2009 = vrot.lane.b32.xlu0 %v2007, 64
    %v2010 = vpop.permute.xlu0 %2009
    %2011 = vrot.lane.b32.xlu0 %v2008, 64
    %v2012 = vpop.permute.xlu0 %2011
    %v2015 = vadd.f32 %v129, %v2010
    %v2016 = vadd.f32 %v132, %v2012
    %v2017 = vtanh.pop %v2015
    %v2018 = vtanh.pop %v2016
    %2019 = vmatpush.msra.mxu0 0.0
    %2020 = vmatpush.msra.mxu0 0.0
    %2021 = vmatpush.msra.mxu0 0.0
    %2022 = vmatpush.msra.mxu0 0.0
    %2023 = vmatpush.msra.mxu0 0.0
    %2024 = vmatpush.msra.mxu0 0.0
    %2025 = vmatpush.msra.mxu0 0.0
    %2026 = vmatpush.msra.mxu0 0.0
    %2027 = vmatpush.msra.mxu0 0.0
    %2028 = vmatpush.msra.mxu0 0.0
    %2029 = vmatpush.msra.mxu0 0.0
    %2030 = vmatpush.msra.mxu0 0.0
    %2031 = vmatpush.msra.mxu0 %v152
    %2032 = vmatpush.msra.mxu0 %v151
    %2033 = vmatpush.msra.mxu0 %v150
    %2034 = vmatpush.msra.mxu0 %v149
    %2035 = vmatmul.f32.gmra.mxu0 %v1850
    %v2036 = vpop.f32.mrf.mxu0
    %v2037 = vadd.f32 0.0, %v2036
    %2038 = vdwg.mxu0
    %v2040 = vrot.slane %v2037, 2
    %v2041 = vrot.slane %v2037, 3
    %2042 = vrot.lane.b32.xlu0 %v2040, 96
    %v2043 = vpop.permute.xlu0 %2042
    %2044 = vrot.lane.b32.xlu0 %v2041, 96
    %v2045 = vpop.permute.xlu0 %2044
    %v2048 = vadd.f32 %v129, %v2043
    %v2049 = vadd.f32 %v132, %v2045
    %v2050 = vxor.u32 %v2048, 2147483648
    %v2051 = vxor.u32 %v2049, 2147483648
    %v2052 = vmul.f32 %v2050, 1.442695
    %v2053 = vpow.pop %v2052
    %v2054 = vmul.f32 %v2051, 1.442695
    %v2055 = vpow.pop %v2054
    %v2056 = vadd.f32 %v2053, 1.0
    %v2057 = vadd.f32 %v2055, 1.0
    %v2058 = vrcp.pop %v2056
    %v2059 = vmul.f32 %v2056, %v2058
    %v2060 = vsub.f32 1.0, %v2059
    %v2061 = vmul.f32 %v2058, %v2060
    %v2062 = vadd.f32 %v2058, %v2061
    %vm2063 = vweird.f32 %v2056
    %vm2064 = vweird.f32 %v2058
    %vm2065 = vmor %vm2063, %vm2064
    %v2066 = vsel %vm2065, %v2058, %v2062
    %v2067 = vand.u32 2147483647, %v2056
    %vm2068 = vcmp.eq.f32.partialorder %v2067, 8.507059e+37
    %v2069 = vand.u32 %v2056, 2147483648
    %v2070 = vor.u32 1.1754944e-38, %v2069
    %v2071 = vsel %vm2068, %v2070, %v2066
    %v2072 = vmul.f32 1.0, %v2071
    %v2073 = vrcp.pop %v2057
    %v2074 = vmul.f32 %v2057, %v2073
    %v2075 = vsub.f32 1.0, %v2074
    %v2076 = vmul.f32 %v2073, %v2075
    %v2077 = vadd.f32 %v2073, %v2076
    %vm2078 = vweird.f32 %v2057
    %vm2079 = vweird.f32 %v2073
    %vm2080 = vmor %vm2078, %vm2079
    %v2081 = vsel %vm2080, %v2073, %v2077
    %v2082 = vand.u32 2147483647, %v2057
    %vm2083 = vcmp.eq.f32.partialorder %v2082, 8.507059e+37
    %v2084 = vand.u32 %v2057, 2147483648
    %v2085 = vor.u32 1.1754944e-38, %v2084
    %v2086 = vsel %vm2083, %v2085, %v2081
    %v2087 = vmul.f32 1.0, %v2086
    %v2090 = vrot.slane %v1829, 7
    %v2091 = vrot.slane %v1830, 7
    %v2094 = vmul.f32 %v1970, %v2090
    %v2095 = vmul.f32 %v1985, %v2091
    %2098 = vrot.lane.b32.xlu0 %v2017, 64
    %v2099 = vpop.permute.xlu0 %2098
    %2100 = vrot.lane.b32.xlu0 %v2018, 64
    %v2101 = vpop.permute.xlu0 %2100
    %v2104 = vmul.f32 %v1901, %v2099
    %v2105 = vmul.f32 %v1916, %v2101
    %2108 = vrot.lane.b32.xlu0 %v2104, 32
    %v2109 = vpop.permute.xlu0 %2108
    %2110 = vrot.lane.b32.xlu0 %v2105, 32
    %v2111 = vpop.permute.xlu0 %2110
    %v2114 = vadd.f32 %v2094, %v2109
    %v2115 = vadd.f32 %v2095, %v2111
    %v2116 = vtanh.pop %v2114
    %v2117 = vtanh.pop %v2115
    %2120 = vrot.lane.b32.xlu0 %v2116, 64
    %v2121 = vpop.permute.xlu0 %2120
    %2122 = vrot.lane.b32.xlu0 %v2117, 64
    %v2123 = vpop.permute.xlu0 %2122
    %v2126 = vmul.f32 %v2072, %v2121
    %v2127 = vmul.f32 %v2087, %v2123
    %v2130 = vrot.slane %v2126, 6
    %v2131 = vrot.slane %v2127, 5
    %v2132 = vsel %vm426, %v2131, %v2130
    %2133 = vrot.lane.b32.xlu0 %v2132, 32
    %v2134 = vpop.permute.xlu0 %2133
    %v2135 = vsel %vm153, %v2134, 0
    %2137 = vmatpush.msra.mxu0 0.0
    %2138 = vmatpush.msra.mxu0 0.0
    %2139 = vmatpush.msra.mxu0 0.0
    %2140 = vmatpush.msra.mxu0 0.0
    %2141 = vmatpush.msra.mxu0 0.0
    %2142 = vmatpush.msra.mxu0 0.0
    %2143 = vmatpush.msra.mxu0 0.0
    %2144 = vmatpush.msra.mxu0 0.0
    %2145 = vmatpush.msra.mxu0 0.0
    %2146 = vmatpush.msra.mxu0 0.0
    %2147 = vmatpush.msra.mxu0 0.0
    %2148 = vmatpush.msra.mxu0 0.0
    %2149 = vmatpush.msra.mxu0 %v137
    %2150 = vmatpush.msra.mxu0 %v136
    %2151 = vmatpush.msra.mxu0 %v135
    %2152 = vmatpush.msra.mxu0 %v134
    %2153 = vmatmul.f32.gmra.mxu0 %v2135
    %v2154 = vpop.f32.mrf.mxu0
    %v2155 = vadd.f32 0.0, %v2154
    %2156 = vdwg.mxu0
    %v2158 = vrot.slane %v2155, 1
    %v2159 = vrot.slane %v2155, 2
    %v2162 = vadd.f32 %v129, %v2158
    %v2163 = vadd.f32 %v132, %v2159
    %v2164 = vxor.u32 %v2162, 2147483648
    %v2165 = vxor.u32 %v2163, 2147483648
    %v2166 = vmul.f32 %v2164, 1.442695
    %v2167 = vpow.pop %v2166
    %v2168 = vmul.f32 %v2165, 1.442695
    %v2169 = vpow.pop %v2168
    %v2170 = vadd.f32 %v2167, 1.0
    %v2171 = vadd.f32 %v2169, 1.0
    %v2172 = vrcp.pop %v2170
    %v2173 = vmul.f32 %v2170, %v2172
    %v2174 = vsub.f32 1.0, %v2173
    %v2175 = vmul.f32 %v2172, %v2174
    %v2176 = vadd.f32 %v2172, %v2175
    %vm2177 = vweird.f32 %v2170
    %vm2178 = vweird.f32 %v2172
    %vm2179 = vmor %vm2177, %vm2178
    %v2180 = vsel %vm2179, %v2172, %v2176
    %v2181 = vand.u32 2147483647, %v2170
    %vm2182 = vcmp.eq.f32.partialorder %v2181, 8.507059e+37
    %v2183 = vand.u32 %v2170, 2147483648
    %v2184 = vor.u32 1.1754944e-38, %v2183
    %v2185 = vsel %vm2182, %v2184, %v2180
    %v2186 = vmul.f32 1.0, %v2185
    %v2187 = vrcp.pop %v2171
    %v2188 = vmul.f32 %v2171, %v2187
    %v2189 = vsub.f32 1.0, %v2188
    %v2190 = vmul.f32 %v2187, %v2189
    %v2191 = vadd.f32 %v2187, %v2190
    %vm2192 = vweird.f32 %v2171
    %vm2193 = vweird.f32 %v2187
    %vm2194 = vmor %vm2192, %vm2193
    %v2195 = vsel %vm2194, %v2187, %v2191
    %v2196 = vand.u32 2147483647, %v2171
    %vm2197 = vcmp.eq.f32.partialorder %v2196, 8.507059e+37
    %v2198 = vand.u32 %v2171, 2147483648
    %v2199 = vor.u32 1.1754944e-38, %v2198
    %v2200 = vsel %vm2197, %v2199, %v2195
    %v2201 = vmul.f32 1.0, %v2200
    %2202 = vmatpush.msra.mxu0 0.0
    %2203 = vmatpush.msra.mxu0 0.0
    %2204 = vmatpush.msra.mxu0 0.0
    %2205 = vmatpush.msra.mxu0 0.0
    %2206 = vmatpush.msra.mxu0 0.0
    %2207 = vmatpush.msra.mxu0 0.0
    %2208 = vmatpush.msra.mxu0 0.0
    %2209 = vmatpush.msra.mxu0 0.0
    %2210 = vmatpush.msra.mxu0 0.0
    %2211 = vmatpush.msra.mxu0 0.0
    %2212 = vmatpush.msra.mxu0 0.0
    %2213 = vmatpush.msra.mxu0 0.0
    %2214 = vmatpush.msra.mxu0 %v142
    %2215 = vmatpush.msra.mxu0 %v141
    %2216 = vmatpush.msra.mxu0 %v140
    %2217 = vmatpush.msra.mxu0 %v139
    %2218 = vmatmul.f32.gmra.mxu0 %v2135
    %v2219 = vpop.f32.mrf.mxu0
    %v2220 = vadd.f32 0.0, %v2219
    %2221 = vdwg.mxu0
    %v2223 = vrot.slane %v2220, 1
    %v2224 = vrot.slane %v2220, 2
    %2225 = vrot.lane.b32.xlu0 %v2223, 32
    %v2226 = vpop.permute.xlu0 %2225
    %2227 = vrot.lane.b32.xlu0 %v2224, 32
    %v2228 = vpop.permute.xlu0 %2227
    %v2231 = vadd.f32 %v129, %v2226
    %v2232 = vadd.f32 %v132, %v2228
    %v2233 = vxor.u32 %v2231, 2147483648
    %v2234 = vxor.u32 %v2232, 2147483648
    %v2235 = vmul.f32 %v2233, 1.442695
    %v2236 = vpow.pop %v2235
    %v2237 = vmul.f32 %v2234, 1.442695
    %v2238 = vpow.pop %v2237
    %v2239 = vadd.f32 %v2236, 1.0
    %v2240 = vadd.f32 %v2238, 1.0
    %v2241 = vrcp.pop %v2239
    %v2242 = vmul.f32 %v2239, %v2241
    %v2243 = vsub.f32 1.0, %v2242
    %v2244 = vmul.f32 %v2241, %v2243
    %v2245 = vadd.f32 %v2241, %v2244
    %vm2246 = vweird.f32 %v2239
    %vm2247 = vweird.f32 %v2241
    %vm2248 = vmor %vm2246, %vm2247
    %v2249 = vsel %vm2248, %v2241, %v2245
    %v2250 = vand.u32 2147483647, %v2239
    %vm2251 = vcmp.eq.f32.partialorder %v2250, 8.507059e+37
    %v2252 = vand.u32 %v2239, 2147483648
    %v2253 = vor.u32 1.1754944e-38, %v2252
    %v2254 = vsel %vm2251, %v2253, %v2249
    %v2255 = vmul.f32 1.0, %v2254
    %v2256 = vrcp.pop %v2240
    %v2257 = vmul.f32 %v2240, %v2256
    %v2258 = vsub.f32 1.0, %v2257
    %v2259 = vmul.f32 %v2256, %v2258
    %v2260 = vadd.f32 %v2256, %v2259
    %vm2261 = vweird.f32 %v2240
    %vm2262 = vweird.f32 %v2256
    %vm2263 = vmor %vm2261, %vm2262
    %v2264 = vsel %vm2263, %v2256, %v2260
    %v2265 = vand.u32 2147483647, %v2240
    %vm2266 = vcmp.eq.f32.partialorder %v2265, 8.507059e+37
    %v2267 = vand.u32 %v2240, 2147483648
    %v2268 = vor.u32 1.1754944e-38, %v2267
    %v2269 = vsel %vm2266, %v2268, %v2264
    %v2270 = vmul.f32 1.0, %v2269
    %2271 = vmatpush.msra.mxu0 0.0
    %2272 = vmatpush.msra.mxu0 0.0
    %2273 = vmatpush.msra.mxu0 0.0
    %2274 = vmatpush.msra.mxu0 0.0
    %2275 = vmatpush.msra.mxu0 0.0
    %2276 = vmatpush.msra.mxu0 0.0
    %2277 = vmatpush.msra.mxu0 0.0
    %2278 = vmatpush.msra.mxu0 0.0
    %2279 = vmatpush.msra.mxu0 0.0
    %2280 = vmatpush.msra.mxu0 0.0
    %2281 = vmatpush.msra.mxu0 0.0
    %2282 = vmatpush.msra.mxu0 0.0
    %2283 = vmatpush.msra.mxu0 %v147
    %2284 = vmatpush.msra.mxu0 %v146
    %2285 = vmatpush.msra.mxu0 %v145
    %2286 = vmatpush.msra.mxu0 %v144
    %2287 = vmatmul.f32.gmra.mxu0 %v2135
    %v2288 = vpop.f32.mrf.mxu0
    %v2289 = vadd.f32 0.0, %v2288
    %2290 = vdwg.mxu0
    %v2292 = vrot.slane %v2289, 1
    %v2293 = vrot.slane %v2289, 2
    %2294 = vrot.lane.b32.xlu0 %v2292, 64
    %v2295 = vpop.permute.xlu0 %2294
    %2296 = vrot.lane.b32.xlu0 %v2293, 64
    %v2297 = vpop.permute.xlu0 %2296
    %v2300 = vadd.f32 %v129, %v2295
    %v2301 = vadd.f32 %v132, %v2297
    %v2302 = vtanh.pop %v2300
    %v2303 = vtanh.pop %v2301
    %2304 = vmatpush.msra.mxu0 0.0
    %2305 = vmatpush.msra.mxu0 0.0
    %2306 = vmatpush.msra.mxu0 0.0
    %2307 = vmatpush.msra.mxu0 0.0
    %2308 = vmatpush.msra.mxu0 0.0
    %2309 = vmatpush.msra.mxu0 0.0
    %2310 = vmatpush.msra.mxu0 0.0
    %2311 = vmatpush.msra.mxu0 0.0
    %2312 = vmatpush.msra.mxu0 0.0
    %2313 = vmatpush.msra.mxu0 0.0
    %2314 = vmatpush.msra.mxu0 0.0
    %2315 = vmatpush.msra.mxu0 0.0
    %2316 = vmatpush.msra.mxu0 %v152
    %2317 = vmatpush.msra.mxu0 %v151
    %2318 = vmatpush.msra.mxu0 %v150
    %2319 = vmatpush.msra.mxu0 %v149
    %2320 = vmatmul.f32.gmra.mxu0 %v2135
    %v2321 = vpop.f32.mrf.mxu0
    %v2322 = vadd.f32 0.0, %v2321
    %2323 = vdwg.mxu0
    %v2325 = vrot.slane %v2322, 1
    %v2326 = vrot.slane %v2322, 2
    %2327 = vrot.lane.b32.xlu0 %v2325, 96
    %v2328 = vpop.permute.xlu0 %2327
    %2329 = vrot.lane.b32.xlu0 %v2326, 96
    %v2330 = vpop.permute.xlu0 %2329
    %v2333 = vadd.f32 %v129, %v2328
    %v2334 = vadd.f32 %v132, %v2330
    %v2335 = vxor.u32 %v2333, 2147483648
    %v2336 = vxor.u32 %v2334, 2147483648
    %v2337 = vmul.f32 %v2335, 1.442695
    %v2338 = vpow.pop %v2337
    %v2339 = vmul.f32 %v2336, 1.442695
    %v2340 = vpow.pop %v2339
    %v2341 = vadd.f32 %v2338, 1.0
    %v2342 = vadd.f32 %v2340, 1.0
    %v2343 = vrcp.pop %v2341
    %v2344 = vmul.f32 %v2341, %v2343
    %v2345 = vsub.f32 1.0, %v2344
    %v2346 = vmul.f32 %v2343, %v2345
    %v2347 = vadd.f32 %v2343, %v2346
    %vm2348 = vweird.f32 %v2341
    %vm2349 = vweird.f32 %v2343
    %vm2350 = vmor %vm2348, %vm2349
    %v2351 = vsel %vm2350, %v2343, %v2347
    %v2352 = vand.u32 2147483647, %v2341
    %vm2353 = vcmp.eq.f32.partialorder %v2352, 8.507059e+37
    %v2354 = vand.u32 %v2341, 2147483648
    %v2355 = vor.u32 1.1754944e-38, %v2354
    %v2356 = vsel %vm2353, %v2355, %v2351
    %v2357 = vmul.f32 1.0, %v2356
    %v2358 = vrcp.pop %v2342
    %v2359 = vmul.f32 %v2342, %v2358
    %v2360 = vsub.f32 1.0, %v2359
    %v2361 = vmul.f32 %v2358, %v2360
    %v2362 = vadd.f32 %v2358, %v2361
    %vm2363 = vweird.f32 %v2342
    %vm2364 = vweird.f32 %v2358
    %vm2365 = vmor %vm2363, %vm2364
    %v2366 = vsel %vm2365, %v2358, %v2362
    %v2367 = vand.u32 2147483647, %v2342
    %vm2368 = vcmp.eq.f32.partialorder %v2367, 8.507059e+37
    %v2369 = vand.u32 %v2342, 2147483648
    %v2370 = vor.u32 1.1754944e-38, %v2369
    %v2371 = vsel %vm2368, %v2370, %v2366
    %v2372 = vmul.f32 1.0, %v2371
    %v2375 = vrot.slane %v2114, 7
    %v2376 = vrot.slane %v2115, 7
    %v2379 = vmul.f32 %v2255, %v2375
    %v2380 = vmul.f32 %v2270, %v2376
    %2383 = vrot.lane.b32.xlu0 %v2302, 64
    %v2384 = vpop.permute.xlu0 %2383
    %2385 = vrot.lane.b32.xlu0 %v2303, 64
    %v2386 = vpop.permute.xlu0 %2385
    %v2389 = vmul.f32 %v2186, %v2384
    %v2390 = vmul.f32 %v2201, %v2386
    %2393 = vrot.lane.b32.xlu0 %v2389, 32
    %v2394 = vpop.permute.xlu0 %2393
    %2395 = vrot.lane.b32.xlu0 %v2390, 32
    %v2396 = vpop.permute.xlu0 %2395
    %v2399 = vadd.f32 %v2379, %v2394
    %v2400 = vadd.f32 %v2380, %v2396
    %v2401 = vtanh.pop %v2399
    %v2402 = vtanh.pop %v2400
    %2405 = vrot.lane.b32.xlu0 %v2401, 64
    %v2406 = vpop.permute.xlu0 %2405
    %2407 = vrot.lane.b32.xlu0 %v2402, 64
    %v2408 = vpop.permute.xlu0 %2407
    %v2411 = vmul.f32 %v2357, %v2406
    %v2412 = vmul.f32 %v2372, %v2408
    %vm2413 = vcmask 1040384
    %v2414 = vsel %vm2413, %v421, %v702
    %v2415 = vsel %vm2413, %v422, %v703
    %vm2416 = vcmask 1041408
    %v2417 = vsel %vm2416, %v2414, %v986
    %v2418 = vsel %vm2416, %v2415, %v987
    %vm2419 = vcmask 1042432
    %v2420 = vsel %vm2419, %v2417, %v1271
    %v2421 = vsel %vm2419, %v2418, %v1272
    %vm2422 = vcmask 1043456
    %v2423 = vsel %vm2422, %v2420, %v1556
    %v2424 = vsel %vm2422, %v2421, %v1557
    %vm2425 = vcmask 1044480
    %v2426 = vsel %vm2425, %v2423, %v1841
    %v2427 = vsel %vm2425, %v2424, %v1842
    %vm2428 = vcmask 1045504
    %v2429 = vsel %vm2428, %v2426, %v2126
    %v2430 = vsel %vm2428, %v2427, %v2127
    %vm2431 = vcmask 1046528
    %v2432 = vsel %vm2431, %v2429, %v2411
    %v2433 = vsel %vm2431, %v2430, %v2412
    %v2434 = vld [vmem:[%s4] sm:$0xff]
    %v2435 = vld [vmem:[%s4 + $0x8] sm:$0xff]
    %v2436 = vld [vmem:[%s4 + $0x10] sm:$0xff]
    %v2437 = vld [vmem:[%s4 + $0x18] sm:$0xff]
    %v2438 = vld [vmem:[%s6] sm:$0x1]
    %v2440 = vperm.slane %v2438, 0
    %2444 = vrot.lane.b32.xlu0 %v2432, 32
    %v2445 = vpop.permute.xlu0 %2444
    %2446 = vrot.lane.b32.xlu0 %v2433, 32
    %v2447 = vpop.permute.xlu0 %2446
    %v2448 = vsel %vm153, %v2445, 0
    %v2450 = vsel %vm153, %v2447, 0
    %2452 = vmatpush.msra.mxu0 0.0
    %2453 = vmatpush.msra.mxu0 0.0
    %2454 = vmatpush.msra.mxu0 0.0
    %2455 = vmatpush.msra.mxu0 0.0
    %2456 = vmatpush.msra.mxu0 0.0
    %2457 = vmatpush.msra.mxu0 0.0
    %2458 = vmatpush.msra.mxu0 0.0
    %2459 = vmatpush.msra.mxu0 0.0
    %2460 = vmatpush.msra.mxu0 0.0
    %2461 = vmatpush.msra.mxu0 0.0
    %2462 = vmatpush.msra.mxu0 0.0
    %2463 = vmatpush.msra.mxu0 0.0
    %2464 = vmatpush.msra.mxu0 %v2437
    %2465 = vmatpush.msra.mxu0 %v2436
    %2466 = vmatpush.msra.mxu0 %v2435
    %2467 = vmatpush.msra.mxu0 %v2434
    %2468 = vmatmul.f32.gmra.mxu0 %v2448
    %v2469 = vpop.f32.mrf.mxu0
    %v2470 = vadd.f32 %v2440, %v2469
    %2471 = vmatmul.f32.gmra.mxu0 %v2450
    %v2472 = vpop.f32.mrf.mxu0
    %v2473 = vadd.f32 %v2440, %v2472
    %2474 = vdwg.mxu0
    %v2475 = vld [vmem:[#allocation8] sm:$0xff]
    %v2476 = vld [vmem:[#allocation8 + $0x8] sm:$0xff]
    %v2477 = vld [vmem:[#allocation8 + $0x10] sm:$0xff]
    %v2478 = vld [vmem:[#allocation8 + $0x18] sm:$0xff]
    %s2479 = scalar_lea.vmem [#allocation8], 32
    %v2480 = vld [vmem:[%s2479] sm:$0xff]
    %v2481 = vld [vmem:[%s2479 + $0x8] sm:$0xff]
    %v2482 = vld [vmem:[%s2479 + $0x10] sm:$0xff]
    %v2483 = vld [vmem:[%s2479 + $0x18] sm:$0xff]
    %s2484 = scalar_lea.vmem [#allocation8], 64
    %v2485 = vld [vmem:[%s2484] sm:$0xff]
    %v2486 = vld [vmem:[%s2484 + $0x8] sm:$0xff]
    %v2487 = vld [vmem:[%s2484 + $0x10] sm:$0xff]
    %v2488 = vld [vmem:[%s2484 + $0x18] sm:$0xff]
    %s2489 = scalar_lea.vmem [#allocation8], 96
    %v2490 = vld [vmem:[%s2489] sm:$0xff]
    %v2491 = vld [vmem:[%s2489 + $0x8] sm:$0xff]
    %v2492 = vld [vmem:[%s2489 + $0x10] sm:$0xff]
    %v2493 = vld [vmem:[%s2489 + $0x18] sm:$0xff]
    %2494 = vmatpush.msra.mxu0 0.0
    %2495 = vmatpush.msra.mxu0 0.0
    %2496 = vmatpush.msra.mxu0 0.0
    %2497 = vmatpush.msra.mxu0 0.0
    %2498 = vmatpush.msra.mxu0 0.0
    %2499 = vmatpush.msra.mxu0 0.0
    %2500 = vmatpush.msra.mxu0 0.0
    %2501 = vmatpush.msra.mxu0 0.0
    %2502 = vmatpush.msra.mxu0 0.0
    %2503 = vmatpush.msra.mxu0 0.0
    %2504 = vmatpush.msra.mxu0 0.0
    %2505 = vmatpush.msra.mxu0 0.0
    %2506 = vmatpush.msra.mxu0 %v2478
    %2507 = vmatpush.msra.mxu0 %v2477
    %2508 = vmatpush.msra.mxu0 %v2476
    %2509 = vmatpush.msra.mxu0 %v2475
    %2510 = vmatmul.f32.gmra.mxu0 %v155
    %v2511 = vpop.f32.mrf.mxu0
    %v2512 = vadd.f32 0.0, %v2511
    %2513 = vdwg.mxu0
    %v2515 = vrot.slane %v2512, 1
    %v2518 = vadd.f32 %v2470, %v2512
    %v2519 = vadd.f32 %v2473, %v2515
    %v2520 = vxor.u32 %v2518, 2147483648
    %v2521 = vxor.u32 %v2519, 2147483648
    %v2522 = vmul.f32 %v2520, 1.442695
    %v2523 = vpow.pop %v2522
    %v2524 = vmul.f32 %v2521, 1.442695
    %v2525 = vpow.pop %v2524
    %v2526 = vadd.f32 %v2523, 1.0
    %v2527 = vadd.f32 %v2525, 1.0
    %v2528 = vrcp.pop %v2526
    %v2529 = vmul.f32 %v2526, %v2528
    %v2530 = vsub.f32 1.0, %v2529
    %v2531 = vmul.f32 %v2528, %v2530
    %v2532 = vadd.f32 %v2528, %v2531
    %vm2533 = vweird.f32 %v2526
    %vm2534 = vweird.f32 %v2528
    %vm2535 = vmor %vm2533, %vm2534
    %v2536 = vsel %vm2535, %v2528, %v2532
    %v2537 = vand.u32 2147483647, %v2526
    %vm2538 = vcmp.eq.f32.partialorder %v2537, 8.507059e+37
    %v2539 = vand.u32 %v2526, 2147483648
    %v2540 = vor.u32 1.1754944e-38, %v2539
    %v2541 = vsel %vm2538, %v2540, %v2536
    %v2542 = vmul.f32 1.0, %v2541
    %v2543 = vrcp.pop %v2527
    %v2544 = vmul.f32 %v2527, %v2543
    %v2545 = vsub.f32 1.0, %v2544
    %v2546 = vmul.f32 %v2543, %v2545
    %v2547 = vadd.f32 %v2543, %v2546
    %vm2548 = vweird.f32 %v2527
    %vm2549 = vweird.f32 %v2543
    %vm2550 = vmor %vm2548, %vm2549
    %v2551 = vsel %vm2550, %v2543, %v2547
    %v2552 = vand.u32 2147483647, %v2527
    %vm2553 = vcmp.eq.f32.partialorder %v2552, 8.507059e+37
    %v2554 = vand.u32 %v2527, 2147483648
    %v2555 = vor.u32 1.1754944e-38, %v2554
    %v2556 = vsel %vm2553, %v2555, %v2551
    %v2557 = vmul.f32 1.0, %v2556
    %2558 = vmatpush.msra.mxu0 0.0
    %2559 = vmatpush.msra.mxu0 0.0
    %2560 = vmatpush.msra.mxu0 0.0
    %2561 = vmatpush.msra.mxu0 0.0
    %2562 = vmatpush.msra.mxu0 0.0
    %2563 = vmatpush.msra.mxu0 0.0
    %2564 = vmatpush.msra.mxu0 0.0
    %2565 = vmatpush.msra.mxu0 0.0
    %2566 = vmatpush.msra.mxu0 0.0
    %2567 = vmatpush.msra.mxu0 0.0
    %2568 = vmatpush.msra.mxu0 0.0
    %2569 = vmatpush.msra.mxu0 0.0
    %2570 = vmatpush.msra.mxu0 %v2483
    %2571 = vmatpush.msra.mxu0 %v2482
    %2572 = vmatpush.msra.mxu0 %v2481
    %2573 = vmatpush.msra.mxu0 %v2480
    %2574 = vmatmul.f32.gmra.mxu0 %v155
    %v2575 = vpop.f32.mrf.mxu0
    %v2576 = vadd.f32 0.0, %v2575
    %2577 = vdwg.mxu0
    %v2579 = vrot.slane %v2576, 1
    %2580 = vrot.lane.b32.xlu0 %v2576, 32
    %v2581 = vpop.permute.xlu0 %2580
    %2582 = vrot.lane.b32.xlu0 %v2579, 32
    %v2583 = vpop.permute.xlu0 %2582
    %v2586 = vadd.f32 %v2470, %v2581
    %v2587 = vadd.f32 %v2473, %v2583
    %v2588 = vxor.u32 %v2586, 2147483648
    %v2589 = vxor.u32 %v2587, 2147483648
    %v2590 = vmul.f32 %v2588, 1.442695
    %v2591 = vpow.pop %v2590
    %v2592 = vmul.f32 %v2589, 1.442695
    %v2593 = vpow.pop %v2592
    %v2594 = vadd.f32 %v2591, 1.0
    %v2595 = vadd.f32 %v2593, 1.0
    %v2596 = vrcp.pop %v2594
    %v2597 = vmul.f32 %v2594, %v2596
    %v2598 = vsub.f32 1.0, %v2597
    %v2599 = vmul.f32 %v2596, %v2598
    %v2600 = vadd.f32 %v2596, %v2599
    %vm2601 = vweird.f32 %v2594
    %vm2602 = vweird.f32 %v2596
    %vm2603 = vmor %vm2601, %vm2602
    %v2604 = vsel %vm2603, %v2596, %v2600
    %v2605 = vand.u32 2147483647, %v2594
    %vm2606 = vcmp.eq.f32.partialorder %v2605, 8.507059e+37
    %v2607 = vand.u32 %v2594, 2147483648
    %v2608 = vor.u32 1.1754944e-38, %v2607
    %v2609 = vsel %vm2606, %v2608, %v2604
    %v2610 = vmul.f32 1.0, %v2609
    %v2611 = vrcp.pop %v2595
    %v2612 = vmul.f32 %v2595, %v2611
    %v2613 = vsub.f32 1.0, %v2612
    %v2614 = vmul.f32 %v2611, %v2613
    %v2615 = vadd.f32 %v2611, %v2614
    %vm2616 = vweird.f32 %v2595
    %vm2617 = vweird.f32 %v2611
    %vm2618 = vmor %vm2616, %vm2617
    %v2619 = vsel %vm2618, %v2611, %v2615
    %v2620 = vand.u32 2147483647, %v2595
    %vm2621 = vcmp.eq.f32.partialorder %v2620, 8.507059e+37
    %v2622 = vand.u32 %v2595, 2147483648
    %v2623 = vor.u32 1.1754944e-38, %v2622
    %v2624 = vsel %vm2621, %v2623, %v2619
    %v2625 = vmul.f32 1.0, %v2624
    %2626 = vmatpush.msra.mxu0 0.0
    %2627 = vmatpush.msra.mxu0 0.0
    %2628 = vmatpush.msra.mxu0 0.0
    %2629 = vmatpush.msra.mxu0 0.0
    %2630 = vmatpush.msra.mxu0 0.0
    %2631 = vmatpush.msra.mxu0 0.0
    %2632 = vmatpush.msra.mxu0 0.0
    %2633 = vmatpush.msra.mxu0 0.0
    %2634 = vmatpush.msra.mxu0 0.0
    %2635 = vmatpush.msra.mxu0 0.0
    %2636 = vmatpush.msra.mxu0 0.0
    %2637 = vmatpush.msra.mxu0 0.0
    %2638 = vmatpush.msra.mxu0 %v2488
    %2639 = vmatpush.msra.mxu0 %v2487
    %2640 = vmatpush.msra.mxu0 %v2486
    %2641 = vmatpush.msra.mxu0 %v2485
    %2642 = vmatmul.f32.gmra.mxu0 %v155
    %v2643 = vpop.f32.mrf.mxu0
    %v2644 = vadd.f32 0.0, %v2643
    %2645 = vdwg.mxu0
    %v2647 = vrot.slane %v2644, 1
    %2648 = vrot.lane.b32.xlu0 %v2644, 64
    %v2649 = vpop.permute.xlu0 %2648
    %2650 = vrot.lane.b32.xlu0 %v2647, 64
    %v2651 = vpop.permute.xlu0 %2650
    %v2654 = vadd.f32 %v2470, %v2649
    %v2655 = vadd.f32 %v2473, %v2651
    %v2656 = vtanh.pop %v2654
    %v2657 = vtanh.pop %v2655
    %2658 = vmatpush.msra.mxu0 0.0
    %2659 = vmatpush.msra.mxu0 0.0
    %2660 = vmatpush.msra.mxu0 0.0
    %2661 = vmatpush.msra.mxu0 0.0
    %2662 = vmatpush.msra.mxu0 0.0
    %2663 = vmatpush.msra.mxu0 0.0
    %2664 = vmatpush.msra.mxu0 0.0
    %2665 = vmatpush.msra.mxu0 0.0
    %2666 = vmatpush.msra.mxu0 0.0
    %2667 = vmatpush.msra.mxu0 0.0
    %2668 = vmatpush.msra.mxu0 0.0
    %2669 = vmatpush.msra.mxu0 0.0
    %2670 = vmatpush.msra.mxu0 %v2493
    %2671 = vmatpush.msra.mxu0 %v2492
    %2672 = vmatpush.msra.mxu0 %v2491
    %2673 = vmatpush.msra.mxu0 %v2490
    %2674 = vmatmul.f32.gmra.mxu0 %v155
    %v2675 = vpop.f32.mrf.mxu0
    %v2676 = vadd.f32 0.0, %v2675
    %2677 = vdwg.mxu0
    %v2679 = vrot.slane %v2676, 1
    %2680 = vrot.lane.b32.xlu0 %v2676, 96
    %v2681 = vpop.permute.xlu0 %2680
    %2682 = vrot.lane.b32.xlu0 %v2679, 96
    %v2683 = vpop.permute.xlu0 %2682
    %v2686 = vadd.f32 %v2470, %v2681
    %v2687 = vadd.f32 %v2473, %v2683
    %v2688 = vxor.u32 %v2686, 2147483648
    %v2689 = vxor.u32 %v2687, 2147483648
    %v2690 = vmul.f32 %v2688, 1.442695
    %v2691 = vpow.pop %v2690
    %v2692 = vmul.f32 %v2689, 1.442695
    %v2693 = vpow.pop %v2692
    %v2694 = vadd.f32 %v2691, 1.0
    %v2695 = vadd.f32 %v2693, 1.0
    %v2696 = vrcp.pop %v2694
    %v2697 = vmul.f32 %v2694, %v2696
    %v2698 = vsub.f32 1.0, %v2697
    %v2699 = vmul.f32 %v2696, %v2698
    %v2700 = vadd.f32 %v2696, %v2699
    %vm2701 = vweird.f32 %v2694
    %vm2702 = vweird.f32 %v2696
    %vm2703 = vmor %vm2701, %vm2702
    %v2704 = vsel %vm2703, %v2696, %v2700
    %v2705 = vand.u32 2147483647, %v2694
    %vm2706 = vcmp.eq.f32.partialorder %v2705, 8.507059e+37
    %v2707 = vand.u32 %v2694, 2147483648
    %v2708 = vor.u32 1.1754944e-38, %v2707
    %v2709 = vsel %vm2706, %v2708, %v2704
    %v2710 = vmul.f32 1.0, %v2709
    %v2711 = vrcp.pop %v2695
    %v2712 = vmul.f32 %v2695, %v2711
    %v2713 = vsub.f32 1.0, %v2712
    %v2714 = vmul.f32 %v2711, %v2713
    %v2715 = vadd.f32 %v2711, %v2714
    %vm2716 = vweird.f32 %v2695
    %vm2717 = vweird.f32 %v2711
    %vm2718 = vmor %vm2716, %vm2717
    %v2719 = vsel %vm2718, %v2711, %v2715
    %v2720 = vand.u32 2147483647, %v2695
    %vm2721 = vcmp.eq.f32.partialorder %v2720, 8.507059e+37
    %v2722 = vand.u32 %v2695, 2147483648
    %v2723 = vor.u32 1.1754944e-38, %v2722
    %v2724 = vsel %vm2721, %v2723, %v2719
    %v2725 = vmul.f32 1.0, %v2724
    %v2726 = vmul.f32 %v2610, 0.0
    %v2727 = vmul.f32 %v2625, 0.0
    %2730 = vrot.lane.b32.xlu0 %v2656, 64
    %v2731 = vpop.permute.xlu0 %2730
    %2732 = vrot.lane.b32.xlu0 %v2657, 64
    %v2733 = vpop.permute.xlu0 %2732
    %v2736 = vmul.f32 %v2542, %v2731
    %v2737 = vmul.f32 %v2557, %v2733
    %2740 = vrot.lane.b32.xlu0 %v2736, 32
    %v2741 = vpop.permute.xlu0 %2740
    %2742 = vrot.lane.b32.xlu0 %v2737, 32
    %v2743 = vpop.permute.xlu0 %2742
    %v2746 = vadd.f32 %v2726, %v2741
    %v2747 = vadd.f32 %v2727, %v2743
    %v2748 = vtanh.pop %v2746
    %v2749 = vtanh.pop %v2747
    %2752 = vrot.lane.b32.xlu0 %v2748, 64
    %v2753 = vpop.permute.xlu0 %2752
    %2754 = vrot.lane.b32.xlu0 %v2749, 64
    %v2755 = vpop.permute.xlu0 %2754
    %v2758 = vmul.f32 %v2710, %v2753
    %v2759 = vmul.f32 %v2725, %v2755
    %v2762 = vrot.slane %v2759, 7
    %v2763 = vsel %vm426, %v2762, %v2758
    %2764 = vrot.lane.b32.xlu0 %v2763, 32
    %v2765 = vpop.permute.xlu0 %2764
    %v2766 = vsel %vm153, %v2765, 0
    %2768 = vmatpush.msra.mxu0 0.0
    %2769 = vmatpush.msra.mxu0 0.0
    %2770 = vmatpush.msra.mxu0 0.0
    %2771 = vmatpush.msra.mxu0 0.0
    %2772 = vmatpush.msra.mxu0 0.0
    %2773 = vmatpush.msra.mxu0 0.0
    %2774 = vmatpush.msra.mxu0 0.0
    %2775 = vmatpush.msra.mxu0 0.0
    %2776 = vmatpush.msra.mxu0 0.0
    %2777 = vmatpush.msra.mxu0 0.0
    %2778 = vmatpush.msra.mxu0 0.0
    %2779 = vmatpush.msra.mxu0 0.0
    %2780 = vmatpush.msra.mxu0 %v2478
    %2781 = vmatpush.msra.mxu0 %v2477
    %2782 = vmatpush.msra.mxu0 %v2476
    %2783 = vmatpush.msra.mxu0 %v2475
    %2784 = vmatmul.f32.gmra.mxu0 %v2766
    %v2785 = vpop.f32.mrf.mxu0
    %v2786 = vadd.f32 0.0, %v2785
    %2787 = vdwg.mxu0
    %v2789 = vrot.slane %v2786, 7
    %v2792 = vadd.f32 %v2470, %v2789
    %v2793 = vadd.f32 %v2473, %v2786
    %v2794 = vxor.u32 %v2792, 2147483648
    %v2795 = vxor.u32 %v2793, 2147483648
    %v2796 = vmul.f32 %v2794, 1.442695
    %v2797 = vpow.pop %v2796
    %v2798 = vmul.f32 %v2795, 1.442695
    %v2799 = vpow.pop %v2798
    %v2800 = vadd.f32 %v2797, 1.0
    %v2801 = vadd.f32 %v2799, 1.0
    %v2802 = vrcp.pop %v2800
    %v2803 = vmul.f32 %v2800, %v2802
    %v2804 = vsub.f32 1.0, %v2803
    %v2805 = vmul.f32 %v2802, %v2804
    %v2806 = vadd.f32 %v2802, %v2805
    %vm2807 = vweird.f32 %v2800
    %vm2808 = vweird.f32 %v2802
    %vm2809 = vmor %vm2807, %vm2808
    %v2810 = vsel %vm2809, %v2802, %v2806
    %v2811 = vand.u32 2147483647, %v2800
    %vm2812 = vcmp.eq.f32.partialorder %v2811, 8.507059e+37
    %v2813 = vand.u32 %v2800, 2147483648
    %v2814 = vor.u32 1.1754944e-38, %v2813
    %v2815 = vsel %vm2812, %v2814, %v2810
    %v2816 = vmul.f32 1.0, %v2815
    %v2817 = vrcp.pop %v2801
    %v2818 = vmul.f32 %v2801, %v2817
    %v2819 = vsub.f32 1.0, %v2818
    %v2820 = vmul.f32 %v2817, %v2819
    %v2821 = vadd.f32 %v2817, %v2820
    %vm2822 = vweird.f32 %v2801
    %vm2823 = vweird.f32 %v2817
    %vm2824 = vmor %vm2822, %vm2823
    %v2825 = vsel %vm2824, %v2817, %v2821
    %v2826 = vand.u32 2147483647, %v2801
    %vm2827 = vcmp.eq.f32.partialorder %v2826, 8.507059e+37
    %v2828 = vand.u32 %v2801, 2147483648
    %v2829 = vor.u32 1.1754944e-38, %v2828
    %v2830 = vsel %vm2827, %v2829, %v2825
    %v2831 = vmul.f32 1.0, %v2830
    %2832 = vmatpush.msra.mxu0 0.0
    %2833 = vmatpush.msra.mxu0 0.0
    %2834 = vmatpush.msra.mxu0 0.0
    %2835 = vmatpush.msra.mxu0 0.0
    %2836 = vmatpush.msra.mxu0 0.0
    %2837 = vmatpush.msra.mxu0 0.0
    %2838 = vmatpush.msra.mxu0 0.0
    %2839 = vmatpush.msra.mxu0 0.0
    %2840 = vmatpush.msra.mxu0 0.0
    %2841 = vmatpush.msra.mxu0 0.0
    %2842 = vmatpush.msra.mxu0 0.0
    %2843 = vmatpush.msra.mxu0 0.0
    %2844 = vmatpush.msra.mxu0 %v2483
    %2845 = vmatpush.msra.mxu0 %v2482
    %2846 = vmatpush.msra.mxu0 %v2481
    %2847 = vmatpush.msra.mxu0 %v2480
    %2848 = vmatmul.f32.gmra.mxu0 %v2766
    %v2849 = vpop.f32.mrf.mxu0
    %v2850 = vadd.f32 0.0, %v2849
    %2851 = vdwg.mxu0
    %v2853 = vrot.slane %v2850, 7
    %2854 = vrot.lane.b32.xlu0 %v2853, 32
    %v2855 = vpop.permute.xlu0 %2854
    %2856 = vrot.lane.b32.xlu0 %v2850, 32
    %v2857 = vpop.permute.xlu0 %2856
    %v2860 = vadd.f32 %v2470, %v2855
    %v2861 = vadd.f32 %v2473, %v2857
    %v2862 = vxor.u32 %v2860, 2147483648
    %v2863 = vxor.u32 %v2861, 2147483648
    %v2864 = vmul.f32 %v2862, 1.442695
    %v2865 = vpow.pop %v2864
    %v2866 = vmul.f32 %v2863, 1.442695
    %v2867 = vpow.pop %v2866
    %v2868 = vadd.f32 %v2865, 1.0
    %v2869 = vadd.f32 %v2867, 1.0
    %v2870 = vrcp.pop %v2868
    %v2871 = vmul.f32 %v2868, %v2870
    %v2872 = vsub.f32 1.0, %v2871
    %v2873 = vmul.f32 %v2870, %v2872
    %v2874 = vadd.f32 %v2870, %v2873
    %vm2875 = vweird.f32 %v2868
    %vm2876 = vweird.f32 %v2870
    %vm2877 = vmor %vm2875, %vm2876
    %v2878 = vsel %vm2877, %v2870, %v2874
    %v2879 = vand.u32 2147483647, %v2868
    %vm2880 = vcmp.eq.f32.partialorder %v2879, 8.507059e+37
    %v2881 = vand.u32 %v2868, 2147483648
    %v2882 = vor.u32 1.1754944e-38, %v2881
    %v2883 = vsel %vm2880, %v2882, %v2878
    %v2884 = vmul.f32 1.0, %v2883
    %v2885 = vrcp.pop %v2869
    %v2886 = vmul.f32 %v2869, %v2885
    %v2887 = vsub.f32 1.0, %v2886
    %v2888 = vmul.f32 %v2885, %v2887
    %v2889 = vadd.f32 %v2885, %v2888
    %vm2890 = vweird.f32 %v2869
    %vm2891 = vweird.f32 %v2885
    %vm2892 = vmor %vm2890, %vm2891
    %v2893 = vsel %vm2892, %v2885, %v2889
    %v2894 = vand.u32 2147483647, %v2869
    %vm2895 = vcmp.eq.f32.partialorder %v2894, 8.507059e+37
    %v2896 = vand.u32 %v2869, 2147483648
    %v2897 = vor.u32 1.1754944e-38, %v2896
    %v2898 = vsel %vm2895, %v2897, %v2893
    %v2899 = vmul.f32 1.0, %v2898
    %2900 = vmatpush.msra.mxu0 0.0
    %2901 = vmatpush.msra.mxu0 0.0
    %2902 = vmatpush.msra.mxu0 0.0
    %2903 = vmatpush.msra.mxu0 0.0
    %2904 = vmatpush.msra.mxu0 0.0
    %2905 = vmatpush.msra.mxu0 0.0
    %2906 = vmatpush.msra.mxu0 0.0
    %2907 = vmatpush.msra.mxu0 0.0
    %2908 = vmatpush.msra.mxu0 0.0
    %2909 = vmatpush.msra.mxu0 0.0
    %2910 = vmatpush.msra.mxu0 0.0
    %2911 = vmatpush.msra.mxu0 0.0
    %2912 = vmatpush.msra.mxu0 %v2488
    %2913 = vmatpush.msra.mxu0 %v2487
    %2914 = vmatpush.msra.mxu0 %v2486
    %2915 = vmatpush.msra.mxu0 %v2485
    %2916 = vmatmul.f32.gmra.mxu0 %v2766
    %v2917 = vpop.f32.mrf.mxu0
    %v2918 = vadd.f32 0.0, %v2917
    %2919 = vdwg.mxu0
    %v2921 = vrot.slane %v2918, 7
    %2922 = vrot.lane.b32.xlu0 %v2921, 64
    %v2923 = vpop.permute.xlu0 %2922
    %2924 = vrot.lane.b32.xlu0 %v2918, 64
    %v2925 = vpop.permute.xlu0 %2924
    %v2928 = vadd.f32 %v2470, %v2923
    %v2929 = vadd.f32 %v2473, %v2925
    %v2930 = vtanh.pop %v2928
    %v2931 = vtanh.pop %v2929
    %2932 = vmatpush.msra.mxu0 0.0
    %2933 = vmatpush.msra.mxu0 0.0
    %2934 = vmatpush.msra.mxu0 0.0
    %2935 = vmatpush.msra.mxu0 0.0
    %2936 = vmatpush.msra.mxu0 0.0
    %2937 = vmatpush.msra.mxu0 0.0
    %2938 = vmatpush.msra.mxu0 0.0
    %2939 = vmatpush.msra.mxu0 0.0
    %2940 = vmatpush.msra.mxu0 0.0
    %2941 = vmatpush.msra.mxu0 0.0
    %2942 = vmatpush.msra.mxu0 0.0
    %2943 = vmatpush.msra.mxu0 0.0
    %2944 = vmatpush.msra.mxu0 %v2493
    %2945 = vmatpush.msra.mxu0 %v2492
    %2946 = vmatpush.msra.mxu0 %v2491
    %2947 = vmatpush.msra.mxu0 %v2490
    %2948 = vmatmul.f32.gmra.mxu0 %v2766
    %v2949 = vpop.f32.mrf.mxu0
    %v2950 = vadd.f32 0.0, %v2949
    %2951 = vdwg.mxu0
    %v2953 = vrot.slane %v2950, 7
    %2954 = vrot.lane.b32.xlu0 %v2953, 96
    %v2955 = vpop.permute.xlu0 %2954
    %2956 = vrot.lane.b32.xlu0 %v2950, 96
    %v2957 = vpop.permute.xlu0 %2956
    %v2960 = vadd.f32 %v2470, %v2955
    %v2961 = vadd.f32 %v2473, %v2957
    %v2962 = vxor.u32 %v2960, 2147483648
    %v2963 = vxor.u32 %v2961, 2147483648
    %v2964 = vmul.f32 %v2962, 1.442695
    %v2965 = vpow.pop %v2964
    %v2966 = vmul.f32 %v2963, 1.442695
    %v2967 = vpow.pop %v2966
    %v2968 = vadd.f32 %v2965, 1.0
    %v2969 = vadd.f32 %v2967, 1.0
    %v2970 = vrcp.pop %v2968
    %v2971 = vmul.f32 %v2968, %v2970
    %v2972 = vsub.f32 1.0, %v2971
    %v2973 = vmul.f32 %v2970, %v2972
    %v2974 = vadd.f32 %v2970, %v2973
    %vm2975 = vweird.f32 %v2968
    %vm2976 = vweird.f32 %v2970
    %vm2977 = vmor %vm2975, %vm2976
    %v2978 = vsel %vm2977, %v2970, %v2974
    %v2979 = vand.u32 2147483647, %v2968
    %vm2980 = vcmp.eq.f32.partialorder %v2979, 8.507059e+37
    %v2981 = vand.u32 %v2968, 2147483648
    %v2982 = vor.u32 1.1754944e-38, %v2981
    %v2983 = vsel %vm2980, %v2982, %v2978
    %v2984 = vmul.f32 1.0, %v2983
    %v2985 = vrcp.pop %v2969
    %v2986 = vmul.f32 %v2969, %v2985
    %v2987 = vsub.f32 1.0, %v2986
    %v2988 = vmul.f32 %v2985, %v2987
    %v2989 = vadd.f32 %v2985, %v2988
    %vm2990 = vweird.f32 %v2969
    %vm2991 = vweird.f32 %v2985
    %vm2992 = vmor %vm2990, %vm2991
    %v2993 = vsel %vm2992, %v2985, %v2989
    %v2994 = vand.u32 2147483647, %v2969
    %vm2995 = vcmp.eq.f32.partialorder %v2994, 8.507059e+37
    %v2996 = vand.u32 %v2969, 2147483648
    %v2997 = vor.u32 1.1754944e-38, %v2996
    %v2998 = vsel %vm2995, %v2997, %v2993
    %v2999 = vmul.f32 1.0, %v2998
    %v3002 = vrot.slane %v2746, 7
    %v3003 = vrot.slane %v2747, 7
    %v3006 = vmul.f32 %v2884, %v3002
    %v3007 = vmul.f32 %v2899, %v3003
    %3010 = vrot.lane.b32.xlu0 %v2930, 64
    %v3011 = vpop.permute.xlu0 %3010
    %3012 = vrot.lane.b32.xlu0 %v2931, 64
    %v3013 = vpop.permute.xlu0 %3012
    %v3016 = vmul.f32 %v2816, %v3011
    %v3017 = vmul.f32 %v2831, %v3013
    %3020 = vrot.lane.b32.xlu0 %v3016, 32
    %v3021 = vpop.permute.xlu0 %3020
    %3022 = vrot.lane.b32.xlu0 %v3017, 32
    %v3023 = vpop.permute.xlu0 %3022
    %v3026 = vadd.f32 %v3006, %v3021
    %v3027 = vadd.f32 %v3007, %v3023
    %v3028 = vtanh.pop %v3026
    %v3029 = vtanh.pop %v3027
    %3032 = vrot.lane.b32.xlu0 %v3028, 64
    %v3033 = vpop.permute.xlu0 %3032
    %3034 = vrot.lane.b32.xlu0 %v3029, 64
    %v3035 = vpop.permute.xlu0 %3034
    %v3038 = vmul.f32 %v2984, %v3033
    %v3039 = vmul.f32 %v2999, %v3035
    %v3042 = vrot.slane %v3038, 1
    %v3043 = vsel %vm426, %v3039, %v3042
    %3044 = vrot.lane.b32.xlu0 %v3043, 32
    %v3045 = vpop.permute.xlu0 %3044
    %v3046 = vsel %vm153, %v3045, 0
    %3048 = vmatpush.msra.mxu0 0.0
    %3049 = vmatpush.msra.mxu0 0.0
    %3050 = vmatpush.msra.mxu0 0.0
    %3051 = vmatpush.msra.mxu0 0.0
    %3052 = vmatpush.msra.mxu0 0.0
    %3053 = vmatpush.msra.mxu0 0.0
    %3054 = vmatpush.msra.mxu0 0.0
    %3055 = vmatpush.msra.mxu0 0.0
    %3056 = vmatpush.msra.mxu0 0.0
    %3057 = vmatpush.msra.mxu0 0.0
    %3058 = vmatpush.msra.mxu0 0.0
    %3059 = vmatpush.msra.mxu0 0.0
    %3060 = vmatpush.msra.mxu0 %v2478
    %3061 = vmatpush.msra.mxu0 %v2477
    %3062 = vmatpush.msra.mxu0 %v2476
    %3063 = vmatpush.msra.mxu0 %v2475
    %3064 = vmatmul.f32.gmra.mxu0 %v3046
    %v3065 = vpop.f32.mrf.mxu0
    %v3066 = vadd.f32 0.0, %v3065
    %3067 = vdwg.mxu0
    %v3069 = vrot.slane %v3066, 6
    %v3070 = vrot.slane %v3066, 7
    %v3073 = vadd.f32 %v2470, %v3069
    %v3074 = vadd.f32 %v2473, %v3070
    %v3075 = vxor.u32 %v3073, 2147483648
    %v3076 = vxor.u32 %v3074, 2147483648
    %v3077 = vmul.f32 %v3075, 1.442695
    %v3078 = vpow.pop %v3077
    %v3079 = vmul.f32 %v3076, 1.442695
    %v3080 = vpow.pop %v3079
    %v3081 = vadd.f32 %v3078, 1.0
    %v3082 = vadd.f32 %v3080, 1.0
    %v3083 = vrcp.pop %v3081
    %v3084 = vmul.f32 %v3081, %v3083
    %v3085 = vsub.f32 1.0, %v3084
    %v3086 = vmul.f32 %v3083, %v3085
    %v3087 = vadd.f32 %v3083, %v3086
    %vm3088 = vweird.f32 %v3081
    %vm3089 = vweird.f32 %v3083
    %vm3090 = vmor %vm3088, %vm3089
    %v3091 = vsel %vm3090, %v3083, %v3087
    %v3092 = vand.u32 2147483647, %v3081
    %vm3093 = vcmp.eq.f32.partialorder %v3092, 8.507059e+37
    %v3094 = vand.u32 %v3081, 2147483648
    %v3095 = vor.u32 1.1754944e-38, %v3094
    %v3096 = vsel %vm3093, %v3095, %v3091
    %v3097 = vmul.f32 1.0, %v3096
    %v3098 = vrcp.pop %v3082
    %v3099 = vmul.f32 %v3082, %v3098
    %v3100 = vsub.f32 1.0, %v3099
    %v3101 = vmul.f32 %v3098, %v3100
    %v3102 = vadd.f32 %v3098, %v3101
    %vm3103 = vweird.f32 %v3082
    %vm3104 = vweird.f32 %v3098
    %vm3105 = vmor %vm3103, %vm3104
    %v3106 = vsel %vm3105, %v3098, %v3102
    %v3107 = vand.u32 2147483647, %v3082
    %vm3108 = vcmp.eq.f32.partialorder %v3107, 8.507059e+37
    %v3109 = vand.u32 %v3082, 2147483648
    %v3110 = vor.u32 1.1754944e-38, %v3109
    %v3111 = vsel %vm3108, %v3110, %v3106
    %v3112 = vmul.f32 1.0, %v3111
    %3113 = vmatpush.msra.mxu0 0.0
    %3114 = vmatpush.msra.mxu0 0.0
    %3115 = vmatpush.msra.mxu0 0.0
    %3116 = vmatpush.msra.mxu0 0.0
    %3117 = vmatpush.msra.mxu0 0.0
    %3118 = vmatpush.msra.mxu0 0.0
    %3119 = vmatpush.msra.mxu0 0.0
    %3120 = vmatpush.msra.mxu0 0.0
    %3121 = vmatpush.msra.mxu0 0.0
    %3122 = vmatpush.msra.mxu0 0.0
    %3123 = vmatpush.msra.mxu0 0.0
    %3124 = vmatpush.msra.mxu0 0.0
    %3125 = vmatpush.msra.mxu0 %v2483
    %3126 = vmatpush.msra.mxu0 %v2482
    %3127 = vmatpush.msra.mxu0 %v2481
    %3128 = vmatpush.msra.mxu0 %v2480
    %3129 = vmatmul.f32.gmra.mxu0 %v3046
    %v3130 = vpop.f32.mrf.mxu0
    %v3131 = vadd.f32 0.0, %v3130
    %3132 = vdwg.mxu0
    %v3134 = vrot.slane %v3131, 6
    %v3135 = vrot.slane %v3131, 7
    %3136 = vrot.lane.b32.xlu0 %v3134, 32
    %v3137 = vpop.permute.xlu0 %3136
    %3138 = vrot.lane.b32.xlu0 %v3135, 32
    %v3139 = vpop.permute.xlu0 %3138
    %v3142 = vadd.f32 %v2470, %v3137
    %v3143 = vadd.f32 %v2473, %v3139
    %v3144 = vxor.u32 %v3142, 2147483648
    %v3145 = vxor.u32 %v3143, 2147483648
    %v3146 = vmul.f32 %v3144, 1.442695
    %v3147 = vpow.pop %v3146
    %v3148 = vmul.f32 %v3145, 1.442695
    %v3149 = vpow.pop %v3148
    %v3150 = vadd.f32 %v3147, 1.0
    %v3151 = vadd.f32 %v3149, 1.0
    %v3152 = vrcp.pop %v3150
    %v3153 = vmul.f32 %v3150, %v3152
    %v3154 = vsub.f32 1.0, %v3153
    %v3155 = vmul.f32 %v3152, %v3154
    %v3156 = vadd.f32 %v3152, %v3155
    %vm3157 = vweird.f32 %v3150
    %vm3158 = vweird.f32 %v3152
    %vm3159 = vmor %vm3157, %vm3158
    %v3160 = vsel %vm3159, %v3152, %v3156
    %v3161 = vand.u32 2147483647, %v3150
    %vm3162 = vcmp.eq.f32.partialorder %v3161, 8.507059e+37
    %v3163 = vand.u32 %v3150, 2147483648
    %v3164 = vor.u32 1.1754944e-38, %v3163
    %v3165 = vsel %vm3162, %v3164, %v3160
    %v3166 = vmul.f32 1.0, %v3165
    %v3167 = vrcp.pop %v3151
    %v3168 = vmul.f32 %v3151, %v3167
    %v3169 = vsub.f32 1.0, %v3168
    %v3170 = vmul.f32 %v3167, %v3169
    %v3171 = vadd.f32 %v3167, %v3170
    %vm3172 = vweird.f32 %v3151
    %vm3173 = vweird.f32 %v3167
    %vm3174 = vmor %vm3172, %vm3173
    %v3175 = vsel %vm3174, %v3167, %v3171
    %v3176 = vand.u32 2147483647, %v3151
    %vm3177 = vcmp.eq.f32.partialorder %v3176, 8.507059e+37
    %v3178 = vand.u32 %v3151, 2147483648
    %v3179 = vor.u32 1.1754944e-38, %v3178
    %v3180 = vsel %vm3177, %v3179, %v3175
    %v3181 = vmul.f32 1.0, %v3180
    %3182 = vmatpush.msra.mxu0 0.0
    %3183 = vmatpush.msra.mxu0 0.0
    %3184 = vmatpush.msra.mxu0 0.0
    %3185 = vmatpush.msra.mxu0 0.0
    %3186 = vmatpush.msra.mxu0 0.0
    %3187 = vmatpush.msra.mxu0 0.0
    %3188 = vmatpush.msra.mxu0 0.0
    %3189 = vmatpush.msra.mxu0 0.0
    %3190 = vmatpush.msra.mxu0 0.0
    %3191 = vmatpush.msra.mxu0 0.0
    %3192 = vmatpush.msra.mxu0 0.0
    %3193 = vmatpush.msra.mxu0 0.0
    %3194 = vmatpush.msra.mxu0 %v2488
    %3195 = vmatpush.msra.mxu0 %v2487
    %3196 = vmatpush.msra.mxu0 %v2486
    %3197 = vmatpush.msra.mxu0 %v2485
    %3198 = vmatmul.f32.gmra.mxu0 %v3046
    %v3199 = vpop.f32.mrf.mxu0
    %v3200 = vadd.f32 0.0, %v3199
    %3201 = vdwg.mxu0
    %v3203 = vrot.slane %v3200, 6
    %v3204 = vrot.slane %v3200, 7
    %3205 = vrot.lane.b32.xlu0 %v3203, 64
    %v3206 = vpop.permute.xlu0 %3205
    %3207 = vrot.lane.b32.xlu0 %v3204, 64
    %v3208 = vpop.permute.xlu0 %3207
    %v3211 = vadd.f32 %v2470, %v3206
    %v3212 = vadd.f32 %v2473, %v3208
    %v3213 = vtanh.pop %v3211
    %v3214 = vtanh.pop %v3212
    %3215 = vmatpush.msra.mxu0 0.0
    %3216 = vmatpush.msra.mxu0 0.0
    %3217 = vmatpush.msra.mxu0 0.0
    %3218 = vmatpush.msra.mxu0 0.0
    %3219 = vmatpush.msra.mxu0 0.0
    %3220 = vmatpush.msra.mxu0 0.0
    %3221 = vmatpush.msra.mxu0 0.0
    %3222 = vmatpush.msra.mxu0 0.0
    %3223 = vmatpush.msra.mxu0 0.0
    %3224 = vmatpush.msra.mxu0 0.0
    %3225 = vmatpush.msra.mxu0 0.0
    %3226 = vmatpush.msra.mxu0 0.0
    %3227 = vmatpush.msra.mxu0 %v2493
    %3228 = vmatpush.msra.mxu0 %v2492
    %3229 = vmatpush.msra.mxu0 %v2491
    %3230 = vmatpush.msra.mxu0 %v2490
    %3231 = vmatmul.f32.gmra.mxu0 %v3046
    %v3232 = vpop.f32.mrf.mxu0
    %v3233 = vadd.f32 0.0, %v3232
    %3234 = vdwg.mxu0
    %v3236 = vrot.slane %v3233, 6
    %v3237 = vrot.slane %v3233, 7
    %3238 = vrot.lane.b32.xlu0 %v3236, 96
    %v3239 = vpop.permute.xlu0 %3238
    %3240 = vrot.lane.b32.xlu0 %v3237, 96
    %v3241 = vpop.permute.xlu0 %3240
    %v3244 = vadd.f32 %v2470, %v3239
    %v3245 = vadd.f32 %v2473, %v3241
    %v3246 = vxor.u32 %v3244, 2147483648
    %v3247 = vxor.u32 %v3245, 2147483648
    %v3248 = vmul.f32 %v3246, 1.442695
    %v3249 = vpow.pop %v3248
    %v3250 = vmul.f32 %v3247, 1.442695
    %v3251 = vpow.pop %v3250
    %v3252 = vadd.f32 %v3249, 1.0
    %v3253 = vadd.f32 %v3251, 1.0
    %v3254 = vrcp.pop %v3252
    %v3255 = vmul.f32 %v3252, %v3254
    %v3256 = vsub.f32 1.0, %v3255
    %v3257 = vmul.f32 %v3254, %v3256
    %v3258 = vadd.f32 %v3254, %v3257
    %vm3259 = vweird.f32 %v3252
    %vm3260 = vweird.f32 %v3254
    %vm3261 = vmor %vm3259, %vm3260
    %v3262 = vsel %vm3261, %v3254, %v3258
    %v3263 = vand.u32 2147483647, %v3252
    %vm3264 = vcmp.eq.f32.partialorder %v3263, 8.507059e+37
    %v3265 = vand.u32 %v3252, 2147483648
    %v3266 = vor.u32 1.1754944e-38, %v3265
    %v3267 = vsel %vm3264, %v3266, %v3262
    %v3268 = vmul.f32 1.0, %v3267
    %v3269 = vrcp.pop %v3253
    %v3270 = vmul.f32 %v3253, %v3269
    %v3271 = vsub.f32 1.0, %v3270
    %v3272 = vmul.f32 %v3269, %v3271
    %v3273 = vadd.f32 %v3269, %v3272
    %vm3274 = vweird.f32 %v3253
    %vm3275 = vweird.f32 %v3269
    %vm3276 = vmor %vm3274, %vm3275
    %v3277 = vsel %vm3276, %v3269, %v3273
    %v3278 = vand.u32 2147483647, %v3253
    %vm3279 = vcmp.eq.f32.partialorder %v3278, 8.507059e+37
    %v3280 = vand.u32 %v3253, 2147483648
    %v3281 = vor.u32 1.1754944e-38, %v3280
    %v3282 = vsel %vm3279, %v3281, %v3277
    %v3283 = vmul.f32 1.0, %v3282
    %v3286 = vrot.slane %v3026, 7
    %v3287 = vrot.slane %v3027, 7
    %v3290 = vmul.f32 %v3166, %v3286
    %v3291 = vmul.f32 %v3181, %v3287
    %3294 = vrot.lane.b32.xlu0 %v3213, 64
    %v3295 = vpop.permute.xlu0 %3294
    %3296 = vrot.lane.b32.xlu0 %v3214, 64
    %v3297 = vpop.permute.xlu0 %3296
    %v3300 = vmul.f32 %v3097, %v3295
    %v3301 = vmul.f32 %v3112, %v3297
    %3304 = vrot.lane.b32.xlu0 %v3300, 32
    %v3305 = vpop.permute.xlu0 %3304
    %3306 = vrot.lane.b32.xlu0 %v3301, 32
    %v3307 = vpop.permute.xlu0 %3306
    %v3310 = vadd.f32 %v3290, %v3305
    %v3311 = vadd.f32 %v3291, %v3307
    %v3312 = vtanh.pop %v3310
    %v3313 = vtanh.pop %v3311
    %3316 = vrot.lane.b32.xlu0 %v3312, 64
    %v3317 = vpop.permute.xlu0 %3316
    %3318 = vrot.lane.b32.xlu0 %v3313, 64
    %v3319 = vpop.permute.xlu0 %3318
    %v3322 = vmul.f32 %v3268, %v3317
    %v3323 = vmul.f32 %v3283, %v3319
    %v3326 = vrot.slane %v3322, 2
    %v3327 = vrot.slane %v3323, 1
    %v3328 = vsel %vm426, %v3327, %v3326
    %3329 = vrot.lane.b32.xlu0 %v3328, 32
    %v3330 = vpop.permute.xlu0 %3329
    %v3331 = vsel %vm153, %v3330, 0
    %3333 = vmatpush.msra.mxu0 0.0
    %3334 = vmatpush.msra.mxu0 0.0
    %3335 = vmatpush.msra.mxu0 0.0
    %3336 = vmatpush.msra.mxu0 0.0
    %3337 = vmatpush.msra.mxu0 0.0
    %3338 = vmatpush.msra.mxu0 0.0
    %3339 = vmatpush.msra.mxu0 0.0
    %3340 = vmatpush.msra.mxu0 0.0
    %3341 = vmatpush.msra.mxu0 0.0
    %3342 = vmatpush.msra.mxu0 0.0
    %3343 = vmatpush.msra.mxu0 0.0
    %3344 = vmatpush.msra.mxu0 0.0
    %3345 = vmatpush.msra.mxu0 %v2478
    %3346 = vmatpush.msra.mxu0 %v2477
    %3347 = vmatpush.msra.mxu0 %v2476
    %3348 = vmatpush.msra.mxu0 %v2475
    %3349 = vmatmul.f32.gmra.mxu0 %v3331
    %v3350 = vpop.f32.mrf.mxu0
    %v3351 = vadd.f32 0.0, %v3350
    %3352 = vdwg.mxu0
    %v3354 = vrot.slane %v3351, 5
    %v3355 = vrot.slane %v3351, 6
    %v3358 = vadd.f32 %v2470, %v3354
    %v3359 = vadd.f32 %v2473, %v3355
    %v3360 = vxor.u32 %v3358, 2147483648
    %v3361 = vxor.u32 %v3359, 2147483648
    %v3362 = vmul.f32 %v3360, 1.442695
    %v3363 = vpow.pop %v3362
    %v3364 = vmul.f32 %v3361, 1.442695
    %v3365 = vpow.pop %v3364
    %v3366 = vadd.f32 %v3363, 1.0
    %v3367 = vadd.f32 %v3365, 1.0
    %v3368 = vrcp.pop %v3366
    %v3369 = vmul.f32 %v3366, %v3368
    %v3370 = vsub.f32 1.0, %v3369
    %v3371 = vmul.f32 %v3368, %v3370
    %v3372 = vadd.f32 %v3368, %v3371
    %vm3373 = vweird.f32 %v3366
    %vm3374 = vweird.f32 %v3368
    %vm3375 = vmor %vm3373, %vm3374
    %v3376 = vsel %vm3375, %v3368, %v3372
    %v3377 = vand.u32 2147483647, %v3366
    %vm3378 = vcmp.eq.f32.partialorder %v3377, 8.507059e+37
    %v3379 = vand.u32 %v3366, 2147483648
    %v3380 = vor.u32 1.1754944e-38, %v3379
    %v3381 = vsel %vm3378, %v3380, %v3376
    %v3382 = vmul.f32 1.0, %v3381
    %v3383 = vrcp.pop %v3367
    %v3384 = vmul.f32 %v3367, %v3383
    %v3385 = vsub.f32 1.0, %v3384
    %v3386 = vmul.f32 %v3383, %v3385
    %v3387 = vadd.f32 %v3383, %v3386
    %vm3388 = vweird.f32 %v3367
    %vm3389 = vweird.f32 %v3383
    %vm3390 = vmor %vm3388, %vm3389
    %v3391 = vsel %vm3390, %v3383, %v3387
    %v3392 = vand.u32 2147483647, %v3367
    %vm3393 = vcmp.eq.f32.partialorder %v3392, 8.507059e+37
    %v3394 = vand.u32 %v3367, 2147483648
    %v3395 = vor.u32 1.1754944e-38, %v3394
    %v3396 = vsel %vm3393, %v3395, %v3391
    %v3397 = vmul.f32 1.0, %v3396
    %3398 = vmatpush.msra.mxu0 0.0
    %3399 = vmatpush.msra.mxu0 0.0
    %3400 = vmatpush.msra.mxu0 0.0
    %3401 = vmatpush.msra.mxu0 0.0
    %3402 = vmatpush.msra.mxu0 0.0
    %3403 = vmatpush.msra.mxu0 0.0
    %3404 = vmatpush.msra.mxu0 0.0
    %3405 = vmatpush.msra.mxu0 0.0
    %3406 = vmatpush.msra.mxu0 0.0
    %3407 = vmatpush.msra.mxu0 0.0
    %3408 = vmatpush.msra.mxu0 0.0
    %3409 = vmatpush.msra.mxu0 0.0
    %3410 = vmatpush.msra.mxu0 %v2483
    %3411 = vmatpush.msra.mxu0 %v2482
    %3412 = vmatpush.msra.mxu0 %v2481
    %3413 = vmatpush.msra.mxu0 %v2480
    %3414 = vmatmul.f32.gmra.mxu0 %v3331
    %v3415 = vpop.f32.mrf.mxu0
    %v3416 = vadd.f32 0.0, %v3415
    %3417 = vdwg.mxu0
    %v3419 = vrot.slane %v3416, 5
    %v3420 = vrot.slane %v3416, 6
    %3421 = vrot.lane.b32.xlu0 %v3419, 32
    %v3422 = vpop.permute.xlu0 %3421
    %3423 = vrot.lane.b32.xlu0 %v3420, 32
    %v3424 = vpop.permute.xlu0 %3423
    %v3427 = vadd.f32 %v2470, %v3422
    %v3428 = vadd.f32 %v2473, %v3424
    %v3429 = vxor.u32 %v3427, 2147483648
    %v3430 = vxor.u32 %v3428, 2147483648
    %v3431 = vmul.f32 %v3429, 1.442695
    %v3432 = vpow.pop %v3431
    %v3433 = vmul.f32 %v3430, 1.442695
    %v3434 = vpow.pop %v3433
    %v3435 = vadd.f32 %v3432, 1.0
    %v3436 = vadd.f32 %v3434, 1.0
    %v3437 = vrcp.pop %v3435
    %v3438 = vmul.f32 %v3435, %v3437
    %v3439 = vsub.f32 1.0, %v3438
    %v3440 = vmul.f32 %v3437, %v3439
    %v3441 = vadd.f32 %v3437, %v3440
    %vm3442 = vweird.f32 %v3435
    %vm3443 = vweird.f32 %v3437
    %vm3444 = vmor %vm3442, %vm3443
    %v3445 = vsel %vm3444, %v3437, %v3441
    %v3446 = vand.u32 2147483647, %v3435
    %vm3447 = vcmp.eq.f32.partialorder %v3446, 8.507059e+37
    %v3448 = vand.u32 %v3435, 2147483648
    %v3449 = vor.u32 1.1754944e-38, %v3448
    %v3450 = vsel %vm3447, %v3449, %v3445
    %v3451 = vmul.f32 1.0, %v3450
    %v3452 = vrcp.pop %v3436
    %v3453 = vmul.f32 %v3436, %v3452
    %v3454 = vsub.f32 1.0, %v3453
    %v3455 = vmul.f32 %v3452, %v3454
    %v3456 = vadd.f32 %v3452, %v3455
    %vm3457 = vweird.f32 %v3436
    %vm3458 = vweird.f32 %v3452
    %vm3459 = vmor %vm3457, %vm3458
    %v3460 = vsel %vm3459, %v3452, %v3456
    %v3461 = vand.u32 2147483647, %v3436
    %vm3462 = vcmp.eq.f32.partialorder %v3461, 8.507059e+37
    %v3463 = vand.u32 %v3436, 2147483648
    %v3464 = vor.u32 1.1754944e-38, %v3463
    %v3465 = vsel %vm3462, %v3464, %v3460
    %v3466 = vmul.f32 1.0, %v3465
    %3467 = vmatpush.msra.mxu0 0.0
    %3468 = vmatpush.msra.mxu0 0.0
    %3469 = vmatpush.msra.mxu0 0.0
    %3470 = vmatpush.msra.mxu0 0.0
    %3471 = vmatpush.msra.mxu0 0.0
    %3472 = vmatpush.msra.mxu0 0.0
    %3473 = vmatpush.msra.mxu0 0.0
    %3474 = vmatpush.msra.mxu0 0.0
    %3475 = vmatpush.msra.mxu0 0.0
    %3476 = vmatpush.msra.mxu0 0.0
    %3477 = vmatpush.msra.mxu0 0.0
    %3478 = vmatpush.msra.mxu0 0.0
    %3479 = vmatpush.msra.mxu0 %v2488
    %3480 = vmatpush.msra.mxu0 %v2487
    %3481 = vmatpush.msra.mxu0 %v2486
    %3482 = vmatpush.msra.mxu0 %v2485
    %3483 = vmatmul.f32.gmra.mxu0 %v3331
    %v3484 = vpop.f32.mrf.mxu0
    %v3485 = vadd.f32 0.0, %v3484
    %3486 = vdwg.mxu0
    %v3488 = vrot.slane %v3485, 5
    %v3489 = vrot.slane %v3485, 6
    %3490 = vrot.lane.b32.xlu0 %v3488, 64
    %v3491 = vpop.permute.xlu0 %3490
    %3492 = vrot.lane.b32.xlu0 %v3489, 64
    %v3493 = vpop.permute.xlu0 %3492
    %v3496 = vadd.f32 %v2470, %v3491
    %v3497 = vadd.f32 %v2473, %v3493
    %v3498 = vtanh.pop %v3496
    %v3499 = vtanh.pop %v3497
    %3500 = vmatpush.msra.mxu0 0.0
    %3501 = vmatpush.msra.mxu0 0.0
    %3502 = vmatpush.msra.mxu0 0.0
    %3503 = vmatpush.msra.mxu0 0.0
    %3504 = vmatpush.msra.mxu0 0.0
    %3505 = vmatpush.msra.mxu0 0.0
    %3506 = vmatpush.msra.mxu0 0.0
    %3507 = vmatpush.msra.mxu0 0.0
    %3508 = vmatpush.msra.mxu0 0.0
    %3509 = vmatpush.msra.mxu0 0.0
    %3510 = vmatpush.msra.mxu0 0.0
    %3511 = vmatpush.msra.mxu0 0.0
    %3512 = vmatpush.msra.mxu0 %v2493
    %3513 = vmatpush.msra.mxu0 %v2492
    %3514 = vmatpush.msra.mxu0 %v2491
    %3515 = vmatpush.msra.mxu0 %v2490
    %3516 = vmatmul.f32.gmra.mxu0 %v3331
    %v3517 = vpop.f32.mrf.mxu0
    %v3518 = vadd.f32 0.0, %v3517
    %3519 = vdwg.mxu0
    %v3521 = vrot.slane %v3518, 5
    %v3522 = vrot.slane %v3518, 6
    %3523 = vrot.lane.b32.xlu0 %v3521, 96
    %v3524 = vpop.permute.xlu0 %3523
    %3525 = vrot.lane.b32.xlu0 %v3522, 96
    %v3526 = vpop.permute.xlu0 %3525
    %v3529 = vadd.f32 %v2470, %v3524
    %v3530 = vadd.f32 %v2473, %v3526
    %v3531 = vxor.u32 %v3529, 2147483648
    %v3532 = vxor.u32 %v3530, 2147483648
    %v3533 = vmul.f32 %v3531, 1.442695
    %v3534 = vpow.pop %v3533
    %v3535 = vmul.f32 %v3532, 1.442695
    %v3536 = vpow.pop %v3535
    %v3537 = vadd.f32 %v3534, 1.0
    %v3538 = vadd.f32 %v3536, 1.0
    %v3539 = vrcp.pop %v3537
    %v3540 = vmul.f32 %v3537, %v3539
    %v3541 = vsub.f32 1.0, %v3540
    %v3542 = vmul.f32 %v3539, %v3541
    %v3543 = vadd.f32 %v3539, %v3542
    %vm3544 = vweird.f32 %v3537
    %vm3545 = vweird.f32 %v3539
    %vm3546 = vmor %vm3544, %vm3545
    %v3547 = vsel %vm3546, %v3539, %v3543
    %v3548 = vand.u32 2147483647, %v3537
    %vm3549 = vcmp.eq.f32.partialorder %v3548, 8.507059e+37
    %v3550 = vand.u32 %v3537, 2147483648
    %v3551 = vor.u32 1.1754944e-38, %v3550
    %v3552 = vsel %vm3549, %v3551, %v3547
    %v3553 = vmul.f32 1.0, %v3552
    %v3554 = vrcp.pop %v3538
    %v3555 = vmul.f32 %v3538, %v3554
    %v3556 = vsub.f32 1.0, %v3555
    %v3557 = vmul.f32 %v3554, %v3556
    %v3558 = vadd.f32 %v3554, %v3557
    %vm3559 = vweird.f32 %v3538
    %vm3560 = vweird.f32 %v3554
    %vm3561 = vmor %vm3559, %vm3560
    %v3562 = vsel %vm3561, %v3554, %v3558
    %v3563 = vand.u32 2147483647, %v3538
    %vm3564 = vcmp.eq.f32.partialorder %v3563, 8.507059e+37
    %v3565 = vand.u32 %v3538, 2147483648
    %v3566 = vor.u32 1.1754944e-38, %v3565
    %v3567 = vsel %vm3564, %v3566, %v3562
    %v3568 = vmul.f32 1.0, %v3567
    %v3571 = vrot.slane %v3310, 7
    %v3572 = vrot.slane %v3311, 7
    %v3575 = vmul.f32 %v3451, %v3571
    %v3576 = vmul.f32 %v3466, %v3572
    %3579 = vrot.lane.b32.xlu0 %v3498, 64
    %v3580 = vpop.permute.xlu0 %3579
    %3581 = vrot.lane.b32.xlu0 %v3499, 64
    %v3582 = vpop.permute.xlu0 %3581
    %v3585 = vmul.f32 %v3382, %v3580
    %v3586 = vmul.f32 %v3397, %v3582
    %3589 = vrot.lane.b32.xlu0 %v3585, 32
    %v3590 = vpop.permute.xlu0 %3589
    %3591 = vrot.lane.b32.xlu0 %v3586, 32
    %v3592 = vpop.permute.xlu0 %3591
    %v3595 = vadd.f32 %v3575, %v3590
    %v3596 = vadd.f32 %v3576, %v3592
    %v3597 = vtanh.pop %v3595
    %v3598 = vtanh.pop %v3596
    %3601 = vrot.lane.b32.xlu0 %v3597, 64
    %v3602 = vpop.permute.xlu0 %3601
    %3603 = vrot.lane.b32.xlu0 %v3598, 64
    %v3604 = vpop.permute.xlu0 %3603
    %v3607 = vmul.f32 %v3553, %v3602
    %v3608 = vmul.f32 %v3568, %v3604
    %v3611 = vrot.slane %v3607, 3
    %v3612 = vrot.slane %v3608, 2
    %v3613 = vsel %vm426, %v3612, %v3611
    %3614 = vrot.lane.b32.xlu0 %v3613, 32
    %v3615 = vpop.permute.xlu0 %3614
    %v3616 = vsel %vm153, %v3615, 0
    %3618 = vmatpush.msra.mxu0 0.0
    %3619 = vmatpush.msra.mxu0 0.0
    %3620 = vmatpush.msra.mxu0 0.0
    %3621 = vmatpush.msra.mxu0 0.0
    %3622 = vmatpush.msra.mxu0 0.0
    %3623 = vmatpush.msra.mxu0 0.0
    %3624 = vmatpush.msra.mxu0 0.0
    %3625 = vmatpush.msra.mxu0 0.0
    %3626 = vmatpush.msra.mxu0 0.0
    %3627 = vmatpush.msra.mxu0 0.0
    %3628 = vmatpush.msra.mxu0 0.0
    %3629 = vmatpush.msra.mxu0 0.0
    %3630 = vmatpush.msra.mxu0 %v2478
    %3631 = vmatpush.msra.mxu0 %v2477
    %3632 = vmatpush.msra.mxu0 %v2476
    %3633 = vmatpush.msra.mxu0 %v2475
    %3634 = vmatmul.f32.gmra.mxu0 %v3616
    %v3635 = vpop.f32.mrf.mxu0
    %v3636 = vadd.f32 0.0, %v3635
    %3637 = vdwg.mxu0
    %v3639 = vrot.slane %v3636, 4
    %v3640 = vrot.slane %v3636, 5
    %v3643 = vadd.f32 %v2470, %v3639
    %v3644 = vadd.f32 %v2473, %v3640
    %v3645 = vxor.u32 %v3643, 2147483648
    %v3646 = vxor.u32 %v3644, 2147483648
    %v3647 = vmul.f32 %v3645, 1.442695
    %v3648 = vpow.pop %v3647
    %v3649 = vmul.f32 %v3646, 1.442695
    %v3650 = vpow.pop %v3649
    %v3651 = vadd.f32 %v3648, 1.0
    %v3652 = vadd.f32 %v3650, 1.0
    %v3653 = vrcp.pop %v3651
    %v3654 = vmul.f32 %v3651, %v3653
    %v3655 = vsub.f32 1.0, %v3654
    %v3656 = vmul.f32 %v3653, %v3655
    %v3657 = vadd.f32 %v3653, %v3656
    %vm3658 = vweird.f32 %v3651
    %vm3659 = vweird.f32 %v3653
    %vm3660 = vmor %vm3658, %vm3659
    %v3661 = vsel %vm3660, %v3653, %v3657
    %v3662 = vand.u32 2147483647, %v3651
    %vm3663 = vcmp.eq.f32.partialorder %v3662, 8.507059e+37
    %v3664 = vand.u32 %v3651, 2147483648
    %v3665 = vor.u32 1.1754944e-38, %v3664
    %v3666 = vsel %vm3663, %v3665, %v3661
    %v3667 = vmul.f32 1.0, %v3666
    %v3668 = vrcp.pop %v3652
    %v3669 = vmul.f32 %v3652, %v3668
    %v3670 = vsub.f32 1.0, %v3669
    %v3671 = vmul.f32 %v3668, %v3670
    %v3672 = vadd.f32 %v3668, %v3671
    %vm3673 = vweird.f32 %v3652
    %vm3674 = vweird.f32 %v3668
    %vm3675 = vmor %vm3673, %vm3674
    %v3676 = vsel %vm3675, %v3668, %v3672
    %v3677 = vand.u32 2147483647, %v3652
    %vm3678 = vcmp.eq.f32.partialorder %v3677, 8.507059e+37
    %v3679 = vand.u32 %v3652, 2147483648
    %v3680 = vor.u32 1.1754944e-38, %v3679
    %v3681 = vsel %vm3678, %v3680, %v3676
    %v3682 = vmul.f32 1.0, %v3681
    %3683 = vmatpush.msra.mxu0 0.0
    %3684 = vmatpush.msra.mxu0 0.0
    %3685 = vmatpush.msra.mxu0 0.0
    %3686 = vmatpush.msra.mxu0 0.0
    %3687 = vmatpush.msra.mxu0 0.0
    %3688 = vmatpush.msra.mxu0 0.0
    %3689 = vmatpush.msra.mxu0 0.0
    %3690 = vmatpush.msra.mxu0 0.0
    %3691 = vmatpush.msra.mxu0 0.0
    %3692 = vmatpush.msra.mxu0 0.0
    %3693 = vmatpush.msra.mxu0 0.0
    %3694 = vmatpush.msra.mxu0 0.0
    %3695 = vmatpush.msra.mxu0 %v2483
    %3696 = vmatpush.msra.mxu0 %v2482
    %3697 = vmatpush.msra.mxu0 %v2481
    %3698 = vmatpush.msra.mxu0 %v2480
    %3699 = vmatmul.f32.gmra.mxu0 %v3616
    %v3700 = vpop.f32.mrf.mxu0
    %v3701 = vadd.f32 0.0, %v3700
    %3702 = vdwg.mxu0
    %v3704 = vrot.slane %v3701, 4
    %v3705 = vrot.slane %v3701, 5
    %3706 = vrot.lane.b32.xlu0 %v3704, 32
    %v3707 = vpop.permute.xlu0 %3706
    %3708 = vrot.lane.b32.xlu0 %v3705, 32
    %v3709 = vpop.permute.xlu0 %3708
    %v3712 = vadd.f32 %v2470, %v3707
    %v3713 = vadd.f32 %v2473, %v3709
    %v3714 = vxor.u32 %v3712, 2147483648
    %v3715 = vxor.u32 %v3713, 2147483648
    %v3716 = vmul.f32 %v3714, 1.442695
    %v3717 = vpow.pop %v3716
    %v3718 = vmul.f32 %v3715, 1.442695
    %v3719 = vpow.pop %v3718
    %v3720 = vadd.f32 %v3717, 1.0
    %v3721 = vadd.f32 %v3719, 1.0
    %v3722 = vrcp.pop %v3720
    %v3723 = vmul.f32 %v3720, %v3722
    %v3724 = vsub.f32 1.0, %v3723
    %v3725 = vmul.f32 %v3722, %v3724
    %v3726 = vadd.f32 %v3722, %v3725
    %vm3727 = vweird.f32 %v3720
    %vm3728 = vweird.f32 %v3722
    %vm3729 = vmor %vm3727, %vm3728
    %v3730 = vsel %vm3729, %v3722, %v3726
    %v3731 = vand.u32 2147483647, %v3720
    %vm3732 = vcmp.eq.f32.partialorder %v3731, 8.507059e+37
    %v3733 = vand.u32 %v3720, 2147483648
    %v3734 = vor.u32 1.1754944e-38, %v3733
    %v3735 = vsel %vm3732, %v3734, %v3730
    %v3736 = vmul.f32 1.0, %v3735
    %v3737 = vrcp.pop %v3721
    %v3738 = vmul.f32 %v3721, %v3737
    %v3739 = vsub.f32 1.0, %v3738
    %v3740 = vmul.f32 %v3737, %v3739
    %v3741 = vadd.f32 %v3737, %v3740
    %vm3742 = vweird.f32 %v3721
    %vm3743 = vweird.f32 %v3737
    %vm3744 = vmor %vm3742, %vm3743
    %v3745 = vsel %vm3744, %v3737, %v3741
    %v3746 = vand.u32 2147483647, %v3721
    %vm3747 = vcmp.eq.f32.partialorder %v3746, 8.507059e+37
    %v3748 = vand.u32 %v3721, 2147483648
    %v3749 = vor.u32 1.1754944e-38, %v3748
    %v3750 = vsel %vm3747, %v3749, %v3745
    %v3751 = vmul.f32 1.0, %v3750
    %3752 = vmatpush.msra.mxu0 0.0
    %3753 = vmatpush.msra.mxu0 0.0
    %3754 = vmatpush.msra.mxu0 0.0
    %3755 = vmatpush.msra.mxu0 0.0
    %3756 = vmatpush.msra.mxu0 0.0
    %3757 = vmatpush.msra.mxu0 0.0
    %3758 = vmatpush.msra.mxu0 0.0
    %3759 = vmatpush.msra.mxu0 0.0
    %3760 = vmatpush.msra.mxu0 0.0
    %3761 = vmatpush.msra.mxu0 0.0
    %3762 = vmatpush.msra.mxu0 0.0
    %3763 = vmatpush.msra.mxu0 0.0
    %3764 = vmatpush.msra.mxu0 %v2488
    %3765 = vmatpush.msra.mxu0 %v2487
    %3766 = vmatpush.msra.mxu0 %v2486
    %3767 = vmatpush.msra.mxu0 %v2485
    %3768 = vmatmul.f32.gmra.mxu0 %v3616
    %v3769 = vpop.f32.mrf.mxu0
    %v3770 = vadd.f32 0.0, %v3769
    %3771 = vdwg.mxu0
    %v3773 = vrot.slane %v3770, 4
    %v3774 = vrot.slane %v3770, 5
    %3775 = vrot.lane.b32.xlu0 %v3773, 64
    %v3776 = vpop.permute.xlu0 %3775
    %3777 = vrot.lane.b32.xlu0 %v3774, 64
    %v3778 = vpop.permute.xlu0 %3777
    %v3781 = vadd.f32 %v2470, %v3776
    %v3782 = vadd.f32 %v2473, %v3778
    %v3783 = vtanh.pop %v3781
    %v3784 = vtanh.pop %v3782
    %3785 = vmatpush.msra.mxu0 0.0
    %3786 = vmatpush.msra.mxu0 0.0
    %3787 = vmatpush.msra.mxu0 0.0
    %3788 = vmatpush.msra.mxu0 0.0
    %3789 = vmatpush.msra.mxu0 0.0
    %3790 = vmatpush.msra.mxu0 0.0
    %3791 = vmatpush.msra.mxu0 0.0
    %3792 = vmatpush.msra.mxu0 0.0
    %3793 = vmatpush.msra.mxu0 0.0
    %3794 = vmatpush.msra.mxu0 0.0
    %3795 = vmatpush.msra.mxu0 0.0
    %3796 = vmatpush.msra.mxu0 0.0
    %3797 = vmatpush.msra.mxu0 %v2493
    %3798 = vmatpush.msra.mxu0 %v2492
    %3799 = vmatpush.msra.mxu0 %v2491
    %3800 = vmatpush.msra.mxu0 %v2490
    %3801 = vmatmul.f32.gmra.mxu0 %v3616
    %v3802 = vpop.f32.mrf.mxu0
    %v3803 = vadd.f32 0.0, %v3802
    %3804 = vdwg.mxu0
    %v3806 = vrot.slane %v3803, 4
    %v3807 = vrot.slane %v3803, 5
    %3808 = vrot.lane.b32.xlu0 %v3806, 96
    %v3809 = vpop.permute.xlu0 %3808
    %3810 = vrot.lane.b32.xlu0 %v3807, 96
    %v3811 = vpop.permute.xlu0 %3810
    %v3814 = vadd.f32 %v2470, %v3809
    %v3815 = vadd.f32 %v2473, %v3811
    %v3816 = vxor.u32 %v3814, 2147483648
    %v3817 = vxor.u32 %v3815, 2147483648
    %v3818 = vmul.f32 %v3816, 1.442695
    %v3819 = vpow.pop %v3818
    %v3820 = vmul.f32 %v3817, 1.442695
    %v3821 = vpow.pop %v3820
    %v3822 = vadd.f32 %v3819, 1.0
    %v3823 = vadd.f32 %v3821, 1.0
    %v3824 = vrcp.pop %v3822
    %v3825 = vmul.f32 %v3822, %v3824
    %v3826 = vsub.f32 1.0, %v3825
    %v3827 = vmul.f32 %v3824, %v3826
    %v3828 = vadd.f32 %v3824, %v3827
    %vm3829 = vweird.f32 %v3822
    %vm3830 = vweird.f32 %v3824
    %vm3831 = vmor %vm3829, %vm3830
    %v3832 = vsel %vm3831, %v3824, %v3828
    %v3833 = vand.u32 2147483647, %v3822
    %vm3834 = vcmp.eq.f32.partialorder %v3833, 8.507059e+37
    %v3835 = vand.u32 %v3822, 2147483648
    %v3836 = vor.u32 1.1754944e-38, %v3835
    %v3837 = vsel %vm3834, %v3836, %v3832
    %v3838 = vmul.f32 1.0, %v3837
    %v3839 = vrcp.pop %v3823
    %v3840 = vmul.f32 %v3823, %v3839
    %v3841 = vsub.f32 1.0, %v3840
    %v3842 = vmul.f32 %v3839, %v3841
    %v3843 = vadd.f32 %v3839, %v3842
    %vm3844 = vweird.f32 %v3823
    %vm3845 = vweird.f32 %v3839
    %vm3846 = vmor %vm3844, %vm3845
    %v3847 = vsel %vm3846, %v3839, %v3843
    %v3848 = vand.u32 2147483647, %v3823
    %vm3849 = vcmp.eq.f32.partialorder %v3848, 8.507059e+37
    %v3850 = vand.u32 %v3823, 2147483648
    %v3851 = vor.u32 1.1754944e-38, %v3850
    %v3852 = vsel %vm3849, %v3851, %v3847
    %v3853 = vmul.f32 1.0, %v3852
    %v3856 = vrot.slane %v3595, 7
    %v3857 = vrot.slane %v3596, 7
    %v3860 = vmul.f32 %v3736, %v3856
    %v3861 = vmul.f32 %v3751, %v3857
    %3864 = vrot.lane.b32.xlu0 %v3783, 64
    %v3865 = vpop.permute.xlu0 %3864
    %3866 = vrot.lane.b32.xlu0 %v3784, 64
    %v3867 = vpop.permute.xlu0 %3866
    %v3870 = vmul.f32 %v3667, %v3865
    %v3871 = vmul.f32 %v3682, %v3867
    %3874 = vrot.lane.b32.xlu0 %v3870, 32
    %v3875 = vpop.permute.xlu0 %3874
    %3876 = vrot.lane.b32.xlu0 %v3871, 32
    %v3877 = vpop.permute.xlu0 %3876
    %v3880 = vadd.f32 %v3860, %v3875
    %v3881 = vadd.f32 %v3861, %v3877
    %v3882 = vtanh.pop %v3880
    %v3883 = vtanh.pop %v3881
    %3886 = vrot.lane.b32.xlu0 %v3882, 64
    %v3887 = vpop.permute.xlu0 %3886
    %3888 = vrot.lane.b32.xlu0 %v3883, 64
    %v3889 = vpop.permute.xlu0 %3888
    %v3892 = vmul.f32 %v3838, %v3887
    %v3893 = vmul.f32 %v3853, %v3889
    %v3896 = vrot.slane %v3892, 4
    %v3897 = vrot.slane %v3893, 3
    %v3898 = vsel %vm426, %v3897, %v3896
    %3899 = vrot.lane.b32.xlu0 %v3898, 32
    %v3900 = vpop.permute.xlu0 %3899
    %v3901 = vsel %vm153, %v3900, 0
    %3903 = vmatpush.msra.mxu0 0.0
    %3904 = vmatpush.msra.mxu0 0.0
    %3905 = vmatpush.msra.mxu0 0.0
    %3906 = vmatpush.msra.mxu0 0.0
    %3907 = vmatpush.msra.mxu0 0.0
    %3908 = vmatpush.msra.mxu0 0.0
    %3909 = vmatpush.msra.mxu0 0.0
    %3910 = vmatpush.msra.mxu0 0.0
    %3911 = vmatpush.msra.mxu0 0.0
    %3912 = vmatpush.msra.mxu0 0.0
    %3913 = vmatpush.msra.mxu0 0.0
    %3914 = vmatpush.msra.mxu0 0.0
    %3915 = vmatpush.msra.mxu0 %v2478
    %3916 = vmatpush.msra.mxu0 %v2477
    %3917 = vmatpush.msra.mxu0 %v2476
    %3918 = vmatpush.msra.mxu0 %v2475
    %3919 = vmatmul.f32.gmra.mxu0 %v3901
    %v3920 = vpop.f32.mrf.mxu0
    %v3921 = vadd.f32 0.0, %v3920
    %3922 = vdwg.mxu0
    %v3924 = vrot.slane %v3921, 3
    %v3925 = vrot.slane %v3921, 4
    %v3928 = vadd.f32 %v2470, %v3924
    %v3929 = vadd.f32 %v2473, %v3925
    %v3930 = vxor.u32 %v3928, 2147483648
    %v3931 = vxor.u32 %v3929, 2147483648
    %v3932 = vmul.f32 %v3930, 1.442695
    %v3933 = vpow.pop %v3932
    %v3934 = vmul.f32 %v3931, 1.442695
    %v3935 = vpow.pop %v3934
    %v3936 = vadd.f32 %v3933, 1.0
    %v3937 = vadd.f32 %v3935, 1.0
    %v3938 = vrcp.pop %v3936
    %v3939 = vmul.f32 %v3936, %v3938
    %v3940 = vsub.f32 1.0, %v3939
    %v3941 = vmul.f32 %v3938, %v3940
    %v3942 = vadd.f32 %v3938, %v3941
    %vm3943 = vweird.f32 %v3936
    %vm3944 = vweird.f32 %v3938
    %vm3945 = vmor %vm3943, %vm3944
    %v3946 = vsel %vm3945, %v3938, %v3942
    %v3947 = vand.u32 2147483647, %v3936
    %vm3948 = vcmp.eq.f32.partialorder %v3947, 8.507059e+37
    %v3949 = vand.u32 %v3936, 2147483648
    %v3950 = vor.u32 1.1754944e-38, %v3949
    %v3951 = vsel %vm3948, %v3950, %v3946
    %v3952 = vmul.f32 1.0, %v3951
    %v3953 = vrcp.pop %v3937
    %v3954 = vmul.f32 %v3937, %v3953
    %v3955 = vsub.f32 1.0, %v3954
    %v3956 = vmul.f32 %v3953, %v3955
    %v3957 = vadd.f32 %v3953, %v3956
    %vm3958 = vweird.f32 %v3937
    %vm3959 = vweird.f32 %v3953
    %vm3960 = vmor %vm3958, %vm3959
    %v3961 = vsel %vm3960, %v3953, %v3957
    %v3962 = vand.u32 2147483647, %v3937
    %vm3963 = vcmp.eq.f32.partialorder %v3962, 8.507059e+37
    %v3964 = vand.u32 %v3937, 2147483648
    %v3965 = vor.u32 1.1754944e-38, %v3964
    %v3966 = vsel %vm3963, %v3965, %v3961
    %v3967 = vmul.f32 1.0, %v3966
    %3968 = vmatpush.msra.mxu0 0.0
    %3969 = vmatpush.msra.mxu0 0.0
    %3970 = vmatpush.msra.mxu0 0.0
    %3971 = vmatpush.msra.mxu0 0.0
    %3972 = vmatpush.msra.mxu0 0.0
    %3973 = vmatpush.msra.mxu0 0.0
    %3974 = vmatpush.msra.mxu0 0.0
    %3975 = vmatpush.msra.mxu0 0.0
    %3976 = vmatpush.msra.mxu0 0.0
    %3977 = vmatpush.msra.mxu0 0.0
    %3978 = vmatpush.msra.mxu0 0.0
    %3979 = vmatpush.msra.mxu0 0.0
    %3980 = vmatpush.msra.mxu0 %v2483
    %3981 = vmatpush.msra.mxu0 %v2482
    %3982 = vmatpush.msra.mxu0 %v2481
    %3983 = vmatpush.msra.mxu0 %v2480
    %3984 = vmatmul.f32.gmra.mxu0 %v3901
    %v3985 = vpop.f32.mrf.mxu0
    %v3986 = vadd.f32 0.0, %v3985
    %3987 = vdwg.mxu0
    %v3989 = vrot.slane %v3986, 3
    %v3990 = vrot.slane %v3986, 4
    %3991 = vrot.lane.b32.xlu0 %v3989, 32
    %v3992 = vpop.permute.xlu0 %3991
    %3993 = vrot.lane.b32.xlu0 %v3990, 32
    %v3994 = vpop.permute.xlu0 %3993
    %v3997 = vadd.f32 %v2470, %v3992
    %v3998 = vadd.f32 %v2473, %v3994
    %v3999 = vxor.u32 %v3997, 2147483648
    %v4000 = vxor.u32 %v3998, 2147483648
    %v4001 = vmul.f32 %v3999, 1.442695
    %v4002 = vpow.pop %v4001
    %v4003 = vmul.f32 %v4000, 1.442695
    %v4004 = vpow.pop %v4003
    %v4005 = vadd.f32 %v4002, 1.0
    %v4006 = vadd.f32 %v4004, 1.0
    %v4007 = vrcp.pop %v4005
    %v4008 = vmul.f32 %v4005, %v4007
    %v4009 = vsub.f32 1.0, %v4008
    %v4010 = vmul.f32 %v4007, %v4009
    %v4011 = vadd.f32 %v4007, %v4010
    %vm4012 = vweird.f32 %v4005
    %vm4013 = vweird.f32 %v4007
    %vm4014 = vmor %vm4012, %vm4013
    %v4015 = vsel %vm4014, %v4007, %v4011
    %v4016 = vand.u32 2147483647, %v4005
    %vm4017 = vcmp.eq.f32.partialorder %v4016, 8.507059e+37
    %v4018 = vand.u32 %v4005, 2147483648
    %v4019 = vor.u32 1.1754944e-38, %v4018
    %v4020 = vsel %vm4017, %v4019, %v4015
    %v4021 = vmul.f32 1.0, %v4020
    %v4022 = vrcp.pop %v4006
    %v4023 = vmul.f32 %v4006, %v4022
    %v4024 = vsub.f32 1.0, %v4023
    %v4025 = vmul.f32 %v4022, %v4024
    %v4026 = vadd.f32 %v4022, %v4025
    %vm4027 = vweird.f32 %v4006
    %vm4028 = vweird.f32 %v4022
    %vm4029 = vmor %vm4027, %vm4028
    %v4030 = vsel %vm4029, %v4022, %v4026
    %v4031 = vand.u32 2147483647, %v4006
    %vm4032 = vcmp.eq.f32.partialorder %v4031, 8.507059e+37
    %v4033 = vand.u32 %v4006, 2147483648
    %v4034 = vor.u32 1.1754944e-38, %v4033
    %v4035 = vsel %vm4032, %v4034, %v4030
    %v4036 = vmul.f32 1.0, %v4035
    %4037 = vmatpush.msra.mxu0 0.0
    %4038 = vmatpush.msra.mxu0 0.0
    %4039 = vmatpush.msra.mxu0 0.0
    %4040 = vmatpush.msra.mxu0 0.0
    %4041 = vmatpush.msra.mxu0 0.0
    %4042 = vmatpush.msra.mxu0 0.0
    %4043 = vmatpush.msra.mxu0 0.0
    %4044 = vmatpush.msra.mxu0 0.0
    %4045 = vmatpush.msra.mxu0 0.0
    %4046 = vmatpush.msra.mxu0 0.0
    %4047 = vmatpush.msra.mxu0 0.0
    %4048 = vmatpush.msra.mxu0 0.0
    %4049 = vmatpush.msra.mxu0 %v2488
    %4050 = vmatpush.msra.mxu0 %v2487
    %4051 = vmatpush.msra.mxu0 %v2486
    %4052 = vmatpush.msra.mxu0 %v2485
    %4053 = vmatmul.f32.gmra.mxu0 %v3901
    %v4054 = vpop.f32.mrf.mxu0
    %v4055 = vadd.f32 0.0, %v4054
    %4056 = vdwg.mxu0
    %v4058 = vrot.slane %v4055, 3
    %v4059 = vrot.slane %v4055, 4
    %4060 = vrot.lane.b32.xlu0 %v4058, 64
    %v4061 = vpop.permute.xlu0 %4060
    %4062 = vrot.lane.b32.xlu0 %v4059, 64
    %v4063 = vpop.permute.xlu0 %4062
    %v4066 = vadd.f32 %v2470, %v4061
    %v4067 = vadd.f32 %v2473, %v4063
    %v4068 = vtanh.pop %v4066
    %v4069 = vtanh.pop %v4067
    %4070 = vmatpush.msra.mxu0 0.0
    %4071 = vmatpush.msra.mxu0 0.0
    %4072 = vmatpush.msra.mxu0 0.0
    %4073 = vmatpush.msra.mxu0 0.0
    %4074 = vmatpush.msra.mxu0 0.0
    %4075 = vmatpush.msra.mxu0 0.0
    %4076 = vmatpush.msra.mxu0 0.0
    %4077 = vmatpush.msra.mxu0 0.0
    %4078 = vmatpush.msra.mxu0 0.0
    %4079 = vmatpush.msra.mxu0 0.0
    %4080 = vmatpush.msra.mxu0 0.0
    %4081 = vmatpush.msra.mxu0 0.0
    %4082 = vmatpush.msra.mxu0 %v2493
    %4083 = vmatpush.msra.mxu0 %v2492
    %4084 = vmatpush.msra.mxu0 %v2491
    %4085 = vmatpush.msra.mxu0 %v2490
    %4086 = vmatmul.f32.gmra.mxu0 %v3901
    %v4087 = vpop.f32.mrf.mxu0
    %v4088 = vadd.f32 0.0, %v4087
    %4089 = vdwg.mxu0
    %v4091 = vrot.slane %v4088, 3
    %v4092 = vrot.slane %v4088, 4
    %4093 = vrot.lane.b32.xlu0 %v4091, 96
    %v4094 = vpop.permute.xlu0 %4093
    %4095 = vrot.lane.b32.xlu0 %v4092, 96
    %v4096 = vpop.permute.xlu0 %4095
    %v4099 = vadd.f32 %v2470, %v4094
    %v4100 = vadd.f32 %v2473, %v4096
    %v4101 = vxor.u32 %v4099, 2147483648
    %v4102 = vxor.u32 %v4100, 2147483648
    %v4103 = vmul.f32 %v4101, 1.442695
    %v4104 = vpow.pop %v4103
    %v4105 = vmul.f32 %v4102, 1.442695
    %v4106 = vpow.pop %v4105
    %v4107 = vadd.f32 %v4104, 1.0
    %v4108 = vadd.f32 %v4106, 1.0
    %v4109 = vrcp.pop %v4107
    %v4110 = vmul.f32 %v4107, %v4109
    %v4111 = vsub.f32 1.0, %v4110
    %v4112 = vmul.f32 %v4109, %v4111
    %v4113 = vadd.f32 %v4109, %v4112
    %vm4114 = vweird.f32 %v4107
    %vm4115 = vweird.f32 %v4109
    %vm4116 = vmor %vm4114, %vm4115
    %v4117 = vsel %vm4116, %v4109, %v4113
    %v4118 = vand.u32 2147483647, %v4107
    %vm4119 = vcmp.eq.f32.partialorder %v4118, 8.507059e+37
    %v4120 = vand.u32 %v4107, 2147483648
    %v4121 = vor.u32 1.1754944e-38, %v4120
    %v4122 = vsel %vm4119, %v4121, %v4117
    %v4123 = vmul.f32 1.0, %v4122
    %v4124 = vrcp.pop %v4108
    %v4125 = vmul.f32 %v4108, %v4124
    %v4126 = vsub.f32 1.0, %v4125
    %v4127 = vmul.f32 %v4124, %v4126
    %v4128 = vadd.f32 %v4124, %v4127
    %vm4129 = vweird.f32 %v4108
    %vm4130 = vweird.f32 %v4124
    %vm4131 = vmor %vm4129, %vm4130
    %v4132 = vsel %vm4131, %v4124, %v4128
    %v4133 = vand.u32 2147483647, %v4108
    %vm4134 = vcmp.eq.f32.partialorder %v4133, 8.507059e+37
    %v4135 = vand.u32 %v4108, 2147483648
    %v4136 = vor.u32 1.1754944e-38, %v4135
    %v4137 = vsel %vm4134, %v4136, %v4132
    %v4138 = vmul.f32 1.0, %v4137
    %v4141 = vrot.slane %v3880, 7
    %v4142 = vrot.slane %v3881, 7
    %v4145 = vmul.f32 %v4021, %v4141
    %v4146 = vmul.f32 %v4036, %v4142
    %4149 = vrot.lane.b32.xlu0 %v4068, 64
    %v4150 = vpop.permute.xlu0 %4149
    %4151 = vrot.lane.b32.xlu0 %v4069, 64
    %v4152 = vpop.permute.xlu0 %4151
    %v4155 = vmul.f32 %v3952, %v4150
    %v4156 = vmul.f32 %v3967, %v4152
    %4159 = vrot.lane.b32.xlu0 %v4155, 32
    %v4160 = vpop.permute.xlu0 %4159
    %4161 = vrot.lane.b32.xlu0 %v4156, 32
    %v4162 = vpop.permute.xlu0 %4161
    %v4165 = vadd.f32 %v4145, %v4160
    %v4166 = vadd.f32 %v4146, %v4162
    %v4167 = vtanh.pop %v4165
    %v4168 = vtanh.pop %v4166
    %4171 = vrot.lane.b32.xlu0 %v4167, 64
    %v4172 = vpop.permute.xlu0 %4171
    %4173 = vrot.lane.b32.xlu0 %v4168, 64
    %v4174 = vpop.permute.xlu0 %4173
    %v4177 = vmul.f32 %v4123, %v4172
    %v4178 = vmul.f32 %v4138, %v4174
    %v4181 = vrot.slane %v4177, 5
    %v4182 = vrot.slane %v4178, 4
    %v4183 = vsel %vm426, %v4182, %v4181
    %4184 = vrot.lane.b32.xlu0 %v4183, 32
    %v4185 = vpop.permute.xlu0 %4184
    %v4186 = vsel %vm153, %v4185, 0
    %4188 = vmatpush.msra.mxu0 0.0
    %4189 = vmatpush.msra.mxu0 0.0
    %4190 = vmatpush.msra.mxu0 0.0
    %4191 = vmatpush.msra.mxu0 0.0
    %4192 = vmatpush.msra.mxu0 0.0
    %4193 = vmatpush.msra.mxu0 0.0
    %4194 = vmatpush.msra.mxu0 0.0
    %4195 = vmatpush.msra.mxu0 0.0
    %4196 = vmatpush.msra.mxu0 0.0
    %4197 = vmatpush.msra.mxu0 0.0
    %4198 = vmatpush.msra.mxu0 0.0
    %4199 = vmatpush.msra.mxu0 0.0
    %4200 = vmatpush.msra.mxu0 %v2478
    %4201 = vmatpush.msra.mxu0 %v2477
    %4202 = vmatpush.msra.mxu0 %v2476
    %4203 = vmatpush.msra.mxu0 %v2475
    %4204 = vmatmul.f32.gmra.mxu0 %v4186
    %v4205 = vpop.f32.mrf.mxu0
    %v4206 = vadd.f32 0.0, %v4205
    %4207 = vdwg.mxu0
    %v4209 = vrot.slane %v4206, 2
    %v4210 = vrot.slane %v4206, 3
    %v4213 = vadd.f32 %v2470, %v4209
    %v4214 = vadd.f32 %v2473, %v4210
    %v4215 = vxor.u32 %v4213, 2147483648
    %v4216 = vxor.u32 %v4214, 2147483648
    %v4217 = vmul.f32 %v4215, 1.442695
    %v4218 = vpow.pop %v4217
    %v4219 = vmul.f32 %v4216, 1.442695
    %v4220 = vpow.pop %v4219
    %v4221 = vadd.f32 %v4218, 1.0
    %v4222 = vadd.f32 %v4220, 1.0
    %v4223 = vrcp.pop %v4221
    %v4224 = vmul.f32 %v4221, %v4223
    %v4225 = vsub.f32 1.0, %v4224
    %v4226 = vmul.f32 %v4223, %v4225
    %v4227 = vadd.f32 %v4223, %v4226
    %vm4228 = vweird.f32 %v4221
    %vm4229 = vweird.f32 %v4223
    %vm4230 = vmor %vm4228, %vm4229
    %v4231 = vsel %vm4230, %v4223, %v4227
    %v4232 = vand.u32 2147483647, %v4221
    %vm4233 = vcmp.eq.f32.partialorder %v4232, 8.507059e+37
    %v4234 = vand.u32 %v4221, 2147483648
    %v4235 = vor.u32 1.1754944e-38, %v4234
    %v4236 = vsel %vm4233, %v4235, %v4231
    %v4237 = vmul.f32 1.0, %v4236
    %v4238 = vrcp.pop %v4222
    %v4239 = vmul.f32 %v4222, %v4238
    %v4240 = vsub.f32 1.0, %v4239
    %v4241 = vmul.f32 %v4238, %v4240
    %v4242 = vadd.f32 %v4238, %v4241
    %vm4243 = vweird.f32 %v4222
    %vm4244 = vweird.f32 %v4238
    %vm4245 = vmor %vm4243, %vm4244
    %v4246 = vsel %vm4245, %v4238, %v4242
    %v4247 = vand.u32 2147483647, %v4222
    %vm4248 = vcmp.eq.f32.partialorder %v4247, 8.507059e+37
    %v4249 = vand.u32 %v4222, 2147483648
    %v4250 = vor.u32 1.1754944e-38, %v4249
    %v4251 = vsel %vm4248, %v4250, %v4246
    %v4252 = vmul.f32 1.0, %v4251
    %4253 = vmatpush.msra.mxu0 0.0
    %4254 = vmatpush.msra.mxu0 0.0
    %4255 = vmatpush.msra.mxu0 0.0
    %4256 = vmatpush.msra.mxu0 0.0
    %4257 = vmatpush.msra.mxu0 0.0
    %4258 = vmatpush.msra.mxu0 0.0
    %4259 = vmatpush.msra.mxu0 0.0
    %4260 = vmatpush.msra.mxu0 0.0
    %4261 = vmatpush.msra.mxu0 0.0
    %4262 = vmatpush.msra.mxu0 0.0
    %4263 = vmatpush.msra.mxu0 0.0
    %4264 = vmatpush.msra.mxu0 0.0
    %4265 = vmatpush.msra.mxu0 %v2483
    %4266 = vmatpush.msra.mxu0 %v2482
    %4267 = vmatpush.msra.mxu0 %v2481
    %4268 = vmatpush.msra.mxu0 %v2480
    %4269 = vmatmul.f32.gmra.mxu0 %v4186
    %v4270 = vpop.f32.mrf.mxu0
    %v4271 = vadd.f32 0.0, %v4270
    %4272 = vdwg.mxu0
    %v4274 = vrot.slane %v4271, 2
    %v4275 = vrot.slane %v4271, 3
    %4276 = vrot.lane.b32.xlu0 %v4274, 32
    %v4277 = vpop.permute.xlu0 %4276
    %4278 = vrot.lane.b32.xlu0 %v4275, 32
    %v4279 = vpop.permute.xlu0 %4278
    %v4282 = vadd.f32 %v2470, %v4277
    %v4283 = vadd.f32 %v2473, %v4279
    %v4284 = vxor.u32 %v4282, 2147483648
    %v4285 = vxor.u32 %v4283, 2147483648
    %v4286 = vmul.f32 %v4284, 1.442695
    %v4287 = vpow.pop %v4286
    %v4288 = vmul.f32 %v4285, 1.442695
    %v4289 = vpow.pop %v4288
    %v4290 = vadd.f32 %v4287, 1.0
    %v4291 = vadd.f32 %v4289, 1.0
    %v4292 = vrcp.pop %v4290
    %v4293 = vmul.f32 %v4290, %v4292
    %v4294 = vsub.f32 1.0, %v4293
    %v4295 = vmul.f32 %v4292, %v4294
    %v4296 = vadd.f32 %v4292, %v4295
    %vm4297 = vweird.f32 %v4290
    %vm4298 = vweird.f32 %v4292
    %vm4299 = vmor %vm4297, %vm4298
    %v4300 = vsel %vm4299, %v4292, %v4296
    %v4301 = vand.u32 2147483647, %v4290
    %vm4302 = vcmp.eq.f32.partialorder %v4301, 8.507059e+37
    %v4303 = vand.u32 %v4290, 2147483648
    %v4304 = vor.u32 1.1754944e-38, %v4303
    %v4305 = vsel %vm4302, %v4304, %v4300
    %v4306 = vmul.f32 1.0, %v4305
    %v4307 = vrcp.pop %v4291
    %v4308 = vmul.f32 %v4291, %v4307
    %v4309 = vsub.f32 1.0, %v4308
    %v4310 = vmul.f32 %v4307, %v4309
    %v4311 = vadd.f32 %v4307, %v4310
    %vm4312 = vweird.f32 %v4291
    %vm4313 = vweird.f32 %v4307
    %vm4314 = vmor %vm4312, %vm4313
    %v4315 = vsel %vm4314, %v4307, %v4311
    %v4316 = vand.u32 2147483647, %v4291
    %vm4317 = vcmp.eq.f32.partialorder %v4316, 8.507059e+37
    %v4318 = vand.u32 %v4291, 2147483648
    %v4319 = vor.u32 1.1754944e-38, %v4318
    %v4320 = vsel %vm4317, %v4319, %v4315
    %v4321 = vmul.f32 1.0, %v4320
    %4322 = vmatpush.msra.mxu0 0.0
    %4323 = vmatpush.msra.mxu0 0.0
    %4324 = vmatpush.msra.mxu0 0.0
    %4325 = vmatpush.msra.mxu0 0.0
    %4326 = vmatpush.msra.mxu0 0.0
    %4327 = vmatpush.msra.mxu0 0.0
    %4328 = vmatpush.msra.mxu0 0.0
    %4329 = vmatpush.msra.mxu0 0.0
    %4330 = vmatpush.msra.mxu0 0.0
    %4331 = vmatpush.msra.mxu0 0.0
    %4332 = vmatpush.msra.mxu0 0.0
    %4333 = vmatpush.msra.mxu0 0.0
    %4334 = vmatpush.msra.mxu0 %v2488
    %4335 = vmatpush.msra.mxu0 %v2487
    %4336 = vmatpush.msra.mxu0 %v2486
    %4337 = vmatpush.msra.mxu0 %v2485
    %4338 = vmatmul.f32.gmra.mxu0 %v4186
    %v4339 = vpop.f32.mrf.mxu0
    %v4340 = vadd.f32 0.0, %v4339
    %4341 = vdwg.mxu0
    %v4343 = vrot.slane %v4340, 2
    %v4344 = vrot.slane %v4340, 3
    %4345 = vrot.lane.b32.xlu0 %v4343, 64
    %v4346 = vpop.permute.xlu0 %4345
    %4347 = vrot.lane.b32.xlu0 %v4344, 64
    %v4348 = vpop.permute.xlu0 %4347
    %v4351 = vadd.f32 %v2470, %v4346
    %v4352 = vadd.f32 %v2473, %v4348
    %v4353 = vtanh.pop %v4351
    %v4354 = vtanh.pop %v4352
    %4355 = vmatpush.msra.mxu0 0.0
    %4356 = vmatpush.msra.mxu0 0.0
    %4357 = vmatpush.msra.mxu0 0.0
    %4358 = vmatpush.msra.mxu0 0.0
    %4359 = vmatpush.msra.mxu0 0.0
    %4360 = vmatpush.msra.mxu0 0.0
    %4361 = vmatpush.msra.mxu0 0.0
    %4362 = vmatpush.msra.mxu0 0.0
    %4363 = vmatpush.msra.mxu0 0.0
    %4364 = vmatpush.msra.mxu0 0.0
    %4365 = vmatpush.msra.mxu0 0.0
    %4366 = vmatpush.msra.mxu0 0.0
    %4367 = vmatpush.msra.mxu0 %v2493
    %4368 = vmatpush.msra.mxu0 %v2492
    %4369 = vmatpush.msra.mxu0 %v2491
    %4370 = vmatpush.msra.mxu0 %v2490
    %4371 = vmatmul.f32.gmra.mxu0 %v4186
    %v4372 = vpop.f32.mrf.mxu0
    %v4373 = vadd.f32 0.0, %v4372
    %4374 = vdwg.mxu0
    %v4376 = vrot.slane %v4373, 2
    %v4377 = vrot.slane %v4373, 3
    %4378 = vrot.lane.b32.xlu0 %v4376, 96
    %v4379 = vpop.permute.xlu0 %4378
    %4380 = vrot.lane.b32.xlu0 %v4377, 96
    %v4381 = vpop.permute.xlu0 %4380
    %v4384 = vadd.f32 %v2470, %v4379
    %v4385 = vadd.f32 %v2473, %v4381
    %v4386 = vxor.u32 %v4384, 2147483648
    %v4387 = vxor.u32 %v4385, 2147483648
    %v4388 = vmul.f32 %v4386, 1.442695
    %v4389 = vpow.pop %v4388
    %v4390 = vmul.f32 %v4387, 1.442695
    %v4391 = vpow.pop %v4390
    %v4392 = vadd.f32 %v4389, 1.0
    %v4393 = vadd.f32 %v4391, 1.0
    %v4394 = vrcp.pop %v4392
    %v4395 = vmul.f32 %v4392, %v4394
    %v4396 = vsub.f32 1.0, %v4395
    %v4397 = vmul.f32 %v4394, %v4396
    %v4398 = vadd.f32 %v4394, %v4397
    %vm4399 = vweird.f32 %v4392
    %vm4400 = vweird.f32 %v4394
    %vm4401 = vmor %vm4399, %vm4400
    %v4402 = vsel %vm4401, %v4394, %v4398
    %v4403 = vand.u32 2147483647, %v4392
    %vm4404 = vcmp.eq.f32.partialorder %v4403, 8.507059e+37
    %v4405 = vand.u32 %v4392, 2147483648
    %v4406 = vor.u32 1.1754944e-38, %v4405
    %v4407 = vsel %vm4404, %v4406, %v4402
    %v4408 = vmul.f32 1.0, %v4407
    %v4409 = vrcp.pop %v4393
    %v4410 = vmul.f32 %v4393, %v4409
    %v4411 = vsub.f32 1.0, %v4410
    %v4412 = vmul.f32 %v4409, %v4411
    %v4413 = vadd.f32 %v4409, %v4412
    %vm4414 = vweird.f32 %v4393
    %vm4415 = vweird.f32 %v4409
    %vm4416 = vmor %vm4414, %vm4415
    %v4417 = vsel %vm4416, %v4409, %v4413
    %v4418 = vand.u32 2147483647, %v4393
    %vm4419 = vcmp.eq.f32.partialorder %v4418, 8.507059e+37
    %v4420 = vand.u32 %v4393, 2147483648
    %v4421 = vor.u32 1.1754944e-38, %v4420
    %v4422 = vsel %vm4419, %v4421, %v4417
    %v4423 = vmul.f32 1.0, %v4422
    %v4426 = vrot.slane %v4165, 7
    %v4427 = vrot.slane %v4166, 7
    %v4430 = vmul.f32 %v4306, %v4426
    %v4431 = vmul.f32 %v4321, %v4427
    %4434 = vrot.lane.b32.xlu0 %v4353, 64
    %v4435 = vpop.permute.xlu0 %4434
    %4436 = vrot.lane.b32.xlu0 %v4354, 64
    %v4437 = vpop.permute.xlu0 %4436
    %v4440 = vmul.f32 %v4237, %v4435
    %v4441 = vmul.f32 %v4252, %v4437
    %4444 = vrot.lane.b32.xlu0 %v4440, 32
    %v4445 = vpop.permute.xlu0 %4444
    %4446 = vrot.lane.b32.xlu0 %v4441, 32
    %v4447 = vpop.permute.xlu0 %4446
    %v4450 = vadd.f32 %v4430, %v4445
    %v4451 = vadd.f32 %v4431, %v4447
    %v4452 = vtanh.pop %v4450
    %v4453 = vtanh.pop %v4451
    %4456 = vrot.lane.b32.xlu0 %v4452, 64
    %v4457 = vpop.permute.xlu0 %4456
    %4458 = vrot.lane.b32.xlu0 %v4453, 64
    %v4459 = vpop.permute.xlu0 %4458
    %v4462 = vmul.f32 %v4408, %v4457
    %v4463 = vmul.f32 %v4423, %v4459
    %v4466 = vrot.slane %v4462, 6
    %v4467 = vrot.slane %v4463, 5
    %v4468 = vsel %vm426, %v4467, %v4466
    %4469 = vrot.lane.b32.xlu0 %v4468, 32
    %v4470 = vpop.permute.xlu0 %4469
    %v4471 = vsel %vm153, %v4470, 0
    %4473 = vmatpush.msra.mxu0 0.0
    %4474 = vmatpush.msra.mxu0 0.0
    %4475 = vmatpush.msra.mxu0 0.0
    %4476 = vmatpush.msra.mxu0 0.0
    %4477 = vmatpush.msra.mxu0 0.0
    %4478 = vmatpush.msra.mxu0 0.0
    %4479 = vmatpush.msra.mxu0 0.0
    %4480 = vmatpush.msra.mxu0 0.0
    %4481 = vmatpush.msra.mxu0 0.0
    %4482 = vmatpush.msra.mxu0 0.0
    %4483 = vmatpush.msra.mxu0 0.0
    %4484 = vmatpush.msra.mxu0 0.0
    %4485 = vmatpush.msra.mxu0 %v2478
    %4486 = vmatpush.msra.mxu0 %v2477
    %4487 = vmatpush.msra.mxu0 %v2476
    %4488 = vmatpush.msra.mxu0 %v2475
    %4489 = vmatmul.f32.gmra.mxu0 %v4471
    %v4490 = vpop.f32.mrf.mxu0
    %v4491 = vadd.f32 0.0, %v4490
    %4492 = vdwg.mxu0
    %v4494 = vrot.slane %v4491, 1
    %v4495 = vrot.slane %v4491, 2
    %v4498 = vadd.f32 %v2470, %v4494
    %v4499 = vadd.f32 %v2473, %v4495
    %v4500 = vxor.u32 %v4498, 2147483648
    %v4501 = vxor.u32 %v4499, 2147483648
    %v4502 = vmul.f32 %v4500, 1.442695
    %v4503 = vpow.pop %v4502
    %v4504 = vmul.f32 %v4501, 1.442695
    %v4505 = vpow.pop %v4504
    %v4506 = vadd.f32 %v4503, 1.0
    %v4507 = vadd.f32 %v4505, 1.0
    %v4508 = vrcp.pop %v4506
    %v4509 = vmul.f32 %v4506, %v4508
    %v4510 = vsub.f32 1.0, %v4509
    %v4511 = vmul.f32 %v4508, %v4510
    %v4512 = vadd.f32 %v4508, %v4511
    %vm4513 = vweird.f32 %v4506
    %vm4514 = vweird.f32 %v4508
    %vm4515 = vmor %vm4513, %vm4514
    %v4516 = vsel %vm4515, %v4508, %v4512
    %v4517 = vand.u32 2147483647, %v4506
    %vm4518 = vcmp.eq.f32.partialorder %v4517, 8.507059e+37
    %v4519 = vand.u32 %v4506, 2147483648
    %v4520 = vor.u32 1.1754944e-38, %v4519
    %v4521 = vsel %vm4518, %v4520, %v4516
    %v4522 = vmul.f32 1.0, %v4521
    %v4523 = vrcp.pop %v4507
    %v4524 = vmul.f32 %v4507, %v4523
    %v4525 = vsub.f32 1.0, %v4524
    %v4526 = vmul.f32 %v4523, %v4525
    %v4527 = vadd.f32 %v4523, %v4526
    %vm4528 = vweird.f32 %v4507
    %vm4529 = vweird.f32 %v4523
    %vm4530 = vmor %vm4528, %vm4529
    %v4531 = vsel %vm4530, %v4523, %v4527
    %v4532 = vand.u32 2147483647, %v4507
    %vm4533 = vcmp.eq.f32.partialorder %v4532, 8.507059e+37
    %v4534 = vand.u32 %v4507, 2147483648
    %v4535 = vor.u32 1.1754944e-38, %v4534
    %v4536 = vsel %vm4533, %v4535, %v4531
    %v4537 = vmul.f32 1.0, %v4536
    %4538 = vmatpush.msra.mxu0 0.0
    %4539 = vmatpush.msra.mxu0 0.0
    %4540 = vmatpush.msra.mxu0 0.0
    %4541 = vmatpush.msra.mxu0 0.0
    %4542 = vmatpush.msra.mxu0 0.0
    %4543 = vmatpush.msra.mxu0 0.0
    %4544 = vmatpush.msra.mxu0 0.0
    %4545 = vmatpush.msra.mxu0 0.0
    %4546 = vmatpush.msra.mxu0 0.0
    %4547 = vmatpush.msra.mxu0 0.0
    %4548 = vmatpush.msra.mxu0 0.0
    %4549 = vmatpush.msra.mxu0 0.0
    %4550 = vmatpush.msra.mxu0 %v2483
    %4551 = vmatpush.msra.mxu0 %v2482
    %4552 = vmatpush.msra.mxu0 %v2481
    %4553 = vmatpush.msra.mxu0 %v2480
    %4554 = vmatmul.f32.gmra.mxu0 %v4471
    %v4555 = vpop.f32.mrf.mxu0
    %v4556 = vadd.f32 0.0, %v4555
    %4557 = vdwg.mxu0
    %v4559 = vrot.slane %v4556, 1
    %v4560 = vrot.slane %v4556, 2
    %4561 = vrot.lane.b32.xlu0 %v4559, 32
    %v4562 = vpop.permute.xlu0 %4561
    %4563 = vrot.lane.b32.xlu0 %v4560, 32
    %v4564 = vpop.permute.xlu0 %4563
    %v4567 = vadd.f32 %v2470, %v4562
    %v4568 = vadd.f32 %v2473, %v4564
    %v4569 = vxor.u32 %v4567, 2147483648
    %v4570 = vxor.u32 %v4568, 2147483648
    %v4571 = vmul.f32 %v4569, 1.442695
    %v4572 = vpow.pop %v4571
    %v4573 = vmul.f32 %v4570, 1.442695
    %v4574 = vpow.pop %v4573
    %v4575 = vadd.f32 %v4572, 1.0
    %v4576 = vadd.f32 %v4574, 1.0
    %v4577 = vrcp.pop %v4575
    %v4578 = vmul.f32 %v4575, %v4577
    %v4579 = vsub.f32 1.0, %v4578
    %v4580 = vmul.f32 %v4577, %v4579
    %v4581 = vadd.f32 %v4577, %v4580
    %vm4582 = vweird.f32 %v4575
    %vm4583 = vweird.f32 %v4577
    %vm4584 = vmor %vm4582, %vm4583
    %v4585 = vsel %vm4584, %v4577, %v4581
    %v4586 = vand.u32 2147483647, %v4575
    %vm4587 = vcmp.eq.f32.partialorder %v4586, 8.507059e+37
    %v4588 = vand.u32 %v4575, 2147483648
    %v4589 = vor.u32 1.1754944e-38, %v4588
    %v4590 = vsel %vm4587, %v4589, %v4585
    %v4591 = vmul.f32 1.0, %v4590
    %v4592 = vrcp.pop %v4576
    %v4593 = vmul.f32 %v4576, %v4592
    %v4594 = vsub.f32 1.0, %v4593
    %v4595 = vmul.f32 %v4592, %v4594
    %v4596 = vadd.f32 %v4592, %v4595
    %vm4597 = vweird.f32 %v4576
    %vm4598 = vweird.f32 %v4592
    %vm4599 = vmor %vm4597, %vm4598
    %v4600 = vsel %vm4599, %v4592, %v4596
    %v4601 = vand.u32 2147483647, %v4576
    %vm4602 = vcmp.eq.f32.partialorder %v4601, 8.507059e+37
    %v4603 = vand.u32 %v4576, 2147483648
    %v4604 = vor.u32 1.1754944e-38, %v4603
    %v4605 = vsel %vm4602, %v4604, %v4600
    %v4606 = vmul.f32 1.0, %v4605
    %4607 = vmatpush.msra.mxu0 0.0
    %4608 = vmatpush.msra.mxu0 0.0
    %4609 = vmatpush.msra.mxu0 0.0
    %4610 = vmatpush.msra.mxu0 0.0
    %4611 = vmatpush.msra.mxu0 0.0
    %4612 = vmatpush.msra.mxu0 0.0
    %4613 = vmatpush.msra.mxu0 0.0
    %4614 = vmatpush.msra.mxu0 0.0
    %4615 = vmatpush.msra.mxu0 0.0
    %4616 = vmatpush.msra.mxu0 0.0
    %4617 = vmatpush.msra.mxu0 0.0
    %4618 = vmatpush.msra.mxu0 0.0
    %4619 = vmatpush.msra.mxu0 %v2488
    %4620 = vmatpush.msra.mxu0 %v2487
    %4621 = vmatpush.msra.mxu0 %v2486
    %4622 = vmatpush.msra.mxu0 %v2485
    %4623 = vmatmul.f32.gmra.mxu0 %v4471
    %v4624 = vpop.f32.mrf.mxu0
    %v4625 = vadd.f32 0.0, %v4624
    %4626 = vdwg.mxu0
    %v4628 = vrot.slane %v4625, 1
    %v4629 = vrot.slane %v4625, 2
    %4630 = vrot.lane.b32.xlu0 %v4628, 64
    %v4631 = vpop.permute.xlu0 %4630
    %4632 = vrot.lane.b32.xlu0 %v4629, 64
    %v4633 = vpop.permute.xlu0 %4632
    %v4636 = vadd.f32 %v2470, %v4631
    %v4637 = vadd.f32 %v2473, %v4633
    %v4638 = vtanh.pop %v4636
    %v4639 = vtanh.pop %v4637
    %4640 = vmatpush.msra.mxu0 0.0
    %4641 = vmatpush.msra.mxu0 0.0
    %4642 = vmatpush.msra.mxu0 0.0
    %4643 = vmatpush.msra.mxu0 0.0
    %4644 = vmatpush.msra.mxu0 0.0
    %4645 = vmatpush.msra.mxu0 0.0
    %4646 = vmatpush.msra.mxu0 0.0
    %4647 = vmatpush.msra.mxu0 0.0
    %4648 = vmatpush.msra.mxu0 0.0
    %4649 = vmatpush.msra.mxu0 0.0
    %4650 = vmatpush.msra.mxu0 0.0
    %4651 = vmatpush.msra.mxu0 0.0
    %4652 = vmatpush.msra.mxu0 %v2493
    %4653 = vmatpush.msra.mxu0 %v2492
    %4654 = vmatpush.msra.mxu0 %v2491
    %4655 = vmatpush.msra.mxu0 %v2490
    %4656 = vmatmul.f32.gmra.mxu0 %v4471
    %v4657 = vpop.f32.mrf.mxu0
    %v4658 = vadd.f32 0.0, %v4657
    %4659 = vdwg.mxu0
    %v4661 = vrot.slane %v4658, 1
    %v4662 = vrot.slane %v4658, 2
    %4663 = vrot.lane.b32.xlu0 %v4661, 96
    %v4664 = vpop.permute.xlu0 %4663
    %4665 = vrot.lane.b32.xlu0 %v4662, 96
    %v4666 = vpop.permute.xlu0 %4665
    %v4669 = vadd.f32 %v2470, %v4664
    %v4670 = vadd.f32 %v2473, %v4666
    %v4671 = vxor.u32 %v4669, 2147483648
    %v4672 = vxor.u32 %v4670, 2147483648
    %v4673 = vmul.f32 %v4671, 1.442695
    %v4674 = vpow.pop %v4673
    %v4675 = vmul.f32 %v4672, 1.442695
    %v4676 = vpow.pop %v4675
    %v4677 = vadd.f32 %v4674, 1.0
    %v4678 = vadd.f32 %v4676, 1.0
    %v4679 = vrcp.pop %v4677
    %v4680 = vmul.f32 %v4677, %v4679
    %v4681 = vsub.f32 1.0, %v4680
    %v4682 = vmul.f32 %v4679, %v4681
    %v4683 = vadd.f32 %v4679, %v4682
    %vm4684 = vweird.f32 %v4677
    %vm4685 = vweird.f32 %v4679
    %vm4686 = vmor %vm4684, %vm4685
    %v4687 = vsel %vm4686, %v4679, %v4683
    %v4688 = vand.u32 2147483647, %v4677
    %vm4689 = vcmp.eq.f32.partialorder %v4688, 8.507059e+37
    %v4690 = vand.u32 %v4677, 2147483648
    %v4691 = vor.u32 1.1754944e-38, %v4690
    %v4692 = vsel %vm4689, %v4691, %v4687
    %v4693 = vmul.f32 1.0, %v4692
    %v4694 = vrcp.pop %v4678
    %v4695 = vmul.f32 %v4678, %v4694
    %v4696 = vsub.f32 1.0, %v4695
    %v4697 = vmul.f32 %v4694, %v4696
    %v4698 = vadd.f32 %v4694, %v4697
    %vm4699 = vweird.f32 %v4678
    %vm4700 = vweird.f32 %v4694
    %vm4701 = vmor %vm4699, %vm4700
    %v4702 = vsel %vm4701, %v4694, %v4698
    %v4703 = vand.u32 2147483647, %v4678
    %vm4704 = vcmp.eq.f32.partialorder %v4703, 8.507059e+37
    %v4705 = vand.u32 %v4678, 2147483648
    %v4706 = vor.u32 1.1754944e-38, %v4705
    %v4707 = vsel %vm4704, %v4706, %v4702
    %v4708 = vmul.f32 1.0, %v4707
    %v4711 = vrot.slane %v4450, 7
    %v4712 = vrot.slane %v4451, 7
    %v4715 = vmul.f32 %v4591, %v4711
    %v4716 = vmul.f32 %v4606, %v4712
    %4719 = vrot.lane.b32.xlu0 %v4638, 64
    %v4720 = vpop.permute.xlu0 %4719
    %4721 = vrot.lane.b32.xlu0 %v4639, 64
    %v4722 = vpop.permute.xlu0 %4721
    %v4725 = vmul.f32 %v4522, %v4720
    %v4726 = vmul.f32 %v4537, %v4722
    %4729 = vrot.lane.b32.xlu0 %v4725, 32
    %v4730 = vpop.permute.xlu0 %4729
    %4731 = vrot.lane.b32.xlu0 %v4726, 32
    %v4732 = vpop.permute.xlu0 %4731
    %v4735 = vadd.f32 %v4715, %v4730
    %v4736 = vadd.f32 %v4716, %v4732
    %v4737 = vtanh.pop %v4735
    %v4738 = vtanh.pop %v4736
    %4741 = vrot.lane.b32.xlu0 %v4737, 64
    %v4742 = vpop.permute.xlu0 %4741
    %4743 = vrot.lane.b32.xlu0 %v4738, 64
    %v4744 = vpop.permute.xlu0 %4743
    %v4747 = vmul.f32 %v4693, %v4742
    %v4748 = vmul.f32 %v4708, %v4744
    %v4749 = vld [vmem:[%s7] sm:$0xff]
    %v4750 = vld [vmem:[%s7 + $0x8] sm:$0xff]
    %v4751 = vld [vmem:[%s7 + $0x10] sm:$0xff]
    %v4752 = vld [vmem:[%s7 + $0x18] sm:$0xff]
    %v4753 = vld [vmem:[%s8] sm:$0x1]
    %v4755 = vperm.slane %v4753, 0
    %v4759 = vrot.slane %v4747, 7
    %v4760 = vrot.slane %v4748, 6
    %v4761 = vsel %vm426, %v4760, %v4759
    %4762 = vrot.lane.b32.xlu0 %v4761, 32
    %v4763 = vpop.permute.xlu0 %4762
    %v4764 = vsel %vm153, %v4763, 0
    %4766 = vmatpush.msra.mxu0 0.0
    %4767 = vmatpush.msra.mxu0 0.0
    %4768 = vmatpush.msra.mxu0 0.0
    %4769 = vmatpush.msra.mxu0 0.0
    %4770 = vmatpush.msra.mxu0 0.0
    %4771 = vmatpush.msra.mxu0 0.0
    %4772 = vmatpush.msra.mxu0 0.0
    %4773 = vmatpush.msra.mxu0 0.0
    %4774 = vmatpush.msra.mxu0 0.0
    %4775 = vmatpush.msra.mxu0 0.0
    %4776 = vmatpush.msra.mxu0 0.0
    %4777 = vmatpush.msra.mxu0 0.0
    %4778 = vmatpush.msra.mxu0 %v4752
    %4779 = vmatpush.msra.mxu0 %v4751
    %4780 = vmatpush.msra.mxu0 %v4750
    %4781 = vmatpush.msra.mxu0 %v4749
    %4782 = vmatmul.f32.gmra.mxu0 %v4764
    %v4783 = vpop.f32.mrf.mxu0
    %v4784 = vadd.f32 %v4755, %v4783
    %4785 = vdwg.mxu0
    %vm4786 = vcmask 58368
    %4787 = vst.msk [vmem:[#allocation10] sm:$0x3] %vm4786, %v4784
    // Predicated region
    $region54: #{tpu_custom_call.1} parent=1 // pred_check
      _
    $region55: #{tpu_custom_call.1} parent=1 // pred_check_branch
      %4789 = sbr.rel (0) target = $region57
    $region56: #{tpu_custom_call.1} parent=1 // pred_region
      %4791 = vsyncadd [#allocation4], 0
      %s4793 = sshll.u32 [#allocation10], 4
      %s4794 = int_to_ptr.vmem [resolvable:$true] %s4793
      %s4795 = sshll.u32 %s9, 4
      %s4796 = int_to_ptr.hbm [resolvable:$true] %s4795
      %4798 = dma.vmem_to_hbm [thread:$0]  %s4794, 32, %s4796, [#allocation4]
    $region57: #{tpu_custom_call.1} parent=1 // pred_fallthru
      _
    // Predicated region
    $region58: #{tpu_custom_call.1} parent=1 // pred_check
      _
    $region59: #{tpu_custom_call.1} parent=1 // pred_check_branch
      %4800 = sbr.rel (0) target = $region61
    $region60: #{tpu_custom_call.1} parent=1 // pred_region
      %4802 = dma.done [#allocation4], 32
    $region61: #{tpu_custom_call.1} parent=1 // pred_fallthru
      _
    %4803 = vsyncpa [#allocation3], 1
    %4804 = vsyncpa [#allocation6], 1
    %4805 = vsyncpa [#allocation9], 1
    %4806 = vsyncpa [#allocation4], 1

</llo_original>
